<compile_context>
chip_gen: v7x
topology: tpu7x:2x2x1
jax: 0.10.0
libtpu: 0.0.40
codegen_flags: <defaults>
</compile_context>

<pallas_src>
import numpy as np
import jax
import jax.numpy as jnp
from jax.experimental import pallas as pl
from jax.experimental.pallas import tpu as pltpu

# ----------------------- model config -----------------------
NUM_PATCHES = 176
FEAT_DIM = 512
ATTN_K = 8                          # attention_k (must divide 176)
PPG = NUM_PATCHES // ATTN_K         # patches_per_group = 22
ENCODER_LAYERS = [256, 128, 64]
PREDICTOR_LAYERS = [64, 32]
HEAD_PAD = 64                       # os6/os24 head padded to 64 lanes (lane-dense store)
OUT_WIDTH = ENCODER_LAYERS[-1] + HEAD_PAD   # 128
BN_EPS = 1e-5
BATCH = 2


# =================== Fused kernel: attention + encoder + predictor ===================
def fused_kernel(x_ref, proj_ref, w1_ref, w2_ref, w3_ref, w4_ref, w5_ref,
                 whp_ref, bpack_ref, out_ref):
    batch = x_ref.shape[0]

    # ---- packed biases: one (8, 256) f32 input, static slices (free) ----
    bp = bpack_ref[...]
    b1 = bp[0:1, :ENCODER_LAYERS[0]]       # (1, 256)
    b2 = bp[1:2, :ENCODER_LAYERS[1]]       # (1, 128)
    b3 = bp[2:3, :ENCODER_LAYERS[2]]       # (1, 64)
    b4 = bp[3:4, :PREDICTOR_LAYERS[0]]     # (1, 64)
    b5 = bp[4:5, :PREDICTOR_LAYERS[1]]     # (1, 32)
    bh = bp[5:6, :HEAD_PAD]                # (1, 64)   cols 0:2 real, rest 0

    # ---- attention: projector is f32 (hoisted out of kernel), x promoted bf16->f32.
    #      B stacked 2-D MXU matmuls -> (K, B, D) with batch-of-B rows per group. ----
    proj = proj_ref[...]                                                    # (K, 176) f32
    att = jnp.stack(
        [jnp.dot(proj, x_ref[b].astype(jnp.float32),
                 preferred_element_type=jnp.float32) for b in range(batch)],
        axis=1)                                                             # (K, B, 512) f32
    att = att.astype(jnp.bfloat16)

    # ---- encoder layer 0 (BN folded): one batched contraction over (K, D) = 4096 ----
    # equivalent to flatten(att_b) @ W1 with W1 pre-reshaped to (K, 512, 256)
    hk = jnp.einsum('kbd,kdo->kbo', att, w1_ref[...],
                    preferred_element_type=jnp.float32)                     # (K, B, 256)
    h = jnp.maximum(jnp.sum(hk, axis=0) + b1, 0.0)                          # (B, 256)

    def dense(v, w, b):
        # bf16 MXU matmul with f32 accumulation; bias add in f32
        return jnp.dot(v.astype(jnp.bfloat16), w,
                       preferred_element_type=jnp.float32) + b

    # ---- remaining encoder layers (BN folded) ----
    h = jnp.maximum(dense(h, w2_ref[...], b2), 0.0)                         # (B, 128)
    feat = dense(h, w3_ref[...], b3)                                        # (B, 64)

    # ---- predictor feature network + fused sigmoid heads (padded to 64 lanes) ----
    p = jnp.maximum(dense(feat, w4_ref[...], b4), 0.0)                      # (B, 64)
    p = jnp.maximum(dense(p, w5_ref[...], b5), 0.0)                         # (B, 32)
    heads = jax.nn.sigmoid(dense(p, whp_ref[...], bh))                      # (B, 64)

    # ---- single lane-dense (B, 128) store: [feat | os6 | os24 | pad] ----
    out_ref[...] = jnp.concatenate([feat, heads], axis=1)


def fused_forward_pallas(x_bf16, prep):
    batch = x_bf16.shape[0]
    ins = [x_bf16, prep["proj"], prep["w1"], prep["w2"], prep["w3"],
           prep["w4"], prep["w5"], prep["whp"], prep["bpack"]]
    vmem = lambda: pl.BlockSpec(memory_space=pltpu.MemorySpace.VMEM)
    return pl.pallas_call(
        fused_kernel,
        out_shape=jax.ShapeDtypeStruct((batch, OUT_WIDTH), jnp.float32),
        in_specs=[vmem() for _ in ins],
        out_specs=vmem(),
    )(*ins)


# ----------------------- parameter init (deterministic, synthetic) -----------------------
def _linear_params(key, din, dout):
    kw, kb = jax.random.split(key)
    w = (jax.random.normal(kw, (din, dout), jnp.float32) / np.sqrt(din)).astype(jnp.float32)
    b = (jax.random.normal(kb, (1, dout), jnp.float32) * 0.01).astype(jnp.float32)
    return w, b                       # stored pre-transposed: (in, out)


def _bn_params(key, dout):
    k1, k2, k3, k4 = jax.random.split(key, 4)
    gamma = 1.0 + 0.1 * jax.random.normal(k1, (1, dout), jnp.float32)
    beta = 0.1 * jax.random.normal(k2, (1, dout), jnp.float32)
    rmean = 0.1 * jax.random.normal(k3, (1, dout), jnp.float32)
    rvar = jax.random.uniform(k4, (1, dout), jnp.float32, minval=0.5, maxval=1.5)
    return gamma, beta, rmean, rvar


def make_raw_params(key):
    keys = jax.random.split(key, 12)
    enc_in = ATTN_K * FEAT_DIM
    return {
        "attn_w": jax.random.normal(keys[0], (ATTN_K, PPG), jnp.float32),
        "enc0_lin": _linear_params(keys[1], enc_in, ENCODER_LAYERS[0]),
        "enc0_bn": _bn_params(keys[2], ENCODER_LAYERS[0]),
        "enc1_lin": _linear_params(keys[3], ENCODER_LAYERS[0], ENCODER_LAYERS[1]),
        "enc1_bn": _bn_params(keys[4], ENCODER_LAYERS[1]),
        "enc2_lin": _linear_params(keys[5], ENCODER_LAYERS[1], ENCODER_LAYERS[2]),
        "pred0_lin": _linear_params(keys[6], ENCODER_LAYERS[2], PREDICTOR_LAYERS[0]),
        "pred0_bn": _bn_params(keys[7], PREDICTOR_LAYERS[0]),
        "pred1_lin": _linear_params(keys[8], PREDICTOR_LAYERS[0], PREDICTOR_LAYERS[1]),
        "pred1_bn": _bn_params(keys[9], PREDICTOR_LAYERS[1]),
        "head_os6": _linear_params(keys[10], PREDICTOR_LAYERS[1], 1),
        "head_os24": _linear_params(keys[11], PREDICTOR_LAYERS[1], 1),
    }


def prepare_inference_params(raw):
    """Fold eval-mode BN into the preceding Linear, hoist the softmax projector,
    pad+concat heads, pack biases, cast matmul weights to bf16."""
    def fold(lin, bn):
        w, b = lin
        gamma, beta, rmean, rvar = bn
        s = gamma / jnp.sqrt(rvar + BN_EPS)
        return w * s, (b - rmean) * s + beta

    w1, b1 = fold(raw["enc0_lin"], raw["enc0_bn"])
    w1 = w1.reshape(ATTN_K, FEAT_DIM, ENCODER_LAYERS[0]).astype(jnp.bfloat16)  # per-group blocks
    w2, b2 = fold(raw["enc1_lin"], raw["enc1_bn"])
    w3, b3 = raw["enc2_lin"]
    w4, b4 = fold(raw["pred0_lin"], raw["pred0_bn"])
    w5, b5 = fold(raw["pred1_lin"], raw["pred1_bn"])

    # fused heads, padded to 64 output lanes (lane-dense store in kernel)
    wh = jnp.concatenate([raw["head_os6"][0], raw["head_os24"][0]], axis=1)    # (32, 2)
    bh = jnp.concatenate([raw["head_os6"][1], raw["head_os24"][1]], axis=1)    # (1, 2)
    whp = jnp.zeros((PREDICTOR_LAYERS[1], HEAD_PAD), jnp.float32)
    whp = whp.at[:, :2].set(wh).astype(jnp.bfloat16)

    # softmax + block-diagonal projector hoisted out of the kernel (kept f32)
    probs = jax.nn.softmax(raw["attn_w"], axis=1)                              # (K, PPG)
    row = jnp.arange(ATTN_K)[:, None]
    col = jnp.arange(NUM_PATCHES)[None, :]
    proj = jnp.where((col // PPG) == row, jnp.tile(probs, (1, ATTN_K)), 0.0)   # (K, 176) f32

    # all biases packed into one (8, 256) f32 array (one DMA instead of six)
    bpack = jnp.zeros((8, 256), jnp.float32)
    bpack = bpack.at[0, :ENCODER_LAYERS[0]].set(b1[0])
    bpack = bpack.at[1, :ENCODER_LAYERS[1]].set(b2[0])
    bpack = bpack.at[2, :ENCODER_LAYERS[2]].set(b3[0])
    bpack = bpack.at[3, :PREDICTOR_LAYERS[0]].set(b4[0])
    bpack = bpack.at[4, :PREDICTOR_LAYERS[1]].set(b5[0])
    bpack = bpack.at[5, :2].set(bh[0])

    return {"proj": proj.astype(jnp.float32),
            "w1": w1,
            "w2": w2.astype(jnp.bfloat16), "w3": w3.astype(jnp.bfloat16),
            "w4": w4.astype(jnp.bfloat16), "w5": w5.astype(jnp.bfloat16),
            "whp": whp, "bpack": bpack}


# ----------------------- end-to-end forward -----------------------
@jax.jit
def end_to_end_forward(x, prep):
    out = fused_forward_pallas(x.astype(jnp.bfloat16), prep)     # (B, 128)
    feat = out[:, :ENCODER_LAYERS[-1]]
    preds = {"os6": out[:, ENCODER_LAYERS[-1]:ENCODER_LAYERS[-1] + 1],
             "os24": out[:, ENCODER_LAYERS[-1] + 1:ENCODER_LAYERS[-1] + 2]}
    return feat, preds


# ----------------------- pure-JAX f32 reference (PyTorch eval-mode semantics) -----------------------
def reference_forward(x, raw):
    probs = jax.nn.softmax(raw["attn_w"], axis=1)
    b = x.shape[0]
    xg = x.reshape(b, ATTN_K, PPG, FEAT_DIM)
    att = jnp.sum(xg * probs[None, :, :, None], axis=2)
    h = att.reshape(b, ATTN_K * FEAT_DIM)

    def mlp_block(h, lin, bn):
        w, bb = lin
        gamma, beta, rmean, rvar = bn
        h = h @ w + bb
        h = (h - rmean) / jnp.sqrt(rvar + BN_EPS) * gamma + beta
        return jnp.maximum(h, 0.0)

    h = mlp_block(h, raw["enc0_lin"], raw["enc0_bn"])
    h = mlp_block(h, raw["enc1_lin"], raw["enc1_bn"])
    feat = h @ raw["enc2_lin"][0] + raw["enc2_lin"][1]
    p = mlp_block(feat, raw["pred0_lin"], raw["pred0_bn"])
    p = mlp_block(p, raw["pred1_lin"], raw["pred1_bn"])
    os6 = jax.nn.sigmoid(p @ raw["head_os6"][0] + raw["head_os6"][1])
    os24 = jax.nn.sigmoid(p @ raw["head_os24"][0] + raw["head_os24"][1])
    return feat, {"os6": os6, "os24": os24}


if __name__ == "__main__":
    key = jax.random.PRNGKey(0)
    kx, kp = jax.random.split(key)
    x = jax.random.normal(kx, (BATCH, NUM_PATCHES, FEAT_DIM), jnp.float32)
    raw = make_raw_params(kp)
    prep = prepare_inference_params(raw)

    feat, preds = end_to_end_forward(x, prep)
    jax.block_until_ready((feat, preds))

    # sanity check against pure-JAX f32 reference (kernel uses bf16 weights/x, f32 accumulation)
    feat_ref, preds_ref = reference_forward(x, raw)
    assert feat.shape == (BATCH, ENCODER_LAYERS[-1])
    assert preds["os6"].shape == (BATCH, 1)
    assert preds["os24"].shape == (BATCH, 1)
    np.testing.assert_allclose(np.asarray(feat), np.asarray(feat_ref), rtol=2e-2, atol=2e-2)
    np.testing.assert_allclose(np.asarray(preds["os6"]), np.asarray(preds_ref["os6"]), rtol=2e-2, atol=2e-2)
    np.testing.assert_allclose(np.asarray(preds["os24"]), np.asarray(preds_ref["os24"]), rtol=2e-2, atol=2e-2)

    print("KERNEL_OK")
</pallas_src>

<mosaic_0001>
module attributes {stable_mosaic.version = 11 : i64} {
  func.func @fused_kernel(%arg0: memref<2x176x512xbf16, #tpu.memory_space<vmem>>, %arg1: memref<8x176xf32, #tpu.memory_space<vmem>>, %arg2: memref<8x512x256xbf16, #tpu.memory_space<vmem>>, %arg3: memref<256x128xbf16, #tpu.memory_space<vmem>>, %arg4: memref<128x64xbf16, #tpu.memory_space<vmem>>, %arg5: memref<64x64xbf16, #tpu.memory_space<vmem>>, %arg6: memref<64x32xbf16, #tpu.memory_space<vmem>>, %arg7: memref<32x64xbf16, #tpu.memory_space<vmem>>, %arg8: memref<8x256xf32, #tpu.memory_space<vmem>>, %arg9: memref<2x128xf32, #tpu.memory_space<vmem>>) attributes {dimension_semantics = [], scalar_prefetch = 0 : i64, scratch_operands = 0 : i64, tpu.core_type = #tpu.core_type<tc>} {
    %c0 = arith.constant 0 : index
    %c0_0 = arith.constant 0 : index
    %0 = vector.load %arg8[%c0, %c0_0] : memref<8x256xf32, #tpu.memory_space<vmem>>, vector<8x256xf32>
    %1 = vector.extract_strided_slice %0 {offsets = [0, 0], sizes = [1, 256], strides = [1, 1]} : vector<8x256xf32> to vector<1x256xf32>
    %2 = vector.extract_strided_slice %0 {offsets = [1, 0], sizes = [1, 128], strides = [1, 1]} : vector<8x256xf32> to vector<1x128xf32>
    %3 = vector.extract_strided_slice %0 {offsets = [2, 0], sizes = [1, 64], strides = [1, 1]} : vector<8x256xf32> to vector<1x64xf32>
    %4 = vector.extract_strided_slice %0 {offsets = [3, 0], sizes = [1, 64], strides = [1, 1]} : vector<8x256xf32> to vector<1x64xf32>
    %5 = vector.extract_strided_slice %0 {offsets = [4, 0], sizes = [1, 32], strides = [1, 1]} : vector<8x256xf32> to vector<1x32xf32>
    %6 = vector.extract_strided_slice %0 {offsets = [5, 0], sizes = [1, 64], strides = [1, 1]} : vector<8x256xf32> to vector<1x64xf32>
    %c0_1 = arith.constant 0 : index
    %c0_2 = arith.constant 0 : index
    %7 = vector.load %arg1[%c0_1, %c0_2] : memref<8x176xf32, #tpu.memory_space<vmem>>, vector<8x176xf32>
    %c0_3 = arith.constant 0 : index
    %c0_4 = arith.constant 0 : index
    %c0_5 = arith.constant 0 : index
    %8 = vector.load %arg0[%c0_3, %c0_4, %c0_5] : memref<2x176x512xbf16, #tpu.memory_space<vmem>>, vector<1x176x512xbf16>
    %9 = vector.shape_cast %8 : vector<1x176x512xbf16> to vector<176x512xbf16>
    %10 = arith.extf %9 : vector<176x512xbf16> to vector<176x512xf32>
    %cst = arith.constant dense<0.000000e+00> : vector<8x512xf32>
    %11 = tpu.matmul %7, %10, %cst {dimension_numbers = #tpu.dot_dimension_numbers<[1], [0], [0], [1], [0, 0, 1, 1], [], []>} : vector<8x176xf32>, vector<176x512xf32>, vector<8x512xf32> -> vector<8x512xf32>
    %c1 = arith.constant 1 : index
    %c0_6 = arith.constant 0 : index
    %c0_7 = arith.constant 0 : index
    %12 = vector.load %arg0[%c1, %c0_6, %c0_7] : memref<2x176x512xbf16, #tpu.memory_space<vmem>>, vector<1x176x512xbf16>
    %13 = vector.shape_cast %12 : vector<1x176x512xbf16> to vector<176x512xbf16>
    %14 = arith.extf %13 : vector<176x512xbf16> to vector<176x512xf32>
    %cst_8 = arith.constant dense<0.000000e+00> : vector<8x512xf32>
    %15 = tpu.matmul %7, %14, %cst_8 {dimension_numbers = #tpu.dot_dimension_numbers<[1], [0], [0], [1], [0, 0, 1, 1], [], []>} : vector<8x176xf32>, vector<176x512xf32>, vector<8x512xf32> -> vector<8x512xf32>
    %16 = vector.shape_cast %11 : vector<8x512xf32> to vector<8x1x512xf32>
    %17 = vector.shape_cast %15 : vector<8x512xf32> to vector<8x1x512xf32>
    %18 = tpu.concatenate %16, %17 in 1 : vector<8x1x512xf32>, vector<8x1x512xf32> -> vector<8x2x512xf32>
    %19 = arith.truncf %18 : vector<8x2x512xf32> to vector<8x2x512xbf16>
    %c0_9 = arith.constant 0 : index
    %c0_10 = arith.constant 0 : index
    %c0_11 = arith.constant 0 : index
    %20 = vector.load %arg2[%c0_9, %c0_10, %c0_11] : memref<8x512x256xbf16, #tpu.memory_space<vmem>>, vector<8x512x256xbf16>
    "tpu.trace_start"() <{level = 10 : i32, message = "kbd,kdo->kbo"}> : () -> ()
    %cst_12 = arith.constant dense<0.000000e+00> : vector<8x2x256xf32>
    %21 = tpu.matmul %19, %20, %cst_12 {dimension_numbers = #tpu.dot_dimension_numbers<[2], [1], [1], [2], [0, 0, 0, 1, 1, 2], [0], [0]>} : vector<8x2x512xbf16>, vector<8x512x256xbf16>, vector<8x2x256xf32> -> vector<8x2x256xf32>
    "tpu.trace_stop"() : () -> ()
    %cst_13 = arith.constant dense<0.000000e+00> : vector<2x256xf32>
    %22 = vector.multi_reduction <add>, %21, %cst_13 [0] : vector<8x2x256xf32> to vector<2x256xf32>
    %23 = vector.broadcast %1 : vector<1x256xf32> to vector<2x256xf32>
    %24 = arith.addf %22, %23 : vector<2x256xf32>
    %cst_14 = arith.constant 0.000000e+00 : f32
    %25 = vector.broadcast %cst_14 : f32 to vector<2x256xf32>
    %26 = arith.maximumf %24, %25 : vector<2x256xf32>
    %c0_15 = arith.constant 0 : index
    %c0_16 = arith.constant 0 : index
    %27 = vector.load %arg3[%c0_15, %c0_16] : memref<256x128xbf16, #tpu.memory_space<vmem>>, vector<256x128xbf16>
    %28 = arith.truncf %26 : vector<2x256xf32> to vector<2x256xbf16>
    %cst_17 = arith.constant dense<0.000000e+00> : vector<2x128xf32>
    %29 = tpu.matmul %28, %27, %cst_17 {dimension_numbers = #tpu.dot_dimension_numbers<[1], [0], [0], [1], [0, 0, 1, 1], [], []>} : vector<2x256xbf16>, vector<256x128xbf16>, vector<2x128xf32> -> vector<2x128xf32>
    %30 = vector.broadcast %2 : vector<1x128xf32> to vector<2x128xf32>
    %31 = arith.addf %29, %30 : vector<2x128xf32>
    %cst_18 = arith.constant 0.000000e+00 : f32
    %32 = vector.broadcast %cst_18 : f32 to vector<2x128xf32>
    %33 = arith.maximumf %31, %32 : vector<2x128xf32>
    %c0_19 = arith.constant 0 : index
    %c0_20 = arith.constant 0 : index
    %34 = vector.load %arg4[%c0_19, %c0_20] : memref<128x64xbf16, #tpu.memory_space<vmem>>, vector<128x64xbf16>
    %35 = arith.truncf %33 : vector<2x128xf32> to vector<2x128xbf16>
    %cst_21 = arith.constant dense<0.000000e+00> : vector<2x64xf32>
    %36 = tpu.matmul %35, %34, %cst_21 {dimension_numbers = #tpu.dot_dimension_numbers<[1], [0], [0], [1], [0, 0, 1, 1], [], []>} : vector<2x128xbf16>, vector<128x64xbf16>, vector<2x64xf32> -> vector<2x64xf32>
    %37 = vector.broadcast %3 : vector<1x64xf32> to vector<2x64xf32>
    %38 = arith.addf %36, %37 : vector<2x64xf32>
    %c0_22 = arith.constant 0 : index
    %c0_23 = arith.constant 0 : index
    %39 = vector.load %arg5[%c0_22, %c0_23] : memref<64x64xbf16, #tpu.memory_space<vmem>>, vector<64x64xbf16>
    %40 = arith.truncf %38 : vector<2x64xf32> to vector<2x64xbf16>
    %cst_24 = arith.constant dense<0.000000e+00> : vector<2x64xf32>
    %41 = tpu.matmul %40, %39, %cst_24 {dimension_numbers = #tpu.dot_dimension_numbers<[1], [0], [0], [1], [0, 0, 1, 1], [], []>} : vector<2x64xbf16>, vector<64x64xbf16>, vector<2x64xf32> -> vector<2x64xf32>
    %42 = vector.broadcast %4 : vector<1x64xf32> to vector<2x64xf32>
    %43 = arith.addf %41, %42 : vector<2x64xf32>
    %cst_25 = arith.constant 0.000000e+00 : f32
    %44 = vector.broadcast %cst_25 : f32 to vector<2x64xf32>
    %45 = arith.maximumf %43, %44 : vector<2x64xf32>
    %c0_26 = arith.constant 0 : index
    %c0_27 = arith.constant 0 : index
    %46 = vector.load %arg6[%c0_26, %c0_27] : memref<64x32xbf16, #tpu.memory_space<vmem>>, vector<64x32xbf16>
    %47 = arith.truncf %45 : vector<2x64xf32> to vector<2x64xbf16>
    %cst_28 = arith.constant dense<0.000000e+00> : vector<2x32xf32>
    %48 = tpu.matmul %47, %46, %cst_28 {dimension_numbers = #tpu.dot_dimension_numbers<[1], [0], [0], [1], [0, 0, 1, 1], [], []>} : vector<2x64xbf16>, vector<64x32xbf16>, vector<2x32xf32> -> vector<2x32xf32>
    %49 = vector.broadcast %5 : vector<1x32xf32> to vector<2x32xf32>
    %50 = arith.addf %48, %49 : vector<2x32xf32>
    %cst_29 = arith.constant 0.000000e+00 : f32
    %51 = vector.broadcast %cst_29 : f32 to vector<2x32xf32>
    %52 = arith.maximumf %50, %51 : vector<2x32xf32>
    %c0_30 = arith.constant 0 : index
    %c0_31 = arith.constant 0 : index
    %53 = vector.load %arg7[%c0_30, %c0_31] : memref<32x64xbf16, #tpu.memory_space<vmem>>, vector<32x64xbf16>
    %54 = arith.truncf %52 : vector<2x32xf32> to vector<2x32xbf16>
    %cst_32 = arith.constant dense<0.000000e+00> : vector<2x64xf32>
    %55 = tpu.matmul %54, %53, %cst_32 {dimension_numbers = #tpu.dot_dimension_numbers<[1], [0], [0], [1], [0, 0, 1, 1], [], []>} : vector<2x32xbf16>, vector<32x64xbf16>, vector<2x64xf32> -> vector<2x64xf32>
    %56 = vector.broadcast %6 : vector<1x64xf32> to vector<2x64xf32>
    %57 = arith.addf %55, %56 : vector<2x64xf32>
    %58 = arith.negf %57 : vector<2x64xf32>
    %59 = math.exp %58 : vector<2x64xf32>
    %cst_33 = arith.constant 1.000000e+00 : f32
    %60 = vector.broadcast %cst_33 : f32 to vector<2x64xf32>
    %61 = arith.addf %60, %59 : vector<2x64xf32>
    %62 = arith.divf %60, %61 : vector<2x64xf32>
    %63 = tpu.concatenate %38, %62 in 1 : vector<2x64xf32>, vector<2x64xf32> -> vector<2x128xf32>
    %c0_34 = arith.constant 0 : index
    %c0_35 = arith.constant 0 : index
    %64 = vector.load %arg9[%c0_34, %c0_35] : memref<2x128xf32, #tpu.memory_space<vmem>>, vector<2x128xf32>
    tpu.vector_store %arg9[%c0_34, %c0_35], %63 {strides = array<i32>} : memref<2x128xf32, #tpu.memory_space<vmem>>, vector<2x128xf32>,
    return
  }
}

</mosaic_0001>

<llo_original>
// kernel: end_to_end_forward.1
$region0: #{end_to_end_forward.1}
  #allocation0 [shape = 'u32[]', space=smem, size = 0x4, offset = 0x4, fixed_abs, tag = 'smem constant byte address 0x4 - core index']
  #allocation1 [shape = 'u32[144,128]{1,0:T(1,128)}', space=vmem, size = 0x12000, scoped, tag = 'internal scratch']
  %s0 = inlined_call_operand.vmem [shape: bf16[2,176,512], index: 0, kind: input, shape index: {}]
  %s1 = inlined_call_operand.hbm [shape: f32[8,176], index: 1, kind: input, shape index: {}]
  %s2 = inlined_call_operand.hbm [shape: bf16[8,512,256], index: 2, kind: input, shape index: {}]
  %s3 = inlined_call_operand.hbm [shape: bf16[256,128], index: 3, kind: input, shape index: {}]
  %s4 = inlined_call_operand.vmem [shape: bf16[128,64], index: 4, kind: input, shape index: {}]
  %s5 = inlined_call_operand.hbm [shape: bf16[64,64], index: 5, kind: input, shape index: {}]
  %s6 = inlined_call_operand.vmem [shape: bf16[64,32], index: 6, kind: input, shape index: {}]
  %s7 = inlined_call_operand.hbm [shape: bf16[32,64], index: 7, kind: input, shape index: {}]
  %s8 = inlined_call_operand.hbm [shape: f32[8,256], index: 8, kind: input, shape index: {}]
  %s9 = inlined_call_operand.vmem [shape: f32[2,128], index: 9, kind: output, shape index: {}]
  %s10 = sld [smem:[#allocation0]]
  $region70: #{end_to_end_forward.1} parent=0
    _
  %s12 = ssub.s32 1, %s10
  %s13 = scalar_select 0, %s12, %s10
  $region1: #{end_to_end_forward.1} parent=0
    #allocation2 [shape = 'u8[8192]{0}', space=vmem, size = 0x2000, scoped, tag = 'input window, operand 1, single buffered']
    #allocation3 [shape = 's32[1]{0}', space=sflag, size = 0x4, scoped, tag = 'scoped memory for end_to_end_forward.1']
    #allocation4 [shape = 'u8[2097152]{0}', space=vmem, size = 0x200000, scoped, tag = 'input window, operand 2, single buffered']
    #allocation5 [shape = 's32[1]{0}', space=sflag, size = 0x4, scoped, tag = 'scoped memory for end_to_end_forward.1']
    #allocation6 [shape = 'u8[65536]{0}', space=vmem, size = 0x10000, scoped, tag = 'input window, operand 3, single buffered']
    #allocation7 [shape = 'u8[16384]{0}', space=vmem, size = 0x4000, scoped, tag = 'input window, operand 5, single buffered']
    #allocation8 [shape = 's32[1]{0}', space=sflag, size = 0x4, scoped, tag = 'scoped memory for end_to_end_forward.1']
    #allocation9 [shape = 'u8[8192]{0}', space=vmem, size = 0x2000, scoped, tag = 'input window, operand 7, single buffered']
    #allocation10 [shape = 'u8[8192]{0}', space=vmem, size = 0x2000, scoped, tag = 'input window, operand 8, single buffered']
    #allocation11 [shape = 's32[1]{0}', space=sflag, size = 0x4, scoped, tag = 'scoped memory for end_to_end_forward.1']
    %14 = vsyncpa [#allocation3], 0
    %15 = vsyncpa [#allocation5], 0
    %16 = vsyncpa [#allocation8], 0
    %17 = vsyncpa [#allocation11], 0
    // Predicated region
    $region2: #{end_to_end_forward.1} parent=1 // pred_check
      _
    $region3: #{end_to_end_forward.1} parent=1 // pred_check_branch
      %19 = sbr.rel (0) target = $region5
    $region4: #{end_to_end_forward.1} parent=1 // pred_region
      _
    $region5: #{end_to_end_forward.1} parent=1 // pred_fallthru
      _
    // Predicated region
    $region6: #{end_to_end_forward.1} parent=1 // pred_check
      _
    $region7: #{end_to_end_forward.1} parent=1 // pred_check_branch
      %21 = sbr.rel (0) target = $region9
    $region8: #{end_to_end_forward.1} parent=1 // pred_region
      %s23 = ssub.s32 256, 256
      %24 = vsyncadd [#allocation3], %s23
      %s26 = sshll.u32 [#allocation2], 4
      %s27 = int_to_ptr.vmem [resolvable:$true] %s26
      %29 = dma.hbm_to_vmem [thread:$0]  %s1, 256, %s27, [#allocation3]
    $region9: #{end_to_end_forward.1} parent=1 // pred_fallthru
      _
    // Predicated region
    $region10: #{end_to_end_forward.1} parent=1 // pred_check
      _
    $region11: #{end_to_end_forward.1} parent=1 // pred_check_branch
      %31 = sbr.rel (0) target = $region13
    $region12: #{end_to_end_forward.1} parent=1 // pred_region
      %s33 = ssub.s32 65536, 65536
      %34 = vsyncadd [#allocation5], %s33
      %s35 = sshll.u32 [#allocation4], 4
      %s36 = int_to_ptr.vmem [resolvable:$true] %s35
      %41 = dma.hbm_to_vmem [thread:$0]  %s2, 65536, %s36, [#allocation5], 128, 128, 8
    $region13: #{end_to_end_forward.1} parent=1 // pred_fallthru
      _
    // Predicated region
    $region14: #{end_to_end_forward.1} parent=1 // pred_check
      _
    $region15: #{end_to_end_forward.1} parent=1 // pred_check_branch
      %43 = sbr.rel (0) target = $region17
    $region16: #{end_to_end_forward.1} parent=1 // pred_region
      %s45 = ssub.s32 2048, 2048
      %46 = vsyncadd [#allocation5], %s45
      %s47 = sshll.u32 [#allocation6], 4
      %s48 = int_to_ptr.vmem [resolvable:$true] %s47
      %53 = dma.hbm_to_vmem [thread:$0]  %s3, 2048, %s48, [#allocation5], 64, 64, 4
    $region17: #{end_to_end_forward.1} parent=1 // pred_fallthru
      _
    // Predicated region
    $region18: #{end_to_end_forward.1} parent=1 // pred_check
      _
    $region19: #{end_to_end_forward.1} parent=1 // pred_check_branch
      %55 = sbr.rel (0) target = $region21
    $region20: #{end_to_end_forward.1} parent=1 // pred_region
      _
    $region21: #{end_to_end_forward.1} parent=1 // pred_fallthru
      _
    // Predicated region
    $region22: #{end_to_end_forward.1} parent=1 // pred_check
      _
    $region23: #{end_to_end_forward.1} parent=1 // pred_check_branch
      %57 = sbr.rel (0) target = $region25
    $region24: #{end_to_end_forward.1} parent=1 // pred_region
      %s59 = ssub.s32 512, 512
      %60 = vsyncadd [#allocation8], %s59
      %s61 = sshll.u32 [#allocation7], 4
      %s62 = int_to_ptr.vmem [resolvable:$true] %s61
      %67 = dma.hbm_to_vmem [thread:$0]  %s5, 512, %s62, [#allocation8], 64, 64, 4
    $region25: #{end_to_end_forward.1} parent=1 // pred_fallthru
      _
    // Predicated region
    $region26: #{end_to_end_forward.1} parent=1 // pred_check
      _
    $region27: #{end_to_end_forward.1} parent=1 // pred_check_branch
      %69 = sbr.rel (0) target = $region29
    $region28: #{end_to_end_forward.1} parent=1 // pred_region
      _
    $region29: #{end_to_end_forward.1} parent=1 // pred_fallthru
      _
    // Predicated region
    $region30: #{end_to_end_forward.1} parent=1 // pred_check
      _
    $region31: #{end_to_end_forward.1} parent=1 // pred_check_branch
      %71 = sbr.rel (0) target = $region33
    $region32: #{end_to_end_forward.1} parent=1 // pred_region
      %s73 = ssub.s32 256, 256
      %74 = vsyncadd [#allocation8], %s73
      %s75 = sshll.u32 [#allocation9], 4
      %s76 = int_to_ptr.vmem [resolvable:$true] %s75
      %81 = dma.hbm_to_vmem [thread:$0]  %s7, 256, %s76, [#allocation8], 64, 64, 4
    $region33: #{end_to_end_forward.1} parent=1 // pred_fallthru
      _
    // Predicated region
    $region34: #{end_to_end_forward.1} parent=1 // pred_check
      _
    $region35: #{end_to_end_forward.1} parent=1 // pred_check_branch
      %83 = sbr.rel (0) target = $region37
    $region36: #{end_to_end_forward.1} parent=1 // pred_region
      %s85 = ssub.s32 256, 256
      %86 = vsyncadd [#allocation11], %s85
      %s88 = sshll.u32 [#allocation10], 4
      %s89 = int_to_ptr.vmem [resolvable:$true] %s88
      %91 = dma.hbm_to_vmem [thread:$0]  %s8, 256, %s89, [#allocation11]
    $region37: #{end_to_end_forward.1} parent=1 // pred_fallthru
      _
    // Predicated region
    $region38: #{end_to_end_forward.1} parent=1 // pred_check
      _
    $region39: #{end_to_end_forward.1} parent=1 // pred_check_branch
      %93 = sbr.rel (0) target = $region41
    $region40: #{end_to_end_forward.1} parent=1 // pred_region
      %94 = dma.done [#allocation3], 256
    $region41: #{end_to_end_forward.1} parent=1 // pred_fallthru
      _
    // Predicated region
    $region42: #{end_to_end_forward.1} parent=1 // pred_check
      _
    $region43: #{end_to_end_forward.1} parent=1 // pred_check_branch
      %96 = sbr.rel (0) target = $region45
    $region44: #{end_to_end_forward.1} parent=1 // pred_region
      %97 = dma.done [#allocation5], 65536
    $region45: #{end_to_end_forward.1} parent=1 // pred_fallthru
      _
    // Predicated region
    $region46: #{end_to_end_forward.1} parent=1 // pred_check
      _
    $region47: #{end_to_end_forward.1} parent=1 // pred_check_branch
      %99 = sbr.rel (0) target = $region49
    $region48: #{end_to_end_forward.1} parent=1 // pred_region
      %100 = dma.done [#allocation5], 2048
    $region49: #{end_to_end_forward.1} parent=1 // pred_fallthru
      _
    // Predicated region
    $region50: #{end_to_end_forward.1} parent=1 // pred_check
      _
    $region51: #{end_to_end_forward.1} parent=1 // pred_check_branch
      %102 = sbr.rel (0) target = $region53
    $region52: #{end_to_end_forward.1} parent=1 // pred_region
      %103 = dma.done [#allocation8], 512
    $region53: #{end_to_end_forward.1} parent=1 // pred_fallthru
      _
    // Predicated region
    $region54: #{end_to_end_forward.1} parent=1 // pred_check
      _
    $region55: #{end_to_end_forward.1} parent=1 // pred_check_branch
      %105 = sbr.rel (0) target = $region57
    $region56: #{end_to_end_forward.1} parent=1 // pred_region
      %106 = dma.done [#allocation8], 256
    $region57: #{end_to_end_forward.1} parent=1 // pred_fallthru
      _
    // Predicated region
    $region58: #{end_to_end_forward.1} parent=1 // pred_check
      _
    $region59: #{end_to_end_forward.1} parent=1 // pred_check_branch
      %108 = sbr.rel (0) target = $region61
    $region60: #{end_to_end_forward.1} parent=1 // pred_region
      %109 = dma.done [#allocation11], 256
    $region61: #{end_to_end_forward.1} parent=1 // pred_fallthru
      _
    %v111 = vld [vmem:[#allocation10] sm:$0xff]
    %v112 = vld [vmem:[#allocation10 + $0x8] sm:$0xff]
    %v113 = vld [vmem:[#allocation2] sm:$0xff]
    %v114 = vld [vmem:[#allocation2 + $0x8] sm:$0xff]
    %v115 = vld [vmem:[%s0] sm:$0xff]
    %v116 = vld [vmem:[%s0 + $0x8] sm:$0xff]
    %v117 = vld [vmem:[%s0 + $0x10] sm:$0xff]
    %v118 = vld [vmem:[%s0 + $0x18] sm:$0xff]
    %v119 = vld [vmem:[%s0 + $0x20] sm:$0xff]
    %v120 = vld [vmem:[%s0 + $0x28] sm:$0xff]
    %v121 = vld [vmem:[%s0 + $0x30] sm:$0xff]
    %v122 = vld [vmem:[%s0 + $0x38] sm:$0xff]
    %v123 = vld [vmem:[%s0 + $0x40] sm:$0xff]
    %v124 = vld [vmem:[%s0 + $0x48] sm:$0xff]
    %v125 = vld [vmem:[%s0 + $0x50] sm:$0xff]
    %v126 = vld [vmem:[%s0 + $0x58] sm:$0xff]
    %v127 = vld [vmem:[%s0 + $0x60] sm:$0xff]
    %v128 = vld [vmem:[%s0 + $0x68] sm:$0xff]
    %v129 = vld [vmem:[%s0 + $0x70] sm:$0xff]
    %v130 = vld [vmem:[%s0 + $0x78] sm:$0xff]
    %v131 = vld [vmem:[%s0 + $0x80] sm:$0xff]
    %v132 = vld [vmem:[%s0 + $0x88] sm:$0xff]
    %v133 = vld [vmem:[%s0 + $0x90] sm:$0xff]
    %v134 = vld [vmem:[%s0 + $0x98] sm:$0xff]
    %v135 = vld [vmem:[%s0 + $0xa0] sm:$0xff]
    %v136 = vld [vmem:[%s0 + $0xa8] sm:$0xff]
    %v137 = vld [vmem:[%s0 + $0xb0] sm:$0xff]
    %v138 = vld [vmem:[%s0 + $0xb8] sm:$0xff]
    %v139 = vld [vmem:[%s0 + $0xc0] sm:$0xff]
    %v140 = vld [vmem:[%s0 + $0xc8] sm:$0xff]
    %v141 = vld [vmem:[%s0 + $0xd0] sm:$0xff]
    %v142 = vld [vmem:[%s0 + $0xd8] sm:$0xff]
    %v143 = vld [vmem:[%s0 + $0xe0] sm:$0xff]
    %v144 = vld [vmem:[%s0 + $0xe8] sm:$0xff]
    %v145 = vld [vmem:[%s0 + $0xf0] sm:$0xff]
    %v146 = vld [vmem:[%s0 + $0xf8] sm:$0xff]
    %v147 = vld [vmem:[%s0 + $0x100] sm:$0xff]
    %v148 = vld [vmem:[%s0 + $0x108] sm:$0xff]
    %v149 = vld [vmem:[%s0 + $0x110] sm:$0xff]
    %v150 = vld [vmem:[%s0 + $0x118] sm:$0xff]
    %v151 = vld [vmem:[%s0 + $0x120] sm:$0xff]
    %v152 = vld [vmem:[%s0 + $0x128] sm:$0xff]
    %v153 = vld [vmem:[%s0 + $0x130] sm:$0xff]
    %v154 = vld [vmem:[%s0 + $0x138] sm:$0xff]
    %v155 = vld [vmem:[%s0 + $0x140] sm:$0xff]
    %v156 = vld [vmem:[%s0 + $0x148] sm:$0xff]
    %v157 = vld [vmem:[%s0 + $0x150] sm:$0xff]
    %v158 = vld [vmem:[%s0 + $0x158] sm:$0xff]
    %v159 = vunpack.c.l.bf16 %v115
    %v160 = vunpack.c.h.bf16 %v115
    %v161 = vunpack.c.l.bf16 %v116
    %v162 = vunpack.c.h.bf16 %v116
    %v163 = vunpack.c.l.bf16 %v117
    %v164 = vunpack.c.h.bf16 %v117
    %v165 = vunpack.c.l.bf16 %v118
    %v166 = vunpack.c.h.bf16 %v118
    %v167 = vunpack.c.l.bf16 %v119
    %v168 = vunpack.c.h.bf16 %v119
    %v169 = vunpack.c.l.bf16 %v120
    %v170 = vunpack.c.h.bf16 %v120
    %v171 = vunpack.c.l.bf16 %v121
    %v172 = vunpack.c.h.bf16 %v121
    %v173 = vunpack.c.l.bf16 %v122
    %v174 = vunpack.c.h.bf16 %v122
    %v175 = vunpack.c.l.bf16 %v123
    %v176 = vunpack.c.h.bf16 %v123
    %v177 = vunpack.c.l.bf16 %v124
    %v178 = vunpack.c.h.bf16 %v124
    %v179 = vunpack.c.l.bf16 %v125
    %v180 = vunpack.c.h.bf16 %v125
    %v181 = vunpack.c.l.bf16 %v126
    %v182 = vunpack.c.h.bf16 %v126
    %v183 = vunpack.c.l.bf16 %v127
    %v184 = vunpack.c.h.bf16 %v127
    %v185 = vunpack.c.l.bf16 %v128
    %v186 = vunpack.c.h.bf16 %v128
    %v187 = vunpack.c.l.bf16 %v129
    %v188 = vunpack.c.h.bf16 %v129
    %v189 = vunpack.c.l.bf16 %v130
    %v190 = vunpack.c.h.bf16 %v130
    %v191 = vunpack.c.l.bf16 %v131
    %v192 = vunpack.c.h.bf16 %v131
    %v193 = vunpack.c.l.bf16 %v132
    %v194 = vunpack.c.h.bf16 %v132
    %v195 = vunpack.c.l.bf16 %v133
    %v196 = vunpack.c.h.bf16 %v133
    %v197 = vunpack.c.l.bf16 %v134
    %v198 = vunpack.c.h.bf16 %v134
    %v199 = vunpack.c.l.bf16 %v135
    %v200 = vunpack.c.h.bf16 %v135
    %v201 = vunpack.c.l.bf16 %v136
    %v202 = vunpack.c.h.bf16 %v136
    %v203 = vunpack.c.l.bf16 %v137
    %v204 = vunpack.c.h.bf16 %v137
    %v205 = vunpack.c.l.bf16 %v138
    %v206 = vunpack.c.h.bf16 %v138
    %v207 = vunpack.c.l.bf16 %v139
    %v208 = vunpack.c.h.bf16 %v139
    %v209 = vunpack.c.l.bf16 %v140
    %v210 = vunpack.c.h.bf16 %v140
    %v211 = vunpack.c.l.bf16 %v141
    %v212 = vunpack.c.h.bf16 %v141
    %v213 = vunpack.c.l.bf16 %v142
    %v214 = vunpack.c.h.bf16 %v142
    %v215 = vunpack.c.l.bf16 %v143
    %v216 = vunpack.c.h.bf16 %v143
    %v217 = vunpack.c.l.bf16 %v144
    %v218 = vunpack.c.h.bf16 %v144
    %v219 = vunpack.c.l.bf16 %v145
    %v220 = vunpack.c.h.bf16 %v145
    %v221 = vunpack.c.l.bf16 %v146
    %v222 = vunpack.c.h.bf16 %v146
    %v223 = vunpack.c.l.bf16 %v147
    %v224 = vunpack.c.h.bf16 %v147
    %v225 = vunpack.c.l.bf16 %v148
    %v226 = vunpack.c.h.bf16 %v148
    %v227 = vunpack.c.l.bf16 %v149
    %v228 = vunpack.c.h.bf16 %v149
    %v229 = vunpack.c.l.bf16 %v150
    %v230 = vunpack.c.h.bf16 %v150
    %v231 = vunpack.c.l.bf16 %v151
    %v232 = vunpack.c.h.bf16 %v151
    %v233 = vunpack.c.l.bf16 %v152
    %v234 = vunpack.c.h.bf16 %v152
    %v235 = vunpack.c.l.bf16 %v153
    %v236 = vunpack.c.h.bf16 %v153
    %v237 = vunpack.c.l.bf16 %v154
    %v238 = vunpack.c.h.bf16 %v154
    %v239 = vunpack.c.l.bf16 %v155
    %v240 = vunpack.c.h.bf16 %v155
    %v241 = vunpack.c.l.bf16 %v156
    %v242 = vunpack.c.h.bf16 %v156
    %v243 = vunpack.c.l.bf16 %v157
    %v244 = vunpack.c.h.bf16 %v157
    %v245 = vunpack.c.l.bf16 %v158
    %v246 = vunpack.c.h.bf16 %v158
    %vm247 = vcmask 392192
    %v249 = vsel %vm247, %v114, 0
    %251 = vmatprep.subr.mxu0 %v160
    %252 = vmatpush1.msra.mxu0 %v159
    %253 = vmatprep.subr.mxu0 %v164
    %254 = vmatpush1.msra.mxu0 %v163
    %255 = vmatprep.subr.mxu0 %v168
    %256 = vmatpush1.msra.mxu0 %v167
    %257 = vmatprep.subr.mxu0 %v172
    %258 = vmatpush1.msra.mxu0 %v171
    %259 = vmatprep.subr.mxu0 %v176
    %260 = vmatpush1.msra.mxu0 %v175
    %261 = vmatprep.subr.mxu0 %v180
    %262 = vmatpush1.msra.mxu0 %v179
    %263 = vmatprep.subr.mxu0 %v184
    %264 = vmatpush1.msra.mxu0 %v183
    %265 = vmatprep.subr.mxu0 %v188
    %266 = vmatpush1.msra.mxu0 %v187
    %267 = vmatprep.subr.mxu0 %v192
    %268 = vmatpush1.msra.mxu0 %v191
    %269 = vmatprep.subr.mxu0 %v196
    %270 = vmatpush1.msra.mxu0 %v195
    %271 = vmatprep.subr.mxu0 %v200
    %272 = vmatpush1.msra.mxu0 %v199
    %273 = vmatprep.subr.mxu0 %v204
    %274 = vmatpush1.msra.mxu0 %v203
    %275 = vmatprep.subr.mxu0 %v208
    %276 = vmatpush1.msra.mxu0 %v207
    %277 = vmatprep.subr.mxu0 %v212
    %278 = vmatpush1.msra.mxu0 %v211
    %279 = vmatprep.subr.mxu0 %v216
    %280 = vmatpush1.msra.mxu0 %v215
    %281 = vmatprep.subr.mxu0 %v220
    %282 = vmatpush1.msra.mxu0 %v219
    %283 = vmatprep.subr.mxu0 %v224
    %284 = vmatpush1.msra.mxu0 %v223
    %285 = vmatprep.subr.mxu0 %v228
    %286 = vmatpush1.msra.mxu0 %v227
    %287 = vmatprep.subr.mxu0 %v232
    %288 = vmatpush1.msra.mxu0 %v231
    %289 = vmatprep.subr.mxu0 %v236
    %290 = vmatpush1.msra.mxu0 %v235
    %291 = vmatprep.subr.mxu0 %v240
    %292 = vmatpush1.msra.mxu0 %v239
    %293 = vmatprep.subr.mxu0 %v244
    %294 = vmatpush1.msra.mxu0 %v243
    %295 = vmatprep.subr.mxu0 0.0
    %296 = vmatpush1.msra.mxu0 0.0
    %297 = vmatprep.subr.mxu0 0.0
    %298 = vmatpush1.msra.mxu0 0.0
    %299 = vmatprep.subr.mxu0 0.0
    %300 = vmatpush1.msra.mxu0 0.0
    %301 = vmatprep.subr.mxu0 0.0
    %302 = vmatpush1.msra.mxu0 0.0
    %303 = vmatprep.subr.mxu0 0.0
    %304 = vmatpush1.msra.mxu0 0.0
    %305 = vmatprep.subr.mxu0 0.0
    %306 = vmatpush1.msra.mxu0 0.0
    %307 = vmatprep.subr.mxu0 0.0
    %308 = vmatpush1.msra.mxu0 0.0
    %309 = vmatprep.subr.mxu0 0.0
    %310 = vmatpush1.msra.mxu0 0.0
    %311 = vmatprep.subr.mxu0 0.0
    %312 = vmatpush1.msra.mxu0 0.0
    %313 = vmatprep.subr.mxu0 0.0
    %314 = vmatpush1.msra.mxu0 0.0
    %315 = vmatprep.mubr.f32.mxu0 %v249
    %316 = vmatmul.mubr.f32.gmra.mrb[0].mxu0 %v113
    %v317 = vpop.f32.mrb[0].mxu0
    %v318 = vadd.f32 0.0, %v317
    %v319 = vpop.f32.mrb[0].mxu0
    %v320 = vadd.f32 0.0, %v319
    %321 = vdwg.mxu0
    %322 = vmatprep.subr.mxu0 %v162
    %323 = vmatpush1.msra.mxu0 %v161
    %324 = vmatprep.subr.mxu0 %v166
    %325 = vmatpush1.msra.mxu0 %v165
    %326 = vmatprep.subr.mxu0 %v170
    %327 = vmatpush1.msra.mxu0 %v169
    %328 = vmatprep.subr.mxu0 %v174
    %329 = vmatpush1.msra.mxu0 %v173
    %330 = vmatprep.subr.mxu0 %v178
    %331 = vmatpush1.msra.mxu0 %v177
    %332 = vmatprep.subr.mxu0 %v182
    %333 = vmatpush1.msra.mxu0 %v181
    %334 = vmatprep.subr.mxu0 %v186
    %335 = vmatpush1.msra.mxu0 %v185
    %336 = vmatprep.subr.mxu0 %v190
    %337 = vmatpush1.msra.mxu0 %v189
    %338 = vmatprep.subr.mxu0 %v194
    %339 = vmatpush1.msra.mxu0 %v193
    %340 = vmatprep.subr.mxu0 %v198
    %341 = vmatpush1.msra.mxu0 %v197
    %342 = vmatprep.subr.mxu0 %v202
    %343 = vmatpush1.msra.mxu0 %v201
    %344 = vmatprep.subr.mxu0 %v206
    %345 = vmatpush1.msra.mxu0 %v205
    %346 = vmatprep.subr.mxu0 %v210
    %347 = vmatpush1.msra.mxu0 %v209
    %348 = vmatprep.subr.mxu0 %v214
    %349 = vmatpush1.msra.mxu0 %v213
    %350 = vmatprep.subr.mxu0 %v218
    %351 = vmatpush1.msra.mxu0 %v217
    %352 = vmatprep.subr.mxu0 %v222
    %353 = vmatpush1.msra.mxu0 %v221
    %354 = vmatprep.subr.mxu0 %v226
    %355 = vmatpush1.msra.mxu0 %v225
    %356 = vmatprep.subr.mxu0 %v230
    %357 = vmatpush1.msra.mxu0 %v229
    %358 = vmatprep.subr.mxu0 %v234
    %359 = vmatpush1.msra.mxu0 %v233
    %360 = vmatprep.subr.mxu0 %v238
    %361 = vmatpush1.msra.mxu0 %v237
    %362 = vmatprep.subr.mxu0 %v242
    %363 = vmatpush1.msra.mxu0 %v241
    %364 = vmatprep.subr.mxu0 %v246
    %365 = vmatpush1.msra.mxu0 %v245
    %366 = vmatprep.subr.mxu0 0.0
    %367 = vmatpush1.msra.mxu0 0.0
    %368 = vmatprep.subr.mxu0 0.0
    %369 = vmatpush1.msra.mxu0 0.0
    %370 = vmatprep.subr.mxu0 0.0
    %371 = vmatpush1.msra.mxu0 0.0
    %372 = vmatprep.subr.mxu0 0.0
    %373 = vmatpush1.msra.mxu0 0.0
    %374 = vmatprep.subr.mxu0 0.0
    %375 = vmatpush1.msra.mxu0 0.0
    %376 = vmatprep.subr.mxu0 0.0
    %377 = vmatpush1.msra.mxu0 0.0
    %378 = vmatprep.subr.mxu0 0.0
    %379 = vmatpush1.msra.mxu0 0.0
    %380 = vmatprep.subr.mxu0 0.0
    %381 = vmatpush1.msra.mxu0 0.0
    %382 = vmatprep.subr.mxu0 0.0
    %383 = vmatpush1.msra.mxu0 0.0
    %384 = vmatprep.subr.mxu0 0.0
    %385 = vmatpush1.msra.mxu0 0.0
    %386 = vmatprep.mubr.f32.mxu0 %v249
    %387 = vmatmul.mubr.f32.gmra.mrb[0].mxu0 %v113
    %v388 = vpop.f32.mrb[0].mxu0
    %v389 = vadd.f32 0.0, %v388
    %v390 = vpop.f32.mrb[0].mxu0
    %v391 = vadd.f32 0.0, %v390
    %392 = vdwg.mxu0
    %s393 = scalar_lea.vmem %s0, 352
    %v394 = vld [vmem:[%s393] sm:$0xff]
    %v395 = vld [vmem:[%s393 + $0x8] sm:$0xff]
    %v396 = vld [vmem:[%s393 + $0x10] sm:$0xff]
    %v397 = vld [vmem:[%s393 + $0x18] sm:$0xff]
    %v398 = vld [vmem:[%s393 + $0x20] sm:$0xff]
    %v399 = vld [vmem:[%s393 + $0x28] sm:$0xff]
    %v400 = vld [vmem:[%s393 + $0x30] sm:$0xff]
    %v401 = vld [vmem:[%s393 + $0x38] sm:$0xff]
    %v402 = vld [vmem:[%s393 + $0x40] sm:$0xff]
    %v403 = vld [vmem:[%s393 + $0x48] sm:$0xff]
    %v404 = vld [vmem:[%s393 + $0x50] sm:$0xff]
    %v405 = vld [vmem:[%s393 + $0x58] sm:$0xff]
    %v406 = vld [vmem:[%s393 + $0x60] sm:$0xff]
    %v407 = vld [vmem:[%s393 + $0x68] sm:$0xff]
    %v408 = vld [vmem:[%s393 + $0x70] sm:$0xff]
    %v409 = vld [vmem:[%s393 + $0x78] sm:$0xff]
    %v410 = vld [vmem:[%s393 + $0x80] sm:$0xff]
    %v411 = vld [vmem:[%s393 + $0x88] sm:$0xff]
    %v412 = vld [vmem:[%s393 + $0x90] sm:$0xff]
    %v413 = vld [vmem:[%s393 + $0x98] sm:$0xff]
    %v414 = vld [vmem:[%s393 + $0xa0] sm:$0xff]
    %v415 = vld [vmem:[%s393 + $0xa8] sm:$0xff]
    %v416 = vld [vmem:[%s393 + $0xb0] sm:$0xff]
    %v417 = vld [vmem:[%s393 + $0xb8] sm:$0xff]
    %v418 = vld [vmem:[%s393 + $0xc0] sm:$0xff]
    %v419 = vld [vmem:[%s393 + $0xc8] sm:$0xff]
    %v420 = vld [vmem:[%s393 + $0xd0] sm:$0xff]
    %v421 = vld [vmem:[%s393 + $0xd8] sm:$0xff]
    %v422 = vld [vmem:[%s393 + $0xe0] sm:$0xff]
    %v423 = vld [vmem:[%s393 + $0xe8] sm:$0xff]
    %v424 = vld [vmem:[%s393 + $0xf0] sm:$0xff]
    %v425 = vld [vmem:[%s393 + $0xf8] sm:$0xff]
    %v426 = vld [vmem:[%s393 + $0x100] sm:$0xff]
    %v427 = vld [vmem:[%s393 + $0x108] sm:$0xff]
    %v428 = vld [vmem:[%s393 + $0x110] sm:$0xff]
    %v429 = vld [vmem:[%s393 + $0x118] sm:$0xff]
    %v430 = vld [vmem:[%s393 + $0x120] sm:$0xff]
    %v431 = vld [vmem:[%s393 + $0x128] sm:$0xff]
    %v432 = vld [vmem:[%s393 + $0x130] sm:$0xff]
    %v433 = vld [vmem:[%s393 + $0x138] sm:$0xff]
    %v434 = vld [vmem:[%s393 + $0x140] sm:$0xff]
    %v435 = vld [vmem:[%s393 + $0x148] sm:$0xff]
    %v436 = vld [vmem:[%s393 + $0x150] sm:$0xff]
    %v437 = vld [vmem:[%s393 + $0x158] sm:$0xff]
    %v438 = vunpack.c.l.bf16 %v394
    %v439 = vunpack.c.h.bf16 %v394
    %v440 = vunpack.c.l.bf16 %v395
    %v441 = vunpack.c.h.bf16 %v395
    %v442 = vunpack.c.l.bf16 %v396
    %v443 = vunpack.c.h.bf16 %v396
    %v444 = vunpack.c.l.bf16 %v397
    %v445 = vunpack.c.h.bf16 %v397
    %v446 = vunpack.c.l.bf16 %v398
    %v447 = vunpack.c.h.bf16 %v398
    %v448 = vunpack.c.l.bf16 %v399
    %v449 = vunpack.c.h.bf16 %v399
    %v450 = vunpack.c.l.bf16 %v400
    %v451 = vunpack.c.h.bf16 %v400
    %v452 = vunpack.c.l.bf16 %v401
    %v453 = vunpack.c.h.bf16 %v401
    %v454 = vunpack.c.l.bf16 %v402
    %v455 = vunpack.c.h.bf16 %v402
    %v456 = vunpack.c.l.bf16 %v403
    %v457 = vunpack.c.h.bf16 %v403
    %v458 = vunpack.c.l.bf16 %v404
    %v459 = vunpack.c.h.bf16 %v404
    %v460 = vunpack.c.l.bf16 %v405
    %v461 = vunpack.c.h.bf16 %v405
    %v462 = vunpack.c.l.bf16 %v406
    %v463 = vunpack.c.h.bf16 %v406
    %v464 = vunpack.c.l.bf16 %v407
    %v465 = vunpack.c.h.bf16 %v407
    %v466 = vunpack.c.l.bf16 %v408
    %v467 = vunpack.c.h.bf16 %v408
    %v468 = vunpack.c.l.bf16 %v409
    %v469 = vunpack.c.h.bf16 %v409
    %v470 = vunpack.c.l.bf16 %v410
    %v471 = vunpack.c.h.bf16 %v410
    %v472 = vunpack.c.l.bf16 %v411
    %v473 = vunpack.c.h.bf16 %v411
    %v474 = vunpack.c.l.bf16 %v412
    %v475 = vunpack.c.h.bf16 %v412
    %v476 = vunpack.c.l.bf16 %v413
    %v477 = vunpack.c.h.bf16 %v413
    %v478 = vunpack.c.l.bf16 %v414
    %v479 = vunpack.c.h.bf16 %v414
    %v480 = vunpack.c.l.bf16 %v415
    %v481 = vunpack.c.h.bf16 %v415
    %v482 = vunpack.c.l.bf16 %v416
    %v483 = vunpack.c.h.bf16 %v416
    %v484 = vunpack.c.l.bf16 %v417
    %v485 = vunpack.c.h.bf16 %v417
    %v486 = vunpack.c.l.bf16 %v418
    %v487 = vunpack.c.h.bf16 %v418
    %v488 = vunpack.c.l.bf16 %v419
    %v489 = vunpack.c.h.bf16 %v419
    %v490 = vunpack.c.l.bf16 %v420
    %v491 = vunpack.c.h.bf16 %v420
    %v492 = vunpack.c.l.bf16 %v421
    %v493 = vunpack.c.h.bf16 %v421
    %v494 = vunpack.c.l.bf16 %v422
    %v495 = vunpack.c.h.bf16 %v422
    %v496 = vunpack.c.l.bf16 %v423
    %v497 = vunpack.c.h.bf16 %v423
    %v498 = vunpack.c.l.bf16 %v424
    %v499 = vunpack.c.h.bf16 %v424
    %v500 = vunpack.c.l.bf16 %v425
    %v501 = vunpack.c.h.bf16 %v425
    %v502 = vunpack.c.l.bf16 %v426
    %v503 = vunpack.c.h.bf16 %v426
    %v504 = vunpack.c.l.bf16 %v427
    %v505 = vunpack.c.h.bf16 %v427
    %v506 = vunpack.c.l.bf16 %v428
    %v507 = vunpack.c.h.bf16 %v428
    %v508 = vunpack.c.l.bf16 %v429
    %v509 = vunpack.c.h.bf16 %v429
    %v510 = vunpack.c.l.bf16 %v430
    %v511 = vunpack.c.h.bf16 %v430
    %v512 = vunpack.c.l.bf16 %v431
    %v513 = vunpack.c.h.bf16 %v431
    %v514 = vunpack.c.l.bf16 %v432
    %v515 = vunpack.c.h.bf16 %v432
    %v516 = vunpack.c.l.bf16 %v433
    %v517 = vunpack.c.h.bf16 %v433
    %v518 = vunpack.c.l.bf16 %v434
    %v519 = vunpack.c.h.bf16 %v434
    %v520 = vunpack.c.l.bf16 %v435
    %v521 = vunpack.c.h.bf16 %v435
    %v522 = vunpack.c.l.bf16 %v436
    %v523 = vunpack.c.h.bf16 %v436
    %v524 = vunpack.c.l.bf16 %v437
    %v525 = vunpack.c.h.bf16 %v437
    %526 = vmatprep.subr.mxu0 %v439
    %527 = vmatpush1.msra.mxu0 %v438
    %528 = vmatprep.subr.mxu0 %v443
    %529 = vmatpush1.msra.mxu0 %v442
    %530 = vmatprep.subr.mxu0 %v447
    %531 = vmatpush1.msra.mxu0 %v446
    %532 = vmatprep.subr.mxu0 %v451
    %533 = vmatpush1.msra.mxu0 %v450
    %534 = vmatprep.subr.mxu0 %v455
    %535 = vmatpush1.msra.mxu0 %v454
    %536 = vmatprep.subr.mxu0 %v459
    %537 = vmatpush1.msra.mxu0 %v458
    %538 = vmatprep.subr.mxu0 %v463
    %539 = vmatpush1.msra.mxu0 %v462
    %540 = vmatprep.subr.mxu0 %v467
    %541 = vmatpush1.msra.mxu0 %v466
    %542 = vmatprep.subr.mxu0 %v471
    %543 = vmatpush1.msra.mxu0 %v470
    %544 = vmatprep.subr.mxu0 %v475
    %545 = vmatpush1.msra.mxu0 %v474
    %546 = vmatprep.subr.mxu0 %v479
    %547 = vmatpush1.msra.mxu0 %v478
    %548 = vmatprep.subr.mxu0 %v483
    %549 = vmatpush1.msra.mxu0 %v482
    %550 = vmatprep.subr.mxu0 %v487
    %551 = vmatpush1.msra.mxu0 %v486
    %552 = vmatprep.subr.mxu0 %v491
    %553 = vmatpush1.msra.mxu0 %v490
    %554 = vmatprep.subr.mxu0 %v495
    %555 = vmatpush1.msra.mxu0 %v494
    %556 = vmatprep.subr.mxu0 %v499
    %557 = vmatpush1.msra.mxu0 %v498
    %558 = vmatprep.subr.mxu0 %v503
    %559 = vmatpush1.msra.mxu0 %v502
    %560 = vmatprep.subr.mxu0 %v507
    %561 = vmatpush1.msra.mxu0 %v506
    %562 = vmatprep.subr.mxu0 %v511
    %563 = vmatpush1.msra.mxu0 %v510
    %564 = vmatprep.subr.mxu0 %v515
    %565 = vmatpush1.msra.mxu0 %v514
    %566 = vmatprep.subr.mxu0 %v519
    %567 = vmatpush1.msra.mxu0 %v518
    %568 = vmatprep.subr.mxu0 %v523
    %569 = vmatpush1.msra.mxu0 %v522
    %570 = vmatprep.subr.mxu0 0.0
    %571 = vmatpush1.msra.mxu0 0.0
    %572 = vmatprep.subr.mxu0 0.0
    %573 = vmatpush1.msra.mxu0 0.0
    %574 = vmatprep.subr.mxu0 0.0
    %575 = vmatpush1.msra.mxu0 0.0
    %576 = vmatprep.subr.mxu0 0.0
    %577 = vmatpush1.msra.mxu0 0.0
    %578 = vmatprep.subr.mxu0 0.0
    %579 = vmatpush1.msra.mxu0 0.0
    %580 = vmatprep.subr.mxu0 0.0
    %581 = vmatpush1.msra.mxu0 0.0
    %582 = vmatprep.subr.mxu0 0.0
    %583 = vmatpush1.msra.mxu0 0.0
    %584 = vmatprep.subr.mxu0 0.0
    %585 = vmatpush1.msra.mxu0 0.0
    %586 = vmatprep.subr.mxu0 0.0
    %587 = vmatpush1.msra.mxu0 0.0
    %588 = vmatprep.subr.mxu0 0.0
    %589 = vmatpush1.msra.mxu0 0.0
    %590 = vmatprep.mubr.f32.mxu0 %v249
    %591 = vmatmul.mubr.f32.gmra.mrb[0].mxu0 %v113
    %v592 = vpop.f32.mrb[0].mxu0
    %v593 = vadd.f32 0.0, %v592
    %v594 = vpop.f32.mrb[0].mxu0
    %v595 = vadd.f32 0.0, %v594
    %596 = vdwg.mxu0
    %597 = vmatprep.subr.mxu0 %v441
    %598 = vmatpush1.msra.mxu0 %v440
    %599 = vmatprep.subr.mxu0 %v445
    %600 = vmatpush1.msra.mxu0 %v444
    %601 = vmatprep.subr.mxu0 %v449
    %602 = vmatpush1.msra.mxu0 %v448
    %603 = vmatprep.subr.mxu0 %v453
    %604 = vmatpush1.msra.mxu0 %v452
    %605 = vmatprep.subr.mxu0 %v457
    %606 = vmatpush1.msra.mxu0 %v456
    %607 = vmatprep.subr.mxu0 %v461
    %608 = vmatpush1.msra.mxu0 %v460
    %609 = vmatprep.subr.mxu0 %v465
    %610 = vmatpush1.msra.mxu0 %v464
    %611 = vmatprep.subr.mxu0 %v469
    %612 = vmatpush1.msra.mxu0 %v468
    %613 = vmatprep.subr.mxu0 %v473
    %614 = vmatpush1.msra.mxu0 %v472
    %615 = vmatprep.subr.mxu0 %v477
    %616 = vmatpush1.msra.mxu0 %v476
    %617 = vmatprep.subr.mxu0 %v481
    %618 = vmatpush1.msra.mxu0 %v480
    %619 = vmatprep.subr.mxu0 %v485
    %620 = vmatpush1.msra.mxu0 %v484
    %621 = vmatprep.subr.mxu0 %v489
    %622 = vmatpush1.msra.mxu0 %v488
    %623 = vmatprep.subr.mxu0 %v493
    %624 = vmatpush1.msra.mxu0 %v492
    %625 = vmatprep.subr.mxu0 %v497
    %626 = vmatpush1.msra.mxu0 %v496
    %627 = vmatprep.subr.mxu0 %v501
    %628 = vmatpush1.msra.mxu0 %v500
    %629 = vmatprep.subr.mxu0 %v505
    %630 = vmatpush1.msra.mxu0 %v504
    %631 = vmatprep.subr.mxu0 %v509
    %632 = vmatpush1.msra.mxu0 %v508
    %633 = vmatprep.subr.mxu0 %v513
    %634 = vmatpush1.msra.mxu0 %v512
    %635 = vmatprep.subr.mxu0 %v517
    %636 = vmatpush1.msra.mxu0 %v516
    %637 = vmatprep.subr.mxu0 %v521
    %638 = vmatpush1.msra.mxu0 %v520
    %639 = vmatprep.subr.mxu0 %v525
    %640 = vmatpush1.msra.mxu0 %v524
    %641 = vmatprep.subr.mxu0 0.0
    %642 = vmatpush1.msra.mxu0 0.0
    %643 = vmatprep.subr.mxu0 0.0
    %644 = vmatpush1.msra.mxu0 0.0
    %645 = vmatprep.subr.mxu0 0.0
    %646 = vmatpush1.msra.mxu0 0.0
    %647 = vmatprep.subr.mxu0 0.0
    %648 = vmatpush1.msra.mxu0 0.0
    %649 = vmatprep.subr.mxu0 0.0
    %650 = vmatpush1.msra.mxu0 0.0
    %651 = vmatprep.subr.mxu0 0.0
    %652 = vmatpush1.msra.mxu0 0.0
    %653 = vmatprep.subr.mxu0 0.0
    %654 = vmatpush1.msra.mxu0 0.0
    %655 = vmatprep.subr.mxu0 0.0
    %656 = vmatpush1.msra.mxu0 0.0
    %657 = vmatprep.subr.mxu0 0.0
    %658 = vmatpush1.msra.mxu0 0.0
    %659 = vmatprep.subr.mxu0 0.0
    %660 = vmatpush1.msra.mxu0 0.0
    %661 = vmatprep.mubr.f32.mxu0 %v249
    %662 = vmatmul.mubr.f32.gmra.mrb[0].mxu0 %v113
    %v663 = vpop.f32.mrb[0].mxu0
    %v664 = vadd.f32 0.0, %v663
    %v665 = vpop.f32.mrb[0].mxu0
    %v666 = vadd.f32 0.0, %v665
    %667 = vdwg.mxu0
    %v672 = vcombine.low %v318, %v320
    %v673 = vcombine.high %v318, %v320
    %v674 = vcombine.low %v389, %v391
    %v675 = vcombine.high %v389, %v391
    %v677 = vunpack.c.l.s4 1966171168
    %v678 = vunpack.c.0.s8 %v677
    %v679 = vlaneseq
    %v680 = vshrl.u32 %v679, 7
    %v681 = vsub.s32 %v678, %v680
    %v682 = vrot.slane %v672, %v681
    %v684 = vunpack.c.l.s4 1966171168
    %v685 = vunpack.c.0.s8 %v684
    %v686 = vlaneseq
    %v687 = vshrl.u32 %v686, 7
    %v688 = vsub.s32 %v685, %v687
    %v689 = vrot.slane %v673, %v688
    %v691 = vunpack.c.l.s4 1966171168
    %v692 = vunpack.c.0.s8 %v691
    %v693 = vlaneseq
    %v694 = vshrl.u32 %v693, 7
    %v695 = vsub.s32 %v692, %v694
    %v696 = vrot.slane %v674, %v695
    %v698 = vunpack.c.l.s4 1966171168
    %v699 = vunpack.c.0.s8 %v698
    %v700 = vlaneseq
    %v701 = vshrl.u32 %v700, 7
    %v702 = vsub.s32 %v699, %v701
    %v703 = vrot.slane %v675, %v702
    %v704 = vcombine.low %v682, %v696
    %v705 = vcombine.high %v682, %v696
    %v706 = vcombine.low %v689, %v703
    %v707 = vcombine.high %v689, %v703
    %v709 = vunpack.c.l.s4 1966171168
    %v710 = vunpack.c.0.s8 %v709
    %v711 = vlaneseq
    %v712 = vshrl.u32 %v711, 7
    %v713 = vsub.s32 %v710, %v712
    %v714 = vrot.slane %v704, %v713
    %v716 = vunpack.c.l.s4 1966171168
    %v717 = vunpack.c.0.s8 %v716
    %v718 = vlaneseq
    %v719 = vshrl.u32 %v718, 7
    %v720 = vsub.s32 %v717, %v719
    %v721 = vrot.slane %v706, %v720
    %v723 = vunpack.c.l.s4 1966171168
    %v724 = vunpack.c.0.s8 %v723
    %v725 = vlaneseq
    %v726 = vshrl.u32 %v725, 7
    %v727 = vsub.s32 %v724, %v726
    %v728 = vrot.slane %v705, %v727
    %v730 = vunpack.c.l.s4 1966171168
    %v731 = vunpack.c.0.s8 %v730
    %v732 = vlaneseq
    %v733 = vshrl.u32 %v732, 7
    %v734 = vsub.s32 %v731, %v733
    %v735 = vrot.slane %v707, %v734
    %v736 = vcombine.high %v714, %v714
    %v737 = vcombine.high %v721, %v721
    %v738 = vcombine.high %v728, %v728
    %v739 = vcombine.high %v735, %v735
    %v744 = vcombine.low %v593, %v595
    %v745 = vcombine.high %v593, %v595
    %v746 = vcombine.low %v664, %v666
    %v747 = vcombine.high %v664, %v666
    %v749 = vunpack.c.l.s4 1966171168
    %v750 = vunpack.c.0.s8 %v749
    %v751 = vlaneseq
    %v752 = vshrl.u32 %v751, 7
    %v753 = vsub.s32 %v750, %v752
    %v754 = vrot.slane %v744, %v753
    %v756 = vunpack.c.l.s4 1966171168
    %v757 = vunpack.c.0.s8 %v756
    %v758 = vlaneseq
    %v759 = vshrl.u32 %v758, 7
    %v760 = vsub.s32 %v757, %v759
    %v761 = vrot.slane %v745, %v760
    %v763 = vunpack.c.l.s4 1966171168
    %v764 = vunpack.c.0.s8 %v763
    %v765 = vlaneseq
    %v766 = vshrl.u32 %v765, 7
    %v767 = vsub.s32 %v764, %v766
    %v768 = vrot.slane %v746, %v767
    %v770 = vunpack.c.l.s4 1966171168
    %v771 = vunpack.c.0.s8 %v770
    %v772 = vlaneseq
    %v773 = vshrl.u32 %v772, 7
    %v774 = vsub.s32 %v771, %v773
    %v775 = vrot.slane %v747, %v774
    %v776 = vcombine.low %v754, %v768
    %v777 = vcombine.high %v754, %v768
    %v778 = vcombine.low %v761, %v775
    %v779 = vcombine.high %v761, %v775
    %v781 = vunpack.c.l.s4 1966171168
    %v782 = vunpack.c.0.s8 %v781
    %v783 = vlaneseq
    %v784 = vshrl.u32 %v783, 7
    %v785 = vsub.s32 %v782, %v784
    %v786 = vrot.slane %v776, %v785
    %v788 = vunpack.c.l.s4 1966171168
    %v789 = vunpack.c.0.s8 %v788
    %v790 = vlaneseq
    %v791 = vshrl.u32 %v790, 7
    %v792 = vsub.s32 %v789, %v791
    %v793 = vrot.slane %v778, %v792
    %v795 = vunpack.c.l.s4 1966171168
    %v796 = vunpack.c.0.s8 %v795
    %v797 = vlaneseq
    %v798 = vshrl.u32 %v797, 7
    %v799 = vsub.s32 %v796, %v798
    %v800 = vrot.slane %v777, %v799
    %v802 = vunpack.c.l.s4 1966171168
    %v803 = vunpack.c.0.s8 %v802
    %v804 = vlaneseq
    %v805 = vshrl.u32 %v804, 7
    %v806 = vsub.s32 %v803, %v805
    %v807 = vrot.slane %v779, %v806
    %v808 = vcombine.high %v786, %v786
    %v809 = vcombine.high %v793, %v793
    %v810 = vcombine.high %v800, %v800
    %v811 = vcombine.high %v807, %v807
    %v812 = vlaneseq
    %v813 = vshrl.u32 %v812, 7
    %v814 = vsub.s32 0, %v813
    %v815 = vrot.slane %v714, %v814
    %v816 = vlaneseq
    %v817 = vshrl.u32 %v816, 7
    %v818 = vsub.s32 1, %v817
    %v819 = vrot.slane %v714, %v818
    %v820 = vlaneseq
    %v821 = vshrl.u32 %v820, 7
    %v822 = vsub.s32 2, %v821
    %v823 = vrot.slane %v714, %v822
    %v824 = vlaneseq
    %v825 = vshrl.u32 %v824, 7
    %v826 = vsub.s32 3, %v825
    %v827 = vrot.slane %v714, %v826
    %v828 = vlaneseq
    %v829 = vshrl.u32 %v828, 7
    %v830 = vsub.s32 0, %v829
    %v831 = vrot.slane %v728, %v830
    %v832 = vlaneseq
    %v833 = vshrl.u32 %v832, 7
    %v834 = vsub.s32 1, %v833
    %v835 = vrot.slane %v728, %v834
    %v836 = vlaneseq
    %v837 = vshrl.u32 %v836, 7
    %v838 = vsub.s32 2, %v837
    %v839 = vrot.slane %v728, %v838
    %v840 = vlaneseq
    %v841 = vshrl.u32 %v840, 7
    %v842 = vsub.s32 3, %v841
    %v843 = vrot.slane %v728, %v842
    %v844 = vlaneseq
    %v845 = vshrl.u32 %v844, 7
    %v846 = vsub.s32 0, %v845
    %v847 = vrot.slane %v736, %v846
    %v848 = vlaneseq
    %v849 = vshrl.u32 %v848, 7
    %v850 = vsub.s32 1, %v849
    %v851 = vrot.slane %v736, %v850
    %v852 = vlaneseq
    %v853 = vshrl.u32 %v852, 7
    %v854 = vsub.s32 2, %v853
    %v855 = vrot.slane %v736, %v854
    %v856 = vlaneseq
    %v857 = vshrl.u32 %v856, 7
    %v858 = vsub.s32 3, %v857
    %v859 = vrot.slane %v736, %v858
    %v860 = vlaneseq
    %v861 = vshrl.u32 %v860, 7
    %v862 = vsub.s32 0, %v861
    %v863 = vrot.slane %v738, %v862
    %v864 = vlaneseq
    %v865 = vshrl.u32 %v864, 7
    %v866 = vsub.s32 1, %v865
    %v867 = vrot.slane %v738, %v866
    %v868 = vlaneseq
    %v869 = vshrl.u32 %v868, 7
    %v870 = vsub.s32 2, %v869
    %v871 = vrot.slane %v738, %v870
    %v872 = vlaneseq
    %v873 = vshrl.u32 %v872, 7
    %v874 = vsub.s32 3, %v873
    %v875 = vrot.slane %v738, %v874
    %v876 = vlaneseq
    %v877 = vshrl.u32 %v876, 7
    %v878 = vsub.s32 0, %v877
    %v879 = vrot.slane %v721, %v878
    %v880 = vlaneseq
    %v881 = vshrl.u32 %v880, 7
    %v882 = vsub.s32 1, %v881
    %v883 = vrot.slane %v721, %v882
    %v884 = vlaneseq
    %v885 = vshrl.u32 %v884, 7
    %v886 = vsub.s32 2, %v885
    %v887 = vrot.slane %v721, %v886
    %v888 = vlaneseq
    %v889 = vshrl.u32 %v888, 7
    %v890 = vsub.s32 3, %v889
    %v891 = vrot.slane %v721, %v890
    %v892 = vlaneseq
    %v893 = vshrl.u32 %v892, 7
    %v894 = vsub.s32 0, %v893
    %v895 = vrot.slane %v735, %v894
    %v896 = vlaneseq
    %v897 = vshrl.u32 %v896, 7
    %v898 = vsub.s32 1, %v897
    %v899 = vrot.slane %v735, %v898
    %v900 = vlaneseq
    %v901 = vshrl.u32 %v900, 7
    %v902 = vsub.s32 2, %v901
    %v903 = vrot.slane %v735, %v902
    %v904 = vlaneseq
    %v905 = vshrl.u32 %v904, 7
    %v906 = vsub.s32 3, %v905
    %v907 = vrot.slane %v735, %v906
    %v908 = vlaneseq
    %v909 = vshrl.u32 %v908, 7
    %v910 = vsub.s32 0, %v909
    %v911 = vrot.slane %v737, %v910
    %v912 = vlaneseq
    %v913 = vshrl.u32 %v912, 7
    %v914 = vsub.s32 1, %v913
    %v915 = vrot.slane %v737, %v914
    %v916 = vlaneseq
    %v917 = vshrl.u32 %v916, 7
    %v918 = vsub.s32 2, %v917
    %v919 = vrot.slane %v737, %v918
    %v920 = vlaneseq
    %v921 = vshrl.u32 %v920, 7
    %v922 = vsub.s32 3, %v921
    %v923 = vrot.slane %v737, %v922
    %v924 = vlaneseq
    %v925 = vshrl.u32 %v924, 7
    %v926 = vsub.s32 0, %v925
    %v927 = vrot.slane %v739, %v926
    %v928 = vlaneseq
    %v929 = vshrl.u32 %v928, 7
    %v930 = vsub.s32 1, %v929
    %v931 = vrot.slane %v739, %v930
    %v932 = vlaneseq
    %v933 = vshrl.u32 %v932, 7
    %v934 = vsub.s32 2, %v933
    %v935 = vrot.slane %v739, %v934
    %v936 = vlaneseq
    %v937 = vshrl.u32 %v936, 7
    %v938 = vsub.s32 3, %v937
    %v939 = vrot.slane %v739, %v938
    %v972 = vlaneseq
    %v973 = vshrl.u32 %v972, 7
    %v974 = vsub.s32 0, %v973
    %v975 = vrot.slane %v786, %v974
    %v976 = vlaneseq
    %v977 = vshrl.u32 %v976, 7
    %v978 = vsub.s32 1, %v977
    %v979 = vrot.slane %v786, %v978
    %v980 = vlaneseq
    %v981 = vshrl.u32 %v980, 7
    %v982 = vsub.s32 2, %v981
    %v983 = vrot.slane %v786, %v982
    %v984 = vlaneseq
    %v985 = vshrl.u32 %v984, 7
    %v986 = vsub.s32 3, %v985
    %v987 = vrot.slane %v786, %v986
    %v988 = vlaneseq
    %v989 = vshrl.u32 %v988, 7
    %v990 = vsub.s32 0, %v989
    %v991 = vrot.slane %v800, %v990
    %v992 = vlaneseq
    %v993 = vshrl.u32 %v992, 7
    %v994 = vsub.s32 1, %v993
    %v995 = vrot.slane %v800, %v994
    %v996 = vlaneseq
    %v997 = vshrl.u32 %v996, 7
    %v998 = vsub.s32 2, %v997
    %v999 = vrot.slane %v800, %v998
    %v1000 = vlaneseq
    %v1001 = vshrl.u32 %v1000, 7
    %v1002 = vsub.s32 3, %v1001
    %v1003 = vrot.slane %v800, %v1002
    %v1004 = vlaneseq
    %v1005 = vshrl.u32 %v1004, 7
    %v1006 = vsub.s32 0, %v1005
    %v1007 = vrot.slane %v808, %v1006
    %v1008 = vlaneseq
    %v1009 = vshrl.u32 %v1008, 7
    %v1010 = vsub.s32 1, %v1009
    %v1011 = vrot.slane %v808, %v1010
    %v1012 = vlaneseq
    %v1013 = vshrl.u32 %v1012, 7
    %v1014 = vsub.s32 2, %v1013
    %v1015 = vrot.slane %v808, %v1014
    %v1016 = vlaneseq
    %v1017 = vshrl.u32 %v1016, 7
    %v1018 = vsub.s32 3, %v1017
    %v1019 = vrot.slane %v808, %v1018
    %v1020 = vlaneseq
    %v1021 = vshrl.u32 %v1020, 7
    %v1022 = vsub.s32 0, %v1021
    %v1023 = vrot.slane %v810, %v1022
    %v1024 = vlaneseq
    %v1025 = vshrl.u32 %v1024, 7
    %v1026 = vsub.s32 1, %v1025
    %v1027 = vrot.slane %v810, %v1026
    %v1028 = vlaneseq
    %v1029 = vshrl.u32 %v1028, 7
    %v1030 = vsub.s32 2, %v1029
    %v1031 = vrot.slane %v810, %v1030
    %v1032 = vlaneseq
    %v1033 = vshrl.u32 %v1032, 7
    %v1034 = vsub.s32 3, %v1033
    %v1035 = vrot.slane %v810, %v1034
    %v1036 = vlaneseq
    %v1037 = vshrl.u32 %v1036, 7
    %v1038 = vsub.s32 0, %v1037
    %v1039 = vrot.slane %v793, %v1038
    %v1040 = vlaneseq
    %v1041 = vshrl.u32 %v1040, 7
    %v1042 = vsub.s32 1, %v1041
    %v1043 = vrot.slane %v793, %v1042
    %v1044 = vlaneseq
    %v1045 = vshrl.u32 %v1044, 7
    %v1046 = vsub.s32 2, %v1045
    %v1047 = vrot.slane %v793, %v1046
    %v1048 = vlaneseq
    %v1049 = vshrl.u32 %v1048, 7
    %v1050 = vsub.s32 3, %v1049
    %v1051 = vrot.slane %v793, %v1050
    %v1052 = vlaneseq
    %v1053 = vshrl.u32 %v1052, 7
    %v1054 = vsub.s32 0, %v1053
    %v1055 = vrot.slane %v807, %v1054
    %v1056 = vlaneseq
    %v1057 = vshrl.u32 %v1056, 7
    %v1058 = vsub.s32 1, %v1057
    %v1059 = vrot.slane %v807, %v1058
    %v1060 = vlaneseq
    %v1061 = vshrl.u32 %v1060, 7
    %v1062 = vsub.s32 2, %v1061
    %v1063 = vrot.slane %v807, %v1062
    %v1064 = vlaneseq
    %v1065 = vshrl.u32 %v1064, 7
    %v1066 = vsub.s32 3, %v1065
    %v1067 = vrot.slane %v807, %v1066
    %v1068 = vlaneseq
    %v1069 = vshrl.u32 %v1068, 7
    %v1070 = vsub.s32 0, %v1069
    %v1071 = vrot.slane %v809, %v1070
    %v1072 = vlaneseq
    %v1073 = vshrl.u32 %v1072, 7
    %v1074 = vsub.s32 1, %v1073
    %v1075 = vrot.slane %v809, %v1074
    %v1076 = vlaneseq
    %v1077 = vshrl.u32 %v1076, 7
    %v1078 = vsub.s32 2, %v1077
    %v1079 = vrot.slane %v809, %v1078
    %v1080 = vlaneseq
    %v1081 = vshrl.u32 %v1080, 7
    %v1082 = vsub.s32 3, %v1081
    %v1083 = vrot.slane %v809, %v1082
    %v1084 = vlaneseq
    %v1085 = vshrl.u32 %v1084, 7
    %v1086 = vsub.s32 0, %v1085
    %v1087 = vrot.slane %v811, %v1086
    %v1088 = vlaneseq
    %v1089 = vshrl.u32 %v1088, 7
    %v1090 = vsub.s32 1, %v1089
    %v1091 = vrot.slane %v811, %v1090
    %v1092 = vlaneseq
    %v1093 = vshrl.u32 %v1092, 7
    %v1094 = vsub.s32 2, %v1093
    %v1095 = vrot.slane %v811, %v1094
    %v1096 = vlaneseq
    %v1097 = vshrl.u32 %v1096, 7
    %v1098 = vsub.s32 3, %v1097
    %v1099 = vrot.slane %v811, %v1098
    %vm1132 = vcmask 1040384
    %v1133 = vsel %vm1132, %v815, %v975
    %v1134 = vsel %vm1132, %v819, %v979
    %v1135 = vsel %vm1132, %v823, %v983
    %v1136 = vsel %vm1132, %v827, %v987
    %v1137 = vsel %vm1132, %v831, %v991
    %v1138 = vsel %vm1132, %v835, %v995
    %v1139 = vsel %vm1132, %v839, %v999
    %v1140 = vsel %vm1132, %v843, %v1003
    %v1141 = vsel %vm1132, %v847, %v1007
    %v1142 = vsel %vm1132, %v851, %v1011
    %v1143 = vsel %vm1132, %v855, %v1015
    %v1144 = vsel %vm1132, %v859, %v1019
    %v1145 = vsel %vm1132, %v863, %v1023
    %v1146 = vsel %vm1132, %v867, %v1027
    %v1147 = vsel %vm1132, %v871, %v1031
    %v1148 = vsel %vm1132, %v875, %v1035
    %v1149 = vsel %vm1132, %v879, %v1039
    %v1150 = vsel %vm1132, %v883, %v1043
    %v1151 = vsel %vm1132, %v887, %v1047
    %v1152 = vsel %vm1132, %v891, %v1051
    %v1153 = vsel %vm1132, %v895, %v1055
    %v1154 = vsel %vm1132, %v899, %v1059
    %v1155 = vsel %vm1132, %v903, %v1063
    %v1156 = vsel %vm1132, %v907, %v1067
    %v1157 = vsel %vm1132, %v911, %v1071
    %v1158 = vsel %vm1132, %v915, %v1075
    %v1159 = vsel %vm1132, %v919, %v1079
    %v1160 = vsel %vm1132, %v923, %v1083
    %v1161 = vsel %vm1132, %v927, %v1087
    %v1162 = vsel %vm1132, %v931, %v1091
    %v1163 = vsel %vm1132, %v935, %v1095
    %v1164 = vsel %vm1132, %v939, %v1099
    %v1165 = vpack.c.bf16 %v1133, %v1133
    %v1166 = vpack.c.bf16 %v1134, %v1134
    %v1167 = vpack.c.bf16 %v1135, %v1135
    %v1168 = vpack.c.bf16 %v1136, %v1136
    %v1169 = vpack.c.bf16 %v1137, %v1137
    %v1170 = vpack.c.bf16 %v1138, %v1138
    %v1171 = vpack.c.bf16 %v1139, %v1139
    %v1172 = vpack.c.bf16 %v1140, %v1140
    %v1173 = vpack.c.bf16 %v1141, %v1141
    %v1174 = vpack.c.bf16 %v1142, %v1142
    %v1175 = vpack.c.bf16 %v1143, %v1143
    %v1176 = vpack.c.bf16 %v1144, %v1144
    %v1177 = vpack.c.bf16 %v1145, %v1145
    %v1178 = vpack.c.bf16 %v1146, %v1146
    %v1179 = vpack.c.bf16 %v1147, %v1147
    %v1180 = vpack.c.bf16 %v1148, %v1148
    %v1181 = vpack.c.bf16 %v1149, %v1149
    %v1182 = vpack.c.bf16 %v1150, %v1150
    %v1183 = vpack.c.bf16 %v1151, %v1151
    %v1184 = vpack.c.bf16 %v1152, %v1152
    %v1185 = vpack.c.bf16 %v1153, %v1153
    %v1186 = vpack.c.bf16 %v1154, %v1154
    %v1187 = vpack.c.bf16 %v1155, %v1155
    %v1188 = vpack.c.bf16 %v1156, %v1156
    %v1189 = vpack.c.bf16 %v1157, %v1157
    %v1190 = vpack.c.bf16 %v1158, %v1158
    %v1191 = vpack.c.bf16 %v1159, %v1159
    %v1192 = vpack.c.bf16 %v1160, %v1160
    %v1193 = vpack.c.bf16 %v1161, %v1161
    %v1194 = vpack.c.bf16 %v1162, %v1162
    %v1195 = vpack.c.bf16 %v1163, %v1163
    %v1196 = vpack.c.bf16 %v1164, %v1164
    %v1197 = vld [vmem:[#allocation4] sm:$0xff]
    %v1198 = vld [vmem:[#allocation4 + $0x8] sm:$0xff]
    %v1199 = vld [vmem:[#allocation4 + $0x10] sm:$0xff]
    %v1200 = vld [vmem:[#allocation4 + $0x18] sm:$0xff]
    %v1201 = vld [vmem:[#allocation4 + $0x20] sm:$0xff]
    %v1202 = vld [vmem:[#allocation4 + $0x28] sm:$0xff]
    %v1203 = vld [vmem:[#allocation4 + $0x30] sm:$0xff]
    %v1204 = vld [vmem:[#allocation4 + $0x38] sm:$0xff]
    %v1205 = vld [vmem:[#allocation4 + $0x40] sm:$0xff]
    %v1206 = vld [vmem:[#allocation4 + $0x48] sm:$0xff]
    %v1207 = vld [vmem:[#allocation4 + $0x50] sm:$0xff]
    %v1208 = vld [vmem:[#allocation4 + $0x58] sm:$0xff]
    %v1209 = vld [vmem:[#allocation4 + $0x60] sm:$0xff]
    %v1210 = vld [vmem:[#allocation4 + $0x68] sm:$0xff]
    %v1211 = vld [vmem:[#allocation4 + $0x70] sm:$0xff]
    %v1212 = vld [vmem:[#allocation4 + $0x78] sm:$0xff]
    %v1213 = vld [vmem:[#allocation4 + $0x80] sm:$0xff]
    %v1214 = vld [vmem:[#allocation4 + $0x88] sm:$0xff]
    %v1215 = vld [vmem:[#allocation4 + $0x90] sm:$0xff]
    %v1216 = vld [vmem:[#allocation4 + $0x98] sm:$0xff]
    %v1217 = vld [vmem:[#allocation4 + $0xa0] sm:$0xff]
    %v1218 = vld [vmem:[#allocation4 + $0xa8] sm:$0xff]
    %v1219 = vld [vmem:[#allocation4 + $0xb0] sm:$0xff]
    %v1220 = vld [vmem:[#allocation4 + $0xb8] sm:$0xff]
    %v1221 = vld [vmem:[#allocation4 + $0xc0] sm:$0xff]
    %v1222 = vld [vmem:[#allocation4 + $0xc8] sm:$0xff]
    %v1223 = vld [vmem:[#allocation4 + $0xd0] sm:$0xff]
    %v1224 = vld [vmem:[#allocation4 + $0xd8] sm:$0xff]
    %v1225 = vld [vmem:[#allocation4 + $0xe0] sm:$0xff]
    %v1226 = vld [vmem:[#allocation4 + $0xe8] sm:$0xff]
    %v1227 = vld [vmem:[#allocation4 + $0xf0] sm:$0xff]
    %v1228 = vld [vmem:[#allocation4 + $0xf8] sm:$0xff]
    %v1229 = vld [vmem:[#allocation4 + $0x100] sm:$0xff]
    %v1230 = vld [vmem:[#allocation4 + $0x108] sm:$0xff]
    %v1231 = vld [vmem:[#allocation4 + $0x110] sm:$0xff]
    %v1232 = vld [vmem:[#allocation4 + $0x118] sm:$0xff]
    %v1233 = vld [vmem:[#allocation4 + $0x120] sm:$0xff]
    %v1234 = vld [vmem:[#allocation4 + $0x128] sm:$0xff]
    %v1235 = vld [vmem:[#allocation4 + $0x130] sm:$0xff]
    %v1236 = vld [vmem:[#allocation4 + $0x138] sm:$0xff]
    %v1237 = vld [vmem:[#allocation4 + $0x140] sm:$0xff]
    %v1238 = vld [vmem:[#allocation4 + $0x148] sm:$0xff]
    %v1239 = vld [vmem:[#allocation4 + $0x150] sm:$0xff]
    %v1240 = vld [vmem:[#allocation4 + $0x158] sm:$0xff]
    %v1241 = vld [vmem:[#allocation4 + $0x160] sm:$0xff]
    %v1242 = vld [vmem:[#allocation4 + $0x168] sm:$0xff]
    %v1243 = vld [vmem:[#allocation4 + $0x170] sm:$0xff]
    %v1244 = vld [vmem:[#allocation4 + $0x178] sm:$0xff]
    %v1245 = vld [vmem:[#allocation4 + $0x180] sm:$0xff]
    %v1246 = vld [vmem:[#allocation4 + $0x188] sm:$0xff]
    %v1247 = vld [vmem:[#allocation4 + $0x190] sm:$0xff]
    %v1248 = vld [vmem:[#allocation4 + $0x198] sm:$0xff]
    %v1249 = vld [vmem:[#allocation4 + $0x1a0] sm:$0xff]
    %v1250 = vld [vmem:[#allocation4 + $0x1a8] sm:$0xff]
    %v1251 = vld [vmem:[#allocation4 + $0x1b0] sm:$0xff]
    %v1252 = vld [vmem:[#allocation4 + $0x1b8] sm:$0xff]
    %v1253 = vld [vmem:[#allocation4 + $0x1c0] sm:$0xff]
    %v1254 = vld [vmem:[#allocation4 + $0x1c8] sm:$0xff]
    %v1255 = vld [vmem:[#allocation4 + $0x1d0] sm:$0xff]
    %v1256 = vld [vmem:[#allocation4 + $0x1d8] sm:$0xff]
    %v1257 = vld [vmem:[#allocation4 + $0x1e0] sm:$0xff]
    %v1258 = vld [vmem:[#allocation4 + $0x1e8] sm:$0xff]
    %v1259 = vld [vmem:[#allocation4 + $0x1f0] sm:$0xff]
    %v1260 = vld [vmem:[#allocation4 + $0x1f8] sm:$0xff]
    %v1261 = vld [vmem:[#allocation4 + $0x200] sm:$0xff]
    %v1262 = vld [vmem:[#allocation4 + $0x208] sm:$0xff]
    %v1263 = vld [vmem:[#allocation4 + $0x210] sm:$0xff]
    %v1264 = vld [vmem:[#allocation4 + $0x218] sm:$0xff]
    %v1265 = vld [vmem:[#allocation4 + $0x220] sm:$0xff]
    %v1266 = vld [vmem:[#allocation4 + $0x228] sm:$0xff]
    %v1267 = vld [vmem:[#allocation4 + $0x230] sm:$0xff]
    %v1268 = vld [vmem:[#allocation4 + $0x238] sm:$0xff]
    %v1269 = vld [vmem:[#allocation4 + $0x240] sm:$0xff]
    %v1270 = vld [vmem:[#allocation4 + $0x248] sm:$0xff]
    %v1271 = vld [vmem:[#allocation4 + $0x250] sm:$0xff]
    %v1272 = vld [vmem:[#allocation4 + $0x258] sm:$0xff]
    %v1273 = vld [vmem:[#allocation4 + $0x260] sm:$0xff]
    %v1274 = vld [vmem:[#allocation4 + $0x268] sm:$0xff]
    %v1275 = vld [vmem:[#allocation4 + $0x270] sm:$0xff]
    %v1276 = vld [vmem:[#allocation4 + $0x278] sm:$0xff]
    %v1277 = vld [vmem:[#allocation4 + $0x280] sm:$0xff]
    %v1278 = vld [vmem:[#allocation4 + $0x288] sm:$0xff]
    %v1279 = vld [vmem:[#allocation4 + $0x290] sm:$0xff]
    %v1280 = vld [vmem:[#allocation4 + $0x298] sm:$0xff]
    %v1281 = vld [vmem:[#allocation4 + $0x2a0] sm:$0xff]
    %v1282 = vld [vmem:[#allocation4 + $0x2a8] sm:$0xff]
    %v1283 = vld [vmem:[#allocation4 + $0x2b0] sm:$0xff]
    %v1284 = vld [vmem:[#allocation4 + $0x2b8] sm:$0xff]
    %v1285 = vld [vmem:[#allocation4 + $0x2c0] sm:$0xff]
    %v1286 = vld [vmem:[#allocation4 + $0x2c8] sm:$0xff]
    %v1287 = vld [vmem:[#allocation4 + $0x2d0] sm:$0xff]
    %v1288 = vld [vmem:[#allocation4 + $0x2d8] sm:$0xff]
    %v1289 = vld [vmem:[#allocation4 + $0x2e0] sm:$0xff]
    %v1290 = vld [vmem:[#allocation4 + $0x2e8] sm:$0xff]
    %v1291 = vld [vmem:[#allocation4 + $0x2f0] sm:$0xff]
    %v1292 = vld [vmem:[#allocation4 + $0x2f8] sm:$0xff]
    %v1293 = vld [vmem:[#allocation4 + $0x300] sm:$0xff]
    %v1294 = vld [vmem:[#allocation4 + $0x308] sm:$0xff]
    %v1295 = vld [vmem:[#allocation4 + $0x310] sm:$0xff]
    %v1296 = vld [vmem:[#allocation4 + $0x318] sm:$0xff]
    %v1297 = vld [vmem:[#allocation4 + $0x320] sm:$0xff]
    %v1298 = vld [vmem:[#allocation4 + $0x328] sm:$0xff]
    %v1299 = vld [vmem:[#allocation4 + $0x330] sm:$0xff]
    %v1300 = vld [vmem:[#allocation4 + $0x338] sm:$0xff]
    %v1301 = vld [vmem:[#allocation4 + $0x340] sm:$0xff]
    %v1302 = vld [vmem:[#allocation4 + $0x348] sm:$0xff]
    %v1303 = vld [vmem:[#allocation4 + $0x350] sm:$0xff]
    %v1304 = vld [vmem:[#allocation4 + $0x358] sm:$0xff]
    %v1305 = vld [vmem:[#allocation4 + $0x360] sm:$0xff]
    %v1306 = vld [vmem:[#allocation4 + $0x368] sm:$0xff]
    %v1307 = vld [vmem:[#allocation4 + $0x370] sm:$0xff]
    %v1308 = vld [vmem:[#allocation4 + $0x378] sm:$0xff]
    %v1309 = vld [vmem:[#allocation4 + $0x380] sm:$0xff]
    %v1310 = vld [vmem:[#allocation4 + $0x388] sm:$0xff]
    %v1311 = vld [vmem:[#allocation4 + $0x390] sm:$0xff]
    %v1312 = vld [vmem:[#allocation4 + $0x398] sm:$0xff]
    %v1313 = vld [vmem:[#allocation4 + $0x3a0] sm:$0xff]
    %v1314 = vld [vmem:[#allocation4 + $0x3a8] sm:$0xff]
    %v1315 = vld [vmem:[#allocation4 + $0x3b0] sm:$0xff]
    %v1316 = vld [vmem:[#allocation4 + $0x3b8] sm:$0xff]
    %v1317 = vld [vmem:[#allocation4 + $0x3c0] sm:$0xff]
    %v1318 = vld [vmem:[#allocation4 + $0x3c8] sm:$0xff]
    %v1319 = vld [vmem:[#allocation4 + $0x3d0] sm:$0xff]
    %v1320 = vld [vmem:[#allocation4 + $0x3d8] sm:$0xff]
    %v1321 = vld [vmem:[#allocation4 + $0x3e0] sm:$0xff]
    %v1322 = vld [vmem:[#allocation4 + $0x3e8] sm:$0xff]
    %v1323 = vld [vmem:[#allocation4 + $0x3f0] sm:$0xff]
    %v1324 = vld [vmem:[#allocation4 + $0x3f8] sm:$0xff]
    %v1325 = vld [vmem:[#allocation4 + $0x400] sm:$0xff]
    %v1326 = vld [vmem:[#allocation4 + $0x408] sm:$0xff]
    %v1327 = vld [vmem:[#allocation4 + $0x410] sm:$0xff]
    %v1328 = vld [vmem:[#allocation4 + $0x418] sm:$0xff]
    %v1329 = vld [vmem:[#allocation4 + $0x420] sm:$0xff]
    %v1330 = vld [vmem:[#allocation4 + $0x428] sm:$0xff]
    %v1331 = vld [vmem:[#allocation4 + $0x430] sm:$0xff]
    %v1332 = vld [vmem:[#allocation4 + $0x438] sm:$0xff]
    %v1333 = vld [vmem:[#allocation4 + $0x440] sm:$0xff]
    %v1334 = vld [vmem:[#allocation4 + $0x448] sm:$0xff]
    %v1335 = vld [vmem:[#allocation4 + $0x450] sm:$0xff]
    %v1336 = vld [vmem:[#allocation4 + $0x458] sm:$0xff]
    %v1337 = vld [vmem:[#allocation4 + $0x460] sm:$0xff]
    %v1338 = vld [vmem:[#allocation4 + $0x468] sm:$0xff]
    %v1339 = vld [vmem:[#allocation4 + $0x470] sm:$0xff]
    %v1340 = vld [vmem:[#allocation4 + $0x478] sm:$0xff]
    %v1341 = vld [vmem:[#allocation4 + $0x480] sm:$0xff]
    %v1342 = vld [vmem:[#allocation4 + $0x488] sm:$0xff]
    %v1343 = vld [vmem:[#allocation4 + $0x490] sm:$0xff]
    %v1344 = vld [vmem:[#allocation4 + $0x498] sm:$0xff]
    %v1345 = vld [vmem:[#allocation4 + $0x4a0] sm:$0xff]
    %v1346 = vld [vmem:[#allocation4 + $0x4a8] sm:$0xff]
    %v1347 = vld [vmem:[#allocation4 + $0x4b0] sm:$0xff]
    %v1348 = vld [vmem:[#allocation4 + $0x4b8] sm:$0xff]
    %v1349 = vld [vmem:[#allocation4 + $0x4c0] sm:$0xff]
    %v1350 = vld [vmem:[#allocation4 + $0x4c8] sm:$0xff]
    %v1351 = vld [vmem:[#allocation4 + $0x4d0] sm:$0xff]
    %v1352 = vld [vmem:[#allocation4 + $0x4d8] sm:$0xff]
    %v1353 = vld [vmem:[#allocation4 + $0x4e0] sm:$0xff]
    %v1354 = vld [vmem:[#allocation4 + $0x4e8] sm:$0xff]
    %v1355 = vld [vmem:[#allocation4 + $0x4f0] sm:$0xff]
    %v1356 = vld [vmem:[#allocation4 + $0x4f8] sm:$0xff]
    %v1357 = vld [vmem:[#allocation4 + $0x500] sm:$0xff]
    %v1358 = vld [vmem:[#allocation4 + $0x508] sm:$0xff]
    %v1359 = vld [vmem:[#allocation4 + $0x510] sm:$0xff]
    %v1360 = vld [vmem:[#allocation4 + $0x518] sm:$0xff]
    %v1361 = vld [vmem:[#allocation4 + $0x520] sm:$0xff]
    %v1362 = vld [vmem:[#allocation4 + $0x528] sm:$0xff]
    %v1363 = vld [vmem:[#allocation4 + $0x530] sm:$0xff]
    %v1364 = vld [vmem:[#allocation4 + $0x538] sm:$0xff]
    %v1365 = vld [vmem:[#allocation4 + $0x540] sm:$0xff]
    %v1366 = vld [vmem:[#allocation4 + $0x548] sm:$0xff]
    %v1367 = vld [vmem:[#allocation4 + $0x550] sm:$0xff]
    %v1368 = vld [vmem:[#allocation4 + $0x558] sm:$0xff]
    %v1369 = vld [vmem:[#allocation4 + $0x560] sm:$0xff]
    %v1370 = vld [vmem:[#allocation4 + $0x568] sm:$0xff]
    %v1371 = vld [vmem:[#allocation4 + $0x570] sm:$0xff]
    %v1372 = vld [vmem:[#allocation4 + $0x578] sm:$0xff]
    %v1373 = vld [vmem:[#allocation4 + $0x580] sm:$0xff]
    %v1374 = vld [vmem:[#allocation4 + $0x588] sm:$0xff]
    %v1375 = vld [vmem:[#allocation4 + $0x590] sm:$0xff]
    %v1376 = vld [vmem:[#allocation4 + $0x598] sm:$0xff]
    %v1377 = vld [vmem:[#allocation4 + $0x5a0] sm:$0xff]
    %v1378 = vld [vmem:[#allocation4 + $0x5a8] sm:$0xff]
    %v1379 = vld [vmem:[#allocation4 + $0x5b0] sm:$0xff]
    %v1380 = vld [vmem:[#allocation4 + $0x5b8] sm:$0xff]
    %v1381 = vld [vmem:[#allocation4 + $0x5c0] sm:$0xff]
    %v1382 = vld [vmem:[#allocation4 + $0x5c8] sm:$0xff]
    %v1383 = vld [vmem:[#allocation4 + $0x5d0] sm:$0xff]
    %v1384 = vld [vmem:[#allocation4 + $0x5d8] sm:$0xff]
    %v1385 = vld [vmem:[#allocation4 + $0x5e0] sm:$0xff]
    %v1386 = vld [vmem:[#allocation4 + $0x5e8] sm:$0xff]
    %v1387 = vld [vmem:[#allocation4 + $0x5f0] sm:$0xff]
    %v1388 = vld [vmem:[#allocation4 + $0x5f8] sm:$0xff]
    %v1389 = vld [vmem:[#allocation4 + $0x600] sm:$0xff]
    %v1390 = vld [vmem:[#allocation4 + $0x608] sm:$0xff]
    %v1391 = vld [vmem:[#allocation4 + $0x610] sm:$0xff]
    %v1392 = vld [vmem:[#allocation4 + $0x618] sm:$0xff]
    %v1393 = vld [vmem:[#allocation4 + $0x620] sm:$0xff]
    %v1394 = vld [vmem:[#allocation4 + $0x628] sm:$0xff]
    %v1395 = vld [vmem:[#allocation4 + $0x630] sm:$0xff]
    %v1396 = vld [vmem:[#allocation4 + $0x638] sm:$0xff]
    %v1397 = vld [vmem:[#allocation4 + $0x640] sm:$0xff]
    %v1398 = vld [vmem:[#allocation4 + $0x648] sm:$0xff]
    %v1399 = vld [vmem:[#allocation4 + $0x650] sm:$0xff]
    %v1400 = vld [vmem:[#allocation4 + $0x658] sm:$0xff]
    %v1401 = vld [vmem:[#allocation4 + $0x660] sm:$0xff]
    %v1402 = vld [vmem:[#allocation4 + $0x668] sm:$0xff]
    %v1403 = vld [vmem:[#allocation4 + $0x670] sm:$0xff]
    %v1404 = vld [vmem:[#allocation4 + $0x678] sm:$0xff]
    %v1405 = vld [vmem:[#allocation4 + $0x680] sm:$0xff]
    %v1406 = vld [vmem:[#allocation4 + $0x688] sm:$0xff]
    %v1407 = vld [vmem:[#allocation4 + $0x690] sm:$0xff]
    %v1408 = vld [vmem:[#allocation4 + $0x698] sm:$0xff]
    %v1409 = vld [vmem:[#allocation4 + $0x6a0] sm:$0xff]
    %v1410 = vld [vmem:[#allocation4 + $0x6a8] sm:$0xff]
    %v1411 = vld [vmem:[#allocation4 + $0x6b0] sm:$0xff]
    %v1412 = vld [vmem:[#allocation4 + $0x6b8] sm:$0xff]
    %v1413 = vld [vmem:[#allocation4 + $0x6c0] sm:$0xff]
    %v1414 = vld [vmem:[#allocation4 + $0x6c8] sm:$0xff]
    %v1415 = vld [vmem:[#allocation4 + $0x6d0] sm:$0xff]
    %v1416 = vld [vmem:[#allocation4 + $0x6d8] sm:$0xff]
    %v1417 = vld [vmem:[#allocation4 + $0x6e0] sm:$0xff]
    %v1418 = vld [vmem:[#allocation4 + $0x6e8] sm:$0xff]
    %v1419 = vld [vmem:[#allocation4 + $0x6f0] sm:$0xff]
    %v1420 = vld [vmem:[#allocation4 + $0x6f8] sm:$0xff]
    %v1421 = vld [vmem:[#allocation4 + $0x700] sm:$0xff]
    %v1422 = vld [vmem:[#allocation4 + $0x708] sm:$0xff]
    %v1423 = vld [vmem:[#allocation4 + $0x710] sm:$0xff]
    %v1424 = vld [vmem:[#allocation4 + $0x718] sm:$0xff]
    %v1425 = vld [vmem:[#allocation4 + $0x720] sm:$0xff]
    %v1426 = vld [vmem:[#allocation4 + $0x728] sm:$0xff]
    %v1427 = vld [vmem:[#allocation4 + $0x730] sm:$0xff]
    %v1428 = vld [vmem:[#allocation4 + $0x738] sm:$0xff]
    %v1429 = vld [vmem:[#allocation4 + $0x740] sm:$0xff]
    %v1430 = vld [vmem:[#allocation4 + $0x748] sm:$0xff]
    %v1431 = vld [vmem:[#allocation4 + $0x750] sm:$0xff]
    %v1432 = vld [vmem:[#allocation4 + $0x758] sm:$0xff]
    %v1433 = vld [vmem:[#allocation4 + $0x760] sm:$0xff]
    %v1434 = vld [vmem:[#allocation4 + $0x768] sm:$0xff]
    %v1435 = vld [vmem:[#allocation4 + $0x770] sm:$0xff]
    %v1436 = vld [vmem:[#allocation4 + $0x778] sm:$0xff]
    %v1437 = vld [vmem:[#allocation4 + $0x780] sm:$0xff]
    %v1438 = vld [vmem:[#allocation4 + $0x788] sm:$0xff]
    %v1439 = vld [vmem:[#allocation4 + $0x790] sm:$0xff]
    %v1440 = vld [vmem:[#allocation4 + $0x798] sm:$0xff]
    %v1441 = vld [vmem:[#allocation4 + $0x7a0] sm:$0xff]
    %v1442 = vld [vmem:[#allocation4 + $0x7a8] sm:$0xff]
    %v1443 = vld [vmem:[#allocation4 + $0x7b0] sm:$0xff]
    %v1444 = vld [vmem:[#allocation4 + $0x7b8] sm:$0xff]
    %v1445 = vld [vmem:[#allocation4 + $0x7c0] sm:$0xff]
    %v1446 = vld [vmem:[#allocation4 + $0x7c8] sm:$0xff]
    %v1447 = vld [vmem:[#allocation4 + $0x7d0] sm:$0xff]
    %v1448 = vld [vmem:[#allocation4 + $0x7d8] sm:$0xff]
    %v1449 = vld [vmem:[#allocation4 + $0x7e0] sm:$0xff]
    %v1450 = vld [vmem:[#allocation4 + $0x7e8] sm:$0xff]
    %v1451 = vld [vmem:[#allocation4 + $0x7f0] sm:$0xff]
    %v1452 = vld [vmem:[#allocation4 + $0x7f8] sm:$0xff]
    %v1453 = vld [vmem:[#allocation4 + $0x800] sm:$0xff]
    %v1454 = vld [vmem:[#allocation4 + $0x808] sm:$0xff]
    %v1455 = vld [vmem:[#allocation4 + $0x810] sm:$0xff]
    %v1456 = vld [vmem:[#allocation4 + $0x818] sm:$0xff]
    %v1457 = vld [vmem:[#allocation4 + $0x820] sm:$0xff]
    %v1458 = vld [vmem:[#allocation4 + $0x828] sm:$0xff]
    %v1459 = vld [vmem:[#allocation4 + $0x830] sm:$0xff]
    %v1460 = vld [vmem:[#allocation4 + $0x838] sm:$0xff]
    %v1461 = vld [vmem:[#allocation4 + $0x840] sm:$0xff]
    %v1462 = vld [vmem:[#allocation4 + $0x848] sm:$0xff]
    %v1463 = vld [vmem:[#allocation4 + $0x850] sm:$0xff]
    %v1464 = vld [vmem:[#allocation4 + $0x858] sm:$0xff]
    %v1465 = vld [vmem:[#allocation4 + $0x860] sm:$0xff]
    %v1466 = vld [vmem:[#allocation4 + $0x868] sm:$0xff]
    %v1467 = vld [vmem:[#allocation4 + $0x870] sm:$0xff]
    %v1468 = vld [vmem:[#allocation4 + $0x878] sm:$0xff]
    %v1469 = vld [vmem:[#allocation4 + $0x880] sm:$0xff]
    %v1470 = vld [vmem:[#allocation4 + $0x888] sm:$0xff]
    %v1471 = vld [vmem:[#allocation4 + $0x890] sm:$0xff]
    %v1472 = vld [vmem:[#allocation4 + $0x898] sm:$0xff]
    %v1473 = vld [vmem:[#allocation4 + $0x8a0] sm:$0xff]
    %v1474 = vld [vmem:[#allocation4 + $0x8a8] sm:$0xff]
    %v1475 = vld [vmem:[#allocation4 + $0x8b0] sm:$0xff]
    %v1476 = vld [vmem:[#allocation4 + $0x8b8] sm:$0xff]
    %v1477 = vld [vmem:[#allocation4 + $0x8c0] sm:$0xff]
    %v1478 = vld [vmem:[#allocation4 + $0x8c8] sm:$0xff]
    %v1479 = vld [vmem:[#allocation4 + $0x8d0] sm:$0xff]
    %v1480 = vld [vmem:[#allocation4 + $0x8d8] sm:$0xff]
    %v1481 = vld [vmem:[#allocation4 + $0x8e0] sm:$0xff]
    %v1482 = vld [vmem:[#allocation4 + $0x8e8] sm:$0xff]
    %v1483 = vld [vmem:[#allocation4 + $0x8f0] sm:$0xff]
    %v1484 = vld [vmem:[#allocation4 + $0x8f8] sm:$0xff]
    %v1485 = vld [vmem:[#allocation4 + $0x900] sm:$0xff]
    %v1486 = vld [vmem:[#allocation4 + $0x908] sm:$0xff]
    %v1487 = vld [vmem:[#allocation4 + $0x910] sm:$0xff]
    %v1488 = vld [vmem:[#allocation4 + $0x918] sm:$0xff]
    %v1489 = vld [vmem:[#allocation4 + $0x920] sm:$0xff]
    %v1490 = vld [vmem:[#allocation4 + $0x928] sm:$0xff]
    %v1491 = vld [vmem:[#allocation4 + $0x930] sm:$0xff]
    %v1492 = vld [vmem:[#allocation4 + $0x938] sm:$0xff]
    %v1493 = vld [vmem:[#allocation4 + $0x940] sm:$0xff]
    %v1494 = vld [vmem:[#allocation4 + $0x948] sm:$0xff]
    %v1495 = vld [vmem:[#allocation4 + $0x950] sm:$0xff]
    %v1496 = vld [vmem:[#allocation4 + $0x958] sm:$0xff]
    %v1497 = vld [vmem:[#allocation4 + $0x960] sm:$0xff]
    %v1498 = vld [vmem:[#allocation4 + $0x968] sm:$0xff]
    %v1499 = vld [vmem:[#allocation4 + $0x970] sm:$0xff]
    %v1500 = vld [vmem:[#allocation4 + $0x978] sm:$0xff]
    %v1501 = vld [vmem:[#allocation4 + $0x980] sm:$0xff]
    %v1502 = vld [vmem:[#allocation4 + $0x988] sm:$0xff]
    %v1503 = vld [vmem:[#allocation4 + $0x990] sm:$0xff]
    %v1504 = vld [vmem:[#allocation4 + $0x998] sm:$0xff]
    %v1505 = vld [vmem:[#allocation4 + $0x9a0] sm:$0xff]
    %v1506 = vld [vmem:[#allocation4 + $0x9a8] sm:$0xff]
    %v1507 = vld [vmem:[#allocation4 + $0x9b0] sm:$0xff]
    %v1508 = vld [vmem:[#allocation4 + $0x9b8] sm:$0xff]
    %v1509 = vld [vmem:[#allocation4 + $0x9c0] sm:$0xff]
    %v1510 = vld [vmem:[#allocation4 + $0x9c8] sm:$0xff]
    %v1511 = vld [vmem:[#allocation4 + $0x9d0] sm:$0xff]
    %v1512 = vld [vmem:[#allocation4 + $0x9d8] sm:$0xff]
    %v1513 = vld [vmem:[#allocation4 + $0x9e0] sm:$0xff]
    %v1514 = vld [vmem:[#allocation4 + $0x9e8] sm:$0xff]
    %v1515 = vld [vmem:[#allocation4 + $0x9f0] sm:$0xff]
    %v1516 = vld [vmem:[#allocation4 + $0x9f8] sm:$0xff]
    %v1517 = vld [vmem:[#allocation4 + $0xa00] sm:$0xff]
    %v1518 = vld [vmem:[#allocation4 + $0xa08] sm:$0xff]
    %v1519 = vld [vmem:[#allocation4 + $0xa10] sm:$0xff]
    %v1520 = vld [vmem:[#allocation4 + $0xa18] sm:$0xff]
    %v1521 = vld [vmem:[#allocation4 + $0xa20] sm:$0xff]
    %v1522 = vld [vmem:[#allocation4 + $0xa28] sm:$0xff]
    %v1523 = vld [vmem:[#allocation4 + $0xa30] sm:$0xff]
    %v1524 = vld [vmem:[#allocation4 + $0xa38] sm:$0xff]
    %v1525 = vld [vmem:[#allocation4 + $0xa40] sm:$0xff]
    %v1526 = vld [vmem:[#allocation4 + $0xa48] sm:$0xff]
    %v1527 = vld [vmem:[#allocation4 + $0xa50] sm:$0xff]
    %v1528 = vld [vmem:[#allocation4 + $0xa58] sm:$0xff]
    %v1529 = vld [vmem:[#allocation4 + $0xa60] sm:$0xff]
    %v1530 = vld [vmem:[#allocation4 + $0xa68] sm:$0xff]
    %v1531 = vld [vmem:[#allocation4 + $0xa70] sm:$0xff]
    %v1532 = vld [vmem:[#allocation4 + $0xa78] sm:$0xff]
    %v1533 = vld [vmem:[#allocation4 + $0xa80] sm:$0xff]
    %v1534 = vld [vmem:[#allocation4 + $0xa88] sm:$0xff]
    %v1535 = vld [vmem:[#allocation4 + $0xa90] sm:$0xff]
    %v1536 = vld [vmem:[#allocation4 + $0xa98] sm:$0xff]
    %v1537 = vld [vmem:[#allocation4 + $0xaa0] sm:$0xff]
    %v1538 = vld [vmem:[#allocation4 + $0xaa8] sm:$0xff]
    %v1539 = vld [vmem:[#allocation4 + $0xab0] sm:$0xff]
    %v1540 = vld [vmem:[#allocation4 + $0xab8] sm:$0xff]
    %v1541 = vld [vmem:[#allocation4 + $0xac0] sm:$0xff]
    %v1542 = vld [vmem:[#allocation4 + $0xac8] sm:$0xff]
    %v1543 = vld [vmem:[#allocation4 + $0xad0] sm:$0xff]
    %v1544 = vld [vmem:[#allocation4 + $0xad8] sm:$0xff]
    %v1545 = vld [vmem:[#allocation4 + $0xae0] sm:$0xff]
    %v1546 = vld [vmem:[#allocation4 + $0xae8] sm:$0xff]
    %v1547 = vld [vmem:[#allocation4 + $0xaf0] sm:$0xff]
    %v1548 = vld [vmem:[#allocation4 + $0xaf8] sm:$0xff]
    %v1549 = vld [vmem:[#allocation4 + $0xb00] sm:$0xff]
    %v1550 = vld [vmem:[#allocation4 + $0xb08] sm:$0xff]
    %v1551 = vld [vmem:[#allocation4 + $0xb10] sm:$0xff]
    %v1552 = vld [vmem:[#allocation4 + $0xb18] sm:$0xff]
    %v1553 = vld [vmem:[#allocation4 + $0xb20] sm:$0xff]
    %v1554 = vld [vmem:[#allocation4 + $0xb28] sm:$0xff]
    %v1555 = vld [vmem:[#allocation4 + $0xb30] sm:$0xff]
    %v1556 = vld [vmem:[#allocation4 + $0xb38] sm:$0xff]
    %v1557 = vld [vmem:[#allocation4 + $0xb40] sm:$0xff]
    %v1558 = vld [vmem:[#allocation4 + $0xb48] sm:$0xff]
    %v1559 = vld [vmem:[#allocation4 + $0xb50] sm:$0xff]
    %v1560 = vld [vmem:[#allocation4 + $0xb58] sm:$0xff]
    %v1561 = vld [vmem:[#allocation4 + $0xb60] sm:$0xff]
    %v1562 = vld [vmem:[#allocation4 + $0xb68] sm:$0xff]
    %v1563 = vld [vmem:[#allocation4 + $0xb70] sm:$0xff]
    %v1564 = vld [vmem:[#allocation4 + $0xb78] sm:$0xff]
    %v1565 = vld [vmem:[#allocation4 + $0xb80] sm:$0xff]
    %v1566 = vld [vmem:[#allocation4 + $0xb88] sm:$0xff]
    %v1567 = vld [vmem:[#allocation4 + $0xb90] sm:$0xff]
    %v1568 = vld [vmem:[#allocation4 + $0xb98] sm:$0xff]
    %v1569 = vld [vmem:[#allocation4 + $0xba0] sm:$0xff]
    %v1570 = vld [vmem:[#allocation4 + $0xba8] sm:$0xff]
    %v1571 = vld [vmem:[#allocation4 + $0xbb0] sm:$0xff]
    %v1572 = vld [vmem:[#allocation4 + $0xbb8] sm:$0xff]
    %v1573 = vld [vmem:[#allocation4 + $0xbc0] sm:$0xff]
    %v1574 = vld [vmem:[#allocation4 + $0xbc8] sm:$0xff]
    %v1575 = vld [vmem:[#allocation4 + $0xbd0] sm:$0xff]
    %v1576 = vld [vmem:[#allocation4 + $0xbd8] sm:$0xff]
    %v1577 = vld [vmem:[#allocation4 + $0xbe0] sm:$0xff]
    %v1578 = vld [vmem:[#allocation4 + $0xbe8] sm:$0xff]
    %v1579 = vld [vmem:[#allocation4 + $0xbf0] sm:$0xff]
    %v1580 = vld [vmem:[#allocation4 + $0xbf8] sm:$0xff]
    %v1581 = vld [vmem:[#allocation4 + $0xc00] sm:$0xff]
    %v1582 = vld [vmem:[#allocation4 + $0xc08] sm:$0xff]
    %v1583 = vld [vmem:[#allocation4 + $0xc10] sm:$0xff]
    %v1584 = vld [vmem:[#allocation4 + $0xc18] sm:$0xff]
    %v1585 = vld [vmem:[#allocation4 + $0xc20] sm:$0xff]
    %v1586 = vld [vmem:[#allocation4 + $0xc28] sm:$0xff]
    %v1587 = vld [vmem:[#allocation4 + $0xc30] sm:$0xff]
    %v1588 = vld [vmem:[#allocation4 + $0xc38] sm:$0xff]
    %v1589 = vld [vmem:[#allocation4 + $0xc40] sm:$0xff]
    %v1590 = vld [vmem:[#allocation4 + $0xc48] sm:$0xff]
    %v1591 = vld [vmem:[#allocation4 + $0xc50] sm:$0xff]
    %v1592 = vld [vmem:[#allocation4 + $0xc58] sm:$0xff]
    %v1593 = vld [vmem:[#allocation4 + $0xc60] sm:$0xff]
    %v1594 = vld [vmem:[#allocation4 + $0xc68] sm:$0xff]
    %v1595 = vld [vmem:[#allocation4 + $0xc70] sm:$0xff]
    %v1596 = vld [vmem:[#allocation4 + $0xc78] sm:$0xff]
    %v1597 = vld [vmem:[#allocation4 + $0xc80] sm:$0xff]
    %v1598 = vld [vmem:[#allocation4 + $0xc88] sm:$0xff]
    %v1599 = vld [vmem:[#allocation4 + $0xc90] sm:$0xff]
    %v1600 = vld [vmem:[#allocation4 + $0xc98] sm:$0xff]
    %v1601 = vld [vmem:[#allocation4 + $0xca0] sm:$0xff]
    %v1602 = vld [vmem:[#allocation4 + $0xca8] sm:$0xff]
    %v1603 = vld [vmem:[#allocation4 + $0xcb0] sm:$0xff]
    %v1604 = vld [vmem:[#allocation4 + $0xcb8] sm:$0xff]
    %v1605 = vld [vmem:[#allocation4 + $0xcc0] sm:$0xff]
    %v1606 = vld [vmem:[#allocation4 + $0xcc8] sm:$0xff]
    %v1607 = vld [vmem:[#allocation4 + $0xcd0] sm:$0xff]
    %v1608 = vld [vmem:[#allocation4 + $0xcd8] sm:$0xff]
    %v1609 = vld [vmem:[#allocation4 + $0xce0] sm:$0xff]
    %v1610 = vld [vmem:[#allocation4 + $0xce8] sm:$0xff]
    %v1611 = vld [vmem:[#allocation4 + $0xcf0] sm:$0xff]
    %v1612 = vld [vmem:[#allocation4 + $0xcf8] sm:$0xff]
    %v1613 = vld [vmem:[#allocation4 + $0xd00] sm:$0xff]
    %v1614 = vld [vmem:[#allocation4 + $0xd08] sm:$0xff]
    %v1615 = vld [vmem:[#allocation4 + $0xd10] sm:$0xff]
    %v1616 = vld [vmem:[#allocation4 + $0xd18] sm:$0xff]
    %v1617 = vld [vmem:[#allocation4 + $0xd20] sm:$0xff]
    %v1618 = vld [vmem:[#allocation4 + $0xd28] sm:$0xff]
    %v1619 = vld [vmem:[#allocation4 + $0xd30] sm:$0xff]
    %v1620 = vld [vmem:[#allocation4 + $0xd38] sm:$0xff]
    %v1621 = vld [vmem:[#allocation4 + $0xd40] sm:$0xff]
    %v1622 = vld [vmem:[#allocation4 + $0xd48] sm:$0xff]
    %v1623 = vld [vmem:[#allocation4 + $0xd50] sm:$0xff]
    %v1624 = vld [vmem:[#allocation4 + $0xd58] sm:$0xff]
    %v1625 = vld [vmem:[#allocation4 + $0xd60] sm:$0xff]
    %v1626 = vld [vmem:[#allocation4 + $0xd68] sm:$0xff]
    %v1627 = vld [vmem:[#allocation4 + $0xd70] sm:$0xff]
    %v1628 = vld [vmem:[#allocation4 + $0xd78] sm:$0xff]
    %v1629 = vld [vmem:[#allocation4 + $0xd80] sm:$0xff]
    %v1630 = vld [vmem:[#allocation4 + $0xd88] sm:$0xff]
    %v1631 = vld [vmem:[#allocation4 + $0xd90] sm:$0xff]
    %v1632 = vld [vmem:[#allocation4 + $0xd98] sm:$0xff]
    %v1633 = vld [vmem:[#allocation4 + $0xda0] sm:$0xff]
    %v1634 = vld [vmem:[#allocation4 + $0xda8] sm:$0xff]
    %v1635 = vld [vmem:[#allocation4 + $0xdb0] sm:$0xff]
    %v1636 = vld [vmem:[#allocation4 + $0xdb8] sm:$0xff]
    %v1637 = vld [vmem:[#allocation4 + $0xdc0] sm:$0xff]
    %v1638 = vld [vmem:[#allocation4 + $0xdc8] sm:$0xff]
    %v1639 = vld [vmem:[#allocation4 + $0xdd0] sm:$0xff]
    %v1640 = vld [vmem:[#allocation4 + $0xdd8] sm:$0xff]
    %v1641 = vld [vmem:[#allocation4 + $0xde0] sm:$0xff]
    %v1642 = vld [vmem:[#allocation4 + $0xde8] sm:$0xff]
    %v1643 = vld [vmem:[#allocation4 + $0xdf0] sm:$0xff]
    %v1644 = vld [vmem:[#allocation4 + $0xdf8] sm:$0xff]
    %v1645 = vld [vmem:[#allocation4 + $0xe00] sm:$0xff]
    %v1646 = vld [vmem:[#allocation4 + $0xe08] sm:$0xff]
    %v1647 = vld [vmem:[#allocation4 + $0xe10] sm:$0xff]
    %v1648 = vld [vmem:[#allocation4 + $0xe18] sm:$0xff]
    %v1649 = vld [vmem:[#allocation4 + $0xe20] sm:$0xff]
    %v1650 = vld [vmem:[#allocation4 + $0xe28] sm:$0xff]
    %v1651 = vld [vmem:[#allocation4 + $0xe30] sm:$0xff]
    %v1652 = vld [vmem:[#allocation4 + $0xe38] sm:$0xff]
    %v1653 = vld [vmem:[#allocation4 + $0xe40] sm:$0xff]
    %v1654 = vld [vmem:[#allocation4 + $0xe48] sm:$0xff]
    %v1655 = vld [vmem:[#allocation4 + $0xe50] sm:$0xff]
    %v1656 = vld [vmem:[#allocation4 + $0xe58] sm:$0xff]
    %v1657 = vld [vmem:[#allocation4 + $0xe60] sm:$0xff]
    %v1658 = vld [vmem:[#allocation4 + $0xe68] sm:$0xff]
    %v1659 = vld [vmem:[#allocation4 + $0xe70] sm:$0xff]
    %v1660 = vld [vmem:[#allocation4 + $0xe78] sm:$0xff]
    %v1661 = vld [vmem:[#allocation4 + $0xe80] sm:$0xff]
    %v1662 = vld [vmem:[#allocation4 + $0xe88] sm:$0xff]
    %v1663 = vld [vmem:[#allocation4 + $0xe90] sm:$0xff]
    %v1664 = vld [vmem:[#allocation4 + $0xe98] sm:$0xff]
    %v1665 = vld [vmem:[#allocation4 + $0xea0] sm:$0xff]
    %v1666 = vld [vmem:[#allocation4 + $0xea8] sm:$0xff]
    %v1667 = vld [vmem:[#allocation4 + $0xeb0] sm:$0xff]
    %v1668 = vld [vmem:[#allocation4 + $0xeb8] sm:$0xff]
    %v1669 = vld [vmem:[#allocation4 + $0xec0] sm:$0xff]
    %v1670 = vld [vmem:[#allocation4 + $0xec8] sm:$0xff]
    %v1671 = vld [vmem:[#allocation4 + $0xed0] sm:$0xff]
    %v1672 = vld [vmem:[#allocation4 + $0xed8] sm:$0xff]
    %v1673 = vld [vmem:[#allocation4 + $0xee0] sm:$0xff]
    %v1674 = vld [vmem:[#allocation4 + $0xee8] sm:$0xff]
    %v1675 = vld [vmem:[#allocation4 + $0xef0] sm:$0xff]
    %v1676 = vld [vmem:[#allocation4 + $0xef8] sm:$0xff]
    %v1677 = vld [vmem:[#allocation4 + $0xf00] sm:$0xff]
    %v1678 = vld [vmem:[#allocation4 + $0xf08] sm:$0xff]
    %v1679 = vld [vmem:[#allocation4 + $0xf10] sm:$0xff]
    %v1680 = vld [vmem:[#allocation4 + $0xf18] sm:$0xff]
    %v1681 = vld [vmem:[#allocation4 + $0xf20] sm:$0xff]
    %v1682 = vld [vmem:[#allocation4 + $0xf28] sm:$0xff]
    %v1683 = vld [vmem:[#allocation4 + $0xf30] sm:$0xff]
    %v1684 = vld [vmem:[#allocation4 + $0xf38] sm:$0xff]
    %v1685 = vld [vmem:[#allocation4 + $0xf40] sm:$0xff]
    %v1686 = vld [vmem:[#allocation4 + $0xf48] sm:$0xff]
    %v1687 = vld [vmem:[#allocation4 + $0xf50] sm:$0xff]
    %v1688 = vld [vmem:[#allocation4 + $0xf58] sm:$0xff]
    %v1689 = vld [vmem:[#allocation4 + $0xf60] sm:$0xff]
    %v1690 = vld [vmem:[#allocation4 + $0xf68] sm:$0xff]
    %v1691 = vld [vmem:[#allocation4 + $0xf70] sm:$0xff]
    %v1692 = vld [vmem:[#allocation4 + $0xf78] sm:$0xff]
    %v1693 = vld [vmem:[#allocation4 + $0xf80] sm:$0xff]
    %v1694 = vld [vmem:[#allocation4 + $0xf88] sm:$0xff]
    %v1695 = vld [vmem:[#allocation4 + $0xf90] sm:$0xff]
    %v1696 = vld [vmem:[#allocation4 + $0xf98] sm:$0xff]
    %v1697 = vld [vmem:[#allocation4 + $0xfa0] sm:$0xff]
    %v1698 = vld [vmem:[#allocation4 + $0xfa8] sm:$0xff]
    %v1699 = vld [vmem:[#allocation4 + $0xfb0] sm:$0xff]
    %v1700 = vld [vmem:[#allocation4 + $0xfb8] sm:$0xff]
    %v1701 = vld [vmem:[#allocation4 + $0xfc0] sm:$0xff]
    %v1702 = vld [vmem:[#allocation4 + $0xfc8] sm:$0xff]
    %v1703 = vld [vmem:[#allocation4 + $0xfd0] sm:$0xff]
    %v1704 = vld [vmem:[#allocation4 + $0xfd8] sm:$0xff]
    %v1705 = vld [vmem:[#allocation4 + $0xfe0] sm:$0xff]
    %v1706 = vld [vmem:[#allocation4 + $0xfe8] sm:$0xff]
    %v1707 = vld [vmem:[#allocation4 + $0xff0] sm:$0xff]
    %v1708 = vld [vmem:[#allocation4 + $0xff8] sm:$0xff]
    %v1773 = vunpack.c.l.b16 %v1197
    %v1774 = vunpack.c.h.b16 %v1197
    %v1775 = vunpack.c.l.b16 %v1198
    %v1776 = vunpack.c.h.b16 %v1198
    %v1777 = vunpack.c.l.b16 %v1199
    %v1778 = vunpack.c.h.b16 %v1199
    %v1779 = vunpack.c.l.b16 %v1200
    %v1780 = vunpack.c.h.b16 %v1200
    %v1781 = vunpack.c.l.b16 %v1201
    %v1782 = vunpack.c.h.b16 %v1201
    %v1783 = vunpack.c.l.b16 %v1202
    %v1784 = vunpack.c.h.b16 %v1202
    %v1785 = vunpack.c.l.b16 %v1203
    %v1786 = vunpack.c.h.b16 %v1203
    %v1787 = vunpack.c.l.b16 %v1204
    %v1788 = vunpack.c.h.b16 %v1204
    %v1789 = vunpack.c.l.b16 %v1205
    %v1790 = vunpack.c.h.b16 %v1205
    %v1791 = vunpack.c.l.b16 %v1206
    %v1792 = vunpack.c.h.b16 %v1206
    %v1793 = vunpack.c.l.b16 %v1207
    %v1794 = vunpack.c.h.b16 %v1207
    %v1795 = vunpack.c.l.b16 %v1208
    %v1796 = vunpack.c.h.b16 %v1208
    %v1797 = vunpack.c.l.b16 %v1209
    %v1798 = vunpack.c.h.b16 %v1209
    %v1799 = vunpack.c.l.b16 %v1210
    %v1800 = vunpack.c.h.b16 %v1210
    %v1801 = vunpack.c.l.b16 %v1211
    %v1802 = vunpack.c.h.b16 %v1211
    %v1803 = vunpack.c.l.b16 %v1212
    %v1804 = vunpack.c.h.b16 %v1212
    %v1805 = vunpack.c.l.b16 %v1213
    %v1806 = vunpack.c.h.b16 %v1213
    %v1807 = vunpack.c.l.b16 %v1214
    %v1808 = vunpack.c.h.b16 %v1214
    %v1809 = vunpack.c.l.b16 %v1215
    %v1810 = vunpack.c.h.b16 %v1215
    %v1811 = vunpack.c.l.b16 %v1216
    %v1812 = vunpack.c.h.b16 %v1216
    %v1813 = vunpack.c.l.b16 %v1217
    %v1814 = vunpack.c.h.b16 %v1217
    %v1815 = vunpack.c.l.b16 %v1218
    %v1816 = vunpack.c.h.b16 %v1218
    %v1817 = vunpack.c.l.b16 %v1219
    %v1818 = vunpack.c.h.b16 %v1219
    %v1819 = vunpack.c.l.b16 %v1220
    %v1820 = vunpack.c.h.b16 %v1220
    %v1821 = vunpack.c.l.b16 %v1221
    %v1822 = vunpack.c.h.b16 %v1221
    %v1823 = vunpack.c.l.b16 %v1222
    %v1824 = vunpack.c.h.b16 %v1222
    %v1825 = vunpack.c.l.b16 %v1223
    %v1826 = vunpack.c.h.b16 %v1223
    %v1827 = vunpack.c.l.b16 %v1224
    %v1828 = vunpack.c.h.b16 %v1224
    %v1829 = vunpack.c.l.b16 %v1225
    %v1830 = vunpack.c.h.b16 %v1225
    %v1831 = vunpack.c.l.b16 %v1226
    %v1832 = vunpack.c.h.b16 %v1226
    %v1833 = vunpack.c.l.b16 %v1227
    %v1834 = vunpack.c.h.b16 %v1227
    %v1835 = vunpack.c.l.b16 %v1228
    %v1836 = vunpack.c.h.b16 %v1228
    %v1837 = vunpack.c.l.b16 %v1229
    %v1838 = vunpack.c.h.b16 %v1229
    %v1839 = vunpack.c.l.b16 %v1230
    %v1840 = vunpack.c.h.b16 %v1230
    %v1841 = vunpack.c.l.b16 %v1231
    %v1842 = vunpack.c.h.b16 %v1231
    %v1843 = vunpack.c.l.b16 %v1232
    %v1844 = vunpack.c.h.b16 %v1232
    %v1845 = vunpack.c.l.b16 %v1233
    %v1846 = vunpack.c.h.b16 %v1233
    %v1847 = vunpack.c.l.b16 %v1234
    %v1848 = vunpack.c.h.b16 %v1234
    %v1849 = vunpack.c.l.b16 %v1235
    %v1850 = vunpack.c.h.b16 %v1235
    %v1851 = vunpack.c.l.b16 %v1236
    %v1852 = vunpack.c.h.b16 %v1236
    %v1853 = vunpack.c.l.b16 %v1237
    %v1854 = vunpack.c.h.b16 %v1237
    %v1855 = vunpack.c.l.b16 %v1238
    %v1856 = vunpack.c.h.b16 %v1238
    %v1857 = vunpack.c.l.b16 %v1239
    %v1858 = vunpack.c.h.b16 %v1239
    %v1859 = vunpack.c.l.b16 %v1240
    %v1860 = vunpack.c.h.b16 %v1240
    %v1861 = vunpack.c.l.b16 %v1241
    %v1862 = vunpack.c.h.b16 %v1241
    %v1863 = vunpack.c.l.b16 %v1242
    %v1864 = vunpack.c.h.b16 %v1242
    %v1865 = vunpack.c.l.b16 %v1243
    %v1866 = vunpack.c.h.b16 %v1243
    %v1867 = vunpack.c.l.b16 %v1244
    %v1868 = vunpack.c.h.b16 %v1244
    %v1869 = vunpack.c.l.b16 %v1245
    %v1870 = vunpack.c.h.b16 %v1245
    %v1871 = vunpack.c.l.b16 %v1246
    %v1872 = vunpack.c.h.b16 %v1246
    %v1873 = vunpack.c.l.b16 %v1247
    %v1874 = vunpack.c.h.b16 %v1247
    %v1875 = vunpack.c.l.b16 %v1248
    %v1876 = vunpack.c.h.b16 %v1248
    %v1877 = vunpack.c.l.b16 %v1249
    %v1878 = vunpack.c.h.b16 %v1249
    %v1879 = vunpack.c.l.b16 %v1250
    %v1880 = vunpack.c.h.b16 %v1250
    %v1881 = vunpack.c.l.b16 %v1251
    %v1882 = vunpack.c.h.b16 %v1251
    %v1883 = vunpack.c.l.b16 %v1252
    %v1884 = vunpack.c.h.b16 %v1252
    %v1885 = vunpack.c.l.b16 %v1253
    %v1886 = vunpack.c.h.b16 %v1253
    %v1887 = vunpack.c.l.b16 %v1254
    %v1888 = vunpack.c.h.b16 %v1254
    %v1889 = vunpack.c.l.b16 %v1255
    %v1890 = vunpack.c.h.b16 %v1255
    %v1891 = vunpack.c.l.b16 %v1256
    %v1892 = vunpack.c.h.b16 %v1256
    %v1893 = vunpack.c.l.b16 %v1257
    %v1894 = vunpack.c.h.b16 %v1257
    %v1895 = vunpack.c.l.b16 %v1258
    %v1896 = vunpack.c.h.b16 %v1258
    %v1897 = vunpack.c.l.b16 %v1259
    %v1898 = vunpack.c.h.b16 %v1259
    %v1899 = vunpack.c.l.b16 %v1260
    %v1900 = vunpack.c.h.b16 %v1260
    %v1901 = vpack.c.b16 %v1775, %v1773
    %v1902 = vpack.c.b16 %v1776, %v1774
    %v1903 = vpack.c.b16 %v1779, %v1777
    %v1904 = vpack.c.b16 %v1780, %v1778
    %v1905 = vpack.c.b16 %v1783, %v1781
    %v1906 = vpack.c.b16 %v1784, %v1782
    %v1907 = vpack.c.b16 %v1787, %v1785
    %v1908 = vpack.c.b16 %v1788, %v1786
    %v1909 = vpack.c.b16 %v1791, %v1789
    %v1910 = vpack.c.b16 %v1792, %v1790
    %v1911 = vpack.c.b16 %v1795, %v1793
    %v1912 = vpack.c.b16 %v1796, %v1794
    %v1913 = vpack.c.b16 %v1799, %v1797
    %v1914 = vpack.c.b16 %v1800, %v1798
    %v1915 = vpack.c.b16 %v1803, %v1801
    %v1916 = vpack.c.b16 %v1804, %v1802
    %v1917 = vpack.c.b16 %v1807, %v1805
    %v1918 = vpack.c.b16 %v1808, %v1806
    %v1919 = vpack.c.b16 %v1811, %v1809
    %v1920 = vpack.c.b16 %v1812, %v1810
    %v1921 = vpack.c.b16 %v1815, %v1813
    %v1922 = vpack.c.b16 %v1816, %v1814
    %v1923 = vpack.c.b16 %v1819, %v1817
    %v1924 = vpack.c.b16 %v1820, %v1818
    %v1925 = vpack.c.b16 %v1823, %v1821
    %v1926 = vpack.c.b16 %v1824, %v1822
    %v1927 = vpack.c.b16 %v1827, %v1825
    %v1928 = vpack.c.b16 %v1828, %v1826
    %v1929 = vpack.c.b16 %v1831, %v1829
    %v1930 = vpack.c.b16 %v1832, %v1830
    %v1931 = vpack.c.b16 %v1835, %v1833
    %v1932 = vpack.c.b16 %v1836, %v1834
    %v1933 = vpack.c.b16 %v1839, %v1837
    %v1934 = vpack.c.b16 %v1840, %v1838
    %v1935 = vpack.c.b16 %v1843, %v1841
    %v1936 = vpack.c.b16 %v1844, %v1842
    %v1937 = vpack.c.b16 %v1847, %v1845
    %v1938 = vpack.c.b16 %v1848, %v1846
    %v1939 = vpack.c.b16 %v1851, %v1849
    %v1940 = vpack.c.b16 %v1852, %v1850
    %v1941 = vpack.c.b16 %v1855, %v1853
    %v1942 = vpack.c.b16 %v1856, %v1854
    %v1943 = vpack.c.b16 %v1859, %v1857
    %v1944 = vpack.c.b16 %v1860, %v1858
    %v1945 = vpack.c.b16 %v1863, %v1861
    %v1946 = vpack.c.b16 %v1864, %v1862
    %v1947 = vpack.c.b16 %v1867, %v1865
    %v1948 = vpack.c.b16 %v1868, %v1866
    %v1949 = vpack.c.b16 %v1871, %v1869
    %v1950 = vpack.c.b16 %v1872, %v1870
    %v1951 = vpack.c.b16 %v1875, %v1873
    %v1952 = vpack.c.b16 %v1876, %v1874
    %v1953 = vpack.c.b16 %v1879, %v1877
    %v1954 = vpack.c.b16 %v1880, %v1878
    %v1955 = vpack.c.b16 %v1883, %v1881
    %v1956 = vpack.c.b16 %v1884, %v1882
    %v1957 = vpack.c.b16 %v1887, %v1885
    %v1958 = vpack.c.b16 %v1888, %v1886
    %v1959 = vpack.c.b16 %v1891, %v1889
    %v1960 = vpack.c.b16 %v1892, %v1890
    %v1961 = vpack.c.b16 %v1895, %v1893
    %v1962 = vpack.c.b16 %v1896, %v1894
    %v1963 = vpack.c.b16 %v1899, %v1897
    %v1964 = vpack.c.b16 %v1900, %v1898
    %2029 = vmatprep.subr.bf16.mxu0 %v1902
    %2030 = vmatpush1.bf16.msra.mxu0 %v1901
    %2031 = vmatprep.subr.bf16.mxu0 %v1904
    %2032 = vmatpush1.bf16.msra.mxu0 %v1903
    %2033 = vmatprep.subr.bf16.mxu0 %v1906
    %2034 = vmatpush1.bf16.msra.mxu0 %v1905
    %2035 = vmatprep.subr.bf16.mxu0 %v1908
    %2036 = vmatpush1.bf16.msra.mxu0 %v1907
    %2037 = vmatprep.subr.bf16.mxu0 %v1910
    %2038 = vmatpush1.bf16.msra.mxu0 %v1909
    %2039 = vmatprep.subr.bf16.mxu0 %v1912
    %2040 = vmatpush1.bf16.msra.mxu0 %v1911
    %2041 = vmatprep.subr.bf16.mxu0 %v1914
    %2042 = vmatpush1.bf16.msra.mxu0 %v1913
    %2043 = vmatprep.subr.bf16.mxu0 %v1916
    %2044 = vmatpush1.bf16.msra.mxu0 %v1915
    %2045 = vmatprep.subr.bf16.mxu0 %v1918
    %2046 = vmatpush1.bf16.msra.mxu0 %v1917
    %2047 = vmatprep.subr.bf16.mxu0 %v1920
    %2048 = vmatpush1.bf16.msra.mxu0 %v1919
    %2049 = vmatprep.subr.bf16.mxu0 %v1922
    %2050 = vmatpush1.bf16.msra.mxu0 %v1921
    %2051 = vmatprep.subr.bf16.mxu0 %v1924
    %2052 = vmatpush1.bf16.msra.mxu0 %v1923
    %2053 = vmatprep.subr.bf16.mxu0 %v1926
    %2054 = vmatpush1.bf16.msra.mxu0 %v1925
    %2055 = vmatprep.subr.bf16.mxu0 %v1928
    %2056 = vmatpush1.bf16.msra.mxu0 %v1927
    %2057 = vmatprep.subr.bf16.mxu0 %v1930
    %2058 = vmatpush1.bf16.msra.mxu0 %v1929
    %2059 = vmatprep.subr.bf16.mxu0 %v1932
    %2060 = vmatpush1.bf16.msra.mxu0 %v1931
    %2061 = vmatprep.mubr.bf16.mxu0 %v1166
    %2062 = vmatmul.mubr.bf16.gmra.mrb[0].mxu0 %v1165
    %v2063 = vpop.f32.mrb[0].mxu0
    %v2064 = vadd.f32 0.0, %v2063
    %v2065 = vpop.f32.mrb[0].mxu0
    %v2066 = vadd.f32 0.0, %v2065
    %v2067 = vpop.f32.mrb[0].mxu0
    %v2068 = vpop.f32.mrb[0].mxu0
    %2069 = vdwg.mxu0
    %2070 = vmatprep.subr.bf16.mxu0 %v1934
    %2071 = vmatpush1.bf16.msra.mxu0 %v1933
    %2072 = vmatprep.subr.bf16.mxu0 %v1936
    %2073 = vmatpush1.bf16.msra.mxu0 %v1935
    %2074 = vmatprep.subr.bf16.mxu0 %v1938
    %2075 = vmatpush1.bf16.msra.mxu0 %v1937
    %2076 = vmatprep.subr.bf16.mxu0 %v1940
    %2077 = vmatpush1.bf16.msra.mxu0 %v1939
    %2078 = vmatprep.subr.bf16.mxu0 %v1942
    %2079 = vmatpush1.bf16.msra.mxu0 %v1941
    %2080 = vmatprep.subr.bf16.mxu0 %v1944
    %2081 = vmatpush1.bf16.msra.mxu0 %v1943
    %2082 = vmatprep.subr.bf16.mxu0 %v1946
    %2083 = vmatpush1.bf16.msra.mxu0 %v1945
    %2084 = vmatprep.subr.bf16.mxu0 %v1948
    %2085 = vmatpush1.bf16.msra.mxu0 %v1947
    %2086 = vmatprep.subr.bf16.mxu0 %v1950
    %2087 = vmatpush1.bf16.msra.mxu0 %v1949
    %2088 = vmatprep.subr.bf16.mxu0 %v1952
    %2089 = vmatpush1.bf16.msra.mxu0 %v1951
    %2090 = vmatprep.subr.bf16.mxu0 %v1954
    %2091 = vmatpush1.bf16.msra.mxu0 %v1953
    %2092 = vmatprep.subr.bf16.mxu0 %v1956
    %2093 = vmatpush1.bf16.msra.mxu0 %v1955
    %2094 = vmatprep.subr.bf16.mxu0 %v1958
    %2095 = vmatpush1.bf16.msra.mxu0 %v1957
    %2096 = vmatprep.subr.bf16.mxu0 %v1960
    %2097 = vmatpush1.bf16.msra.mxu0 %v1959
    %2098 = vmatprep.subr.bf16.mxu0 %v1962
    %2099 = vmatpush1.bf16.msra.mxu0 %v1961
    %2100 = vmatprep.subr.bf16.mxu0 %v1964
    %2101 = vmatpush1.bf16.msra.mxu0 %v1963
    %2102 = vmatprep.mubr.bf16.mxu0 %v1168
    %2103 = vmatmul.mubr.bf16.gmra.mrb[0].mxu0 %v1167
    %v2104 = vpop.f32.mrb[0].mxu0
    %v2105 = vadd.f32 %v2064, %v2104
    %v2106 = vpop.f32.mrb[0].mxu0
    %v2107 = vadd.f32 %v2066, %v2106
    %v2108 = vpop.f32.mrb[0].mxu0
    %v2109 = vpop.f32.mrb[0].mxu0
    %2110 = vdwg.mxu0
    %v2175 = vunpack.c.l.b16 %v1261
    %v2176 = vunpack.c.h.b16 %v1261
    %v2177 = vunpack.c.l.b16 %v1262
    %v2178 = vunpack.c.h.b16 %v1262
    %v2179 = vunpack.c.l.b16 %v1263
    %v2180 = vunpack.c.h.b16 %v1263
    %v2181 = vunpack.c.l.b16 %v1264
    %v2182 = vunpack.c.h.b16 %v1264
    %v2183 = vunpack.c.l.b16 %v1265
    %v2184 = vunpack.c.h.b16 %v1265
    %v2185 = vunpack.c.l.b16 %v1266
    %v2186 = vunpack.c.h.b16 %v1266
    %v2187 = vunpack.c.l.b16 %v1267
    %v2188 = vunpack.c.h.b16 %v1267
    %v2189 = vunpack.c.l.b16 %v1268
    %v2190 = vunpack.c.h.b16 %v1268
    %v2191 = vunpack.c.l.b16 %v1269
    %v2192 = vunpack.c.h.b16 %v1269
    %v2193 = vunpack.c.l.b16 %v1270
    %v2194 = vunpack.c.h.b16 %v1270
    %v2195 = vunpack.c.l.b16 %v1271
    %v2196 = vunpack.c.h.b16 %v1271
    %v2197 = vunpack.c.l.b16 %v1272
    %v2198 = vunpack.c.h.b16 %v1272
    %v2199 = vunpack.c.l.b16 %v1273
    %v2200 = vunpack.c.h.b16 %v1273
    %v2201 = vunpack.c.l.b16 %v1274
    %v2202 = vunpack.c.h.b16 %v1274
    %v2203 = vunpack.c.l.b16 %v1275
    %v2204 = vunpack.c.h.b16 %v1275
    %v2205 = vunpack.c.l.b16 %v1276
    %v2206 = vunpack.c.h.b16 %v1276
    %v2207 = vunpack.c.l.b16 %v1277
    %v2208 = vunpack.c.h.b16 %v1277
    %v2209 = vunpack.c.l.b16 %v1278
    %v2210 = vunpack.c.h.b16 %v1278
    %v2211 = vunpack.c.l.b16 %v1279
    %v2212 = vunpack.c.h.b16 %v1279
    %v2213 = vunpack.c.l.b16 %v1280
    %v2214 = vunpack.c.h.b16 %v1280
    %v2215 = vunpack.c.l.b16 %v1281
    %v2216 = vunpack.c.h.b16 %v1281
    %v2217 = vunpack.c.l.b16 %v1282
    %v2218 = vunpack.c.h.b16 %v1282
    %v2219 = vunpack.c.l.b16 %v1283
    %v2220 = vunpack.c.h.b16 %v1283
    %v2221 = vunpack.c.l.b16 %v1284
    %v2222 = vunpack.c.h.b16 %v1284
    %v2223 = vunpack.c.l.b16 %v1285
    %v2224 = vunpack.c.h.b16 %v1285
    %v2225 = vunpack.c.l.b16 %v1286
    %v2226 = vunpack.c.h.b16 %v1286
    %v2227 = vunpack.c.l.b16 %v1287
    %v2228 = vunpack.c.h.b16 %v1287
    %v2229 = vunpack.c.l.b16 %v1288
    %v2230 = vunpack.c.h.b16 %v1288
    %v2231 = vunpack.c.l.b16 %v1289
    %v2232 = vunpack.c.h.b16 %v1289
    %v2233 = vunpack.c.l.b16 %v1290
    %v2234 = vunpack.c.h.b16 %v1290
    %v2235 = vunpack.c.l.b16 %v1291
    %v2236 = vunpack.c.h.b16 %v1291
    %v2237 = vunpack.c.l.b16 %v1292
    %v2238 = vunpack.c.h.b16 %v1292
    %v2239 = vunpack.c.l.b16 %v1293
    %v2240 = vunpack.c.h.b16 %v1293
    %v2241 = vunpack.c.l.b16 %v1294
    %v2242 = vunpack.c.h.b16 %v1294
    %v2243 = vunpack.c.l.b16 %v1295
    %v2244 = vunpack.c.h.b16 %v1295
    %v2245 = vunpack.c.l.b16 %v1296
    %v2246 = vunpack.c.h.b16 %v1296
    %v2247 = vunpack.c.l.b16 %v1297
    %v2248 = vunpack.c.h.b16 %v1297
    %v2249 = vunpack.c.l.b16 %v1298
    %v2250 = vunpack.c.h.b16 %v1298
    %v2251 = vunpack.c.l.b16 %v1299
    %v2252 = vunpack.c.h.b16 %v1299
    %v2253 = vunpack.c.l.b16 %v1300
    %v2254 = vunpack.c.h.b16 %v1300
    %v2255 = vunpack.c.l.b16 %v1301
    %v2256 = vunpack.c.h.b16 %v1301
    %v2257 = vunpack.c.l.b16 %v1302
    %v2258 = vunpack.c.h.b16 %v1302
    %v2259 = vunpack.c.l.b16 %v1303
    %v2260 = vunpack.c.h.b16 %v1303
    %v2261 = vunpack.c.l.b16 %v1304
    %v2262 = vunpack.c.h.b16 %v1304
    %v2263 = vunpack.c.l.b16 %v1305
    %v2264 = vunpack.c.h.b16 %v1305
    %v2265 = vunpack.c.l.b16 %v1306
    %v2266 = vunpack.c.h.b16 %v1306
    %v2267 = vunpack.c.l.b16 %v1307
    %v2268 = vunpack.c.h.b16 %v1307
    %v2269 = vunpack.c.l.b16 %v1308
    %v2270 = vunpack.c.h.b16 %v1308
    %v2271 = vunpack.c.l.b16 %v1309
    %v2272 = vunpack.c.h.b16 %v1309
    %v2273 = vunpack.c.l.b16 %v1310
    %v2274 = vunpack.c.h.b16 %v1310
    %v2275 = vunpack.c.l.b16 %v1311
    %v2276 = vunpack.c.h.b16 %v1311
    %v2277 = vunpack.c.l.b16 %v1312
    %v2278 = vunpack.c.h.b16 %v1312
    %v2279 = vunpack.c.l.b16 %v1313
    %v2280 = vunpack.c.h.b16 %v1313
    %v2281 = vunpack.c.l.b16 %v1314
    %v2282 = vunpack.c.h.b16 %v1314
    %v2283 = vunpack.c.l.b16 %v1315
    %v2284 = vunpack.c.h.b16 %v1315
    %v2285 = vunpack.c.l.b16 %v1316
    %v2286 = vunpack.c.h.b16 %v1316
    %v2287 = vunpack.c.l.b16 %v1317
    %v2288 = vunpack.c.h.b16 %v1317
    %v2289 = vunpack.c.l.b16 %v1318
    %v2290 = vunpack.c.h.b16 %v1318
    %v2291 = vunpack.c.l.b16 %v1319
    %v2292 = vunpack.c.h.b16 %v1319
    %v2293 = vunpack.c.l.b16 %v1320
    %v2294 = vunpack.c.h.b16 %v1320
    %v2295 = vunpack.c.l.b16 %v1321
    %v2296 = vunpack.c.h.b16 %v1321
    %v2297 = vunpack.c.l.b16 %v1322
    %v2298 = vunpack.c.h.b16 %v1322
    %v2299 = vunpack.c.l.b16 %v1323
    %v2300 = vunpack.c.h.b16 %v1323
    %v2301 = vunpack.c.l.b16 %v1324
    %v2302 = vunpack.c.h.b16 %v1324
    %v2303 = vpack.c.b16 %v2177, %v2175
    %v2304 = vpack.c.b16 %v2178, %v2176
    %v2305 = vpack.c.b16 %v2181, %v2179
    %v2306 = vpack.c.b16 %v2182, %v2180
    %v2307 = vpack.c.b16 %v2185, %v2183
    %v2308 = vpack.c.b16 %v2186, %v2184
    %v2309 = vpack.c.b16 %v2189, %v2187
    %v2310 = vpack.c.b16 %v2190, %v2188
    %v2311 = vpack.c.b16 %v2193, %v2191
    %v2312 = vpack.c.b16 %v2194, %v2192
    %v2313 = vpack.c.b16 %v2197, %v2195
    %v2314 = vpack.c.b16 %v2198, %v2196
    %v2315 = vpack.c.b16 %v2201, %v2199
    %v2316 = vpack.c.b16 %v2202, %v2200
    %v2317 = vpack.c.b16 %v2205, %v2203
    %v2318 = vpack.c.b16 %v2206, %v2204
    %v2319 = vpack.c.b16 %v2209, %v2207
    %v2320 = vpack.c.b16 %v2210, %v2208
    %v2321 = vpack.c.b16 %v2213, %v2211
    %v2322 = vpack.c.b16 %v2214, %v2212
    %v2323 = vpack.c.b16 %v2217, %v2215
    %v2324 = vpack.c.b16 %v2218, %v2216
    %v2325 = vpack.c.b16 %v2221, %v2219
    %v2326 = vpack.c.b16 %v2222, %v2220
    %v2327 = vpack.c.b16 %v2225, %v2223
    %v2328 = vpack.c.b16 %v2226, %v2224
    %v2329 = vpack.c.b16 %v2229, %v2227
    %v2330 = vpack.c.b16 %v2230, %v2228
    %v2331 = vpack.c.b16 %v2233, %v2231
    %v2332 = vpack.c.b16 %v2234, %v2232
    %v2333 = vpack.c.b16 %v2237, %v2235
    %v2334 = vpack.c.b16 %v2238, %v2236
    %v2335 = vpack.c.b16 %v2241, %v2239
    %v2336 = vpack.c.b16 %v2242, %v2240
    %v2337 = vpack.c.b16 %v2245, %v2243
    %v2338 = vpack.c.b16 %v2246, %v2244
    %v2339 = vpack.c.b16 %v2249, %v2247
    %v2340 = vpack.c.b16 %v2250, %v2248
    %v2341 = vpack.c.b16 %v2253, %v2251
    %v2342 = vpack.c.b16 %v2254, %v2252
    %v2343 = vpack.c.b16 %v2257, %v2255
    %v2344 = vpack.c.b16 %v2258, %v2256
    %v2345 = vpack.c.b16 %v2261, %v2259
    %v2346 = vpack.c.b16 %v2262, %v2260
    %v2347 = vpack.c.b16 %v2265, %v2263
    %v2348 = vpack.c.b16 %v2266, %v2264
    %v2349 = vpack.c.b16 %v2269, %v2267
    %v2350 = vpack.c.b16 %v2270, %v2268
    %v2351 = vpack.c.b16 %v2273, %v2271
    %v2352 = vpack.c.b16 %v2274, %v2272
    %v2353 = vpack.c.b16 %v2277, %v2275
    %v2354 = vpack.c.b16 %v2278, %v2276
    %v2355 = vpack.c.b16 %v2281, %v2279
    %v2356 = vpack.c.b16 %v2282, %v2280
    %v2357 = vpack.c.b16 %v2285, %v2283
    %v2358 = vpack.c.b16 %v2286, %v2284
    %v2359 = vpack.c.b16 %v2289, %v2287
    %v2360 = vpack.c.b16 %v2290, %v2288
    %v2361 = vpack.c.b16 %v2293, %v2291
    %v2362 = vpack.c.b16 %v2294, %v2292
    %v2363 = vpack.c.b16 %v2297, %v2295
    %v2364 = vpack.c.b16 %v2298, %v2296
    %v2365 = vpack.c.b16 %v2301, %v2299
    %v2366 = vpack.c.b16 %v2302, %v2300
    %2431 = vmatprep.subr.bf16.mxu0 %v2304
    %2432 = vmatpush1.bf16.msra.mxu0 %v2303
    %2433 = vmatprep.subr.bf16.mxu0 %v2306
    %2434 = vmatpush1.bf16.msra.mxu0 %v2305
    %2435 = vmatprep.subr.bf16.mxu0 %v2308
    %2436 = vmatpush1.bf16.msra.mxu0 %v2307
    %2437 = vmatprep.subr.bf16.mxu0 %v2310
    %2438 = vmatpush1.bf16.msra.mxu0 %v2309
    %2439 = vmatprep.subr.bf16.mxu0 %v2312
    %2440 = vmatpush1.bf16.msra.mxu0 %v2311
    %2441 = vmatprep.subr.bf16.mxu0 %v2314
    %2442 = vmatpush1.bf16.msra.mxu0 %v2313
    %2443 = vmatprep.subr.bf16.mxu0 %v2316
    %2444 = vmatpush1.bf16.msra.mxu0 %v2315
    %2445 = vmatprep.subr.bf16.mxu0 %v2318
    %2446 = vmatpush1.bf16.msra.mxu0 %v2317
    %2447 = vmatprep.subr.bf16.mxu0 %v2320
    %2448 = vmatpush1.bf16.msra.mxu0 %v2319
    %2449 = vmatprep.subr.bf16.mxu0 %v2322
    %2450 = vmatpush1.bf16.msra.mxu0 %v2321
    %2451 = vmatprep.subr.bf16.mxu0 %v2324
    %2452 = vmatpush1.bf16.msra.mxu0 %v2323
    %2453 = vmatprep.subr.bf16.mxu0 %v2326
    %2454 = vmatpush1.bf16.msra.mxu0 %v2325
    %2455 = vmatprep.subr.bf16.mxu0 %v2328
    %2456 = vmatpush1.bf16.msra.mxu0 %v2327
    %2457 = vmatprep.subr.bf16.mxu0 %v2330
    %2458 = vmatpush1.bf16.msra.mxu0 %v2329
    %2459 = vmatprep.subr.bf16.mxu0 %v2332
    %2460 = vmatpush1.bf16.msra.mxu0 %v2331
    %2461 = vmatprep.subr.bf16.mxu0 %v2334
    %2462 = vmatpush1.bf16.msra.mxu0 %v2333
    %2463 = vmatprep.mubr.bf16.mxu0 %v1170
    %2464 = vmatmul.mubr.bf16.gmra.mrb[0].mxu0 %v1169
    %v2465 = vpop.f32.mrb[0].mxu0
    %v2466 = vadd.f32 0.0, %v2465
    %v2467 = vpop.f32.mrb[0].mxu0
    %v2468 = vadd.f32 0.0, %v2467
    %v2469 = vpop.f32.mrb[0].mxu0
    %v2470 = vpop.f32.mrb[0].mxu0
    %2471 = vdwg.mxu0
    %2472 = vmatprep.subr.bf16.mxu0 %v2336
    %2473 = vmatpush1.bf16.msra.mxu0 %v2335
    %2474 = vmatprep.subr.bf16.mxu0 %v2338
    %2475 = vmatpush1.bf16.msra.mxu0 %v2337
    %2476 = vmatprep.subr.bf16.mxu0 %v2340
    %2477 = vmatpush1.bf16.msra.mxu0 %v2339
    %2478 = vmatprep.subr.bf16.mxu0 %v2342
    %2479 = vmatpush1.bf16.msra.mxu0 %v2341
    %2480 = vmatprep.subr.bf16.mxu0 %v2344
    %2481 = vmatpush1.bf16.msra.mxu0 %v2343
    %2482 = vmatprep.subr.bf16.mxu0 %v2346
    %2483 = vmatpush1.bf16.msra.mxu0 %v2345
    %2484 = vmatprep.subr.bf16.mxu0 %v2348
    %2485 = vmatpush1.bf16.msra.mxu0 %v2347
    %2486 = vmatprep.subr.bf16.mxu0 %v2350
    %2487 = vmatpush1.bf16.msra.mxu0 %v2349
    %2488 = vmatprep.subr.bf16.mxu0 %v2352
    %2489 = vmatpush1.bf16.msra.mxu0 %v2351
    %2490 = vmatprep.subr.bf16.mxu0 %v2354
    %2491 = vmatpush1.bf16.msra.mxu0 %v2353
    %2492 = vmatprep.subr.bf16.mxu0 %v2356
    %2493 = vmatpush1.bf16.msra.mxu0 %v2355
    %2494 = vmatprep.subr.bf16.mxu0 %v2358
    %2495 = vmatpush1.bf16.msra.mxu0 %v2357
    %2496 = vmatprep.subr.bf16.mxu0 %v2360
    %2497 = vmatpush1.bf16.msra.mxu0 %v2359
    %2498 = vmatprep.subr.bf16.mxu0 %v2362
    %2499 = vmatpush1.bf16.msra.mxu0 %v2361
    %2500 = vmatprep.subr.bf16.mxu0 %v2364
    %2501 = vmatpush1.bf16.msra.mxu0 %v2363
    %2502 = vmatprep.subr.bf16.mxu0 %v2366
    %2503 = vmatpush1.bf16.msra.mxu0 %v2365
    %2504 = vmatprep.mubr.bf16.mxu0 %v1172
    %2505 = vmatmul.mubr.bf16.gmra.mrb[0].mxu0 %v1171
    %v2506 = vpop.f32.mrb[0].mxu0
    %v2507 = vadd.f32 %v2466, %v2506
    %v2508 = vpop.f32.mrb[0].mxu0
    %v2509 = vadd.f32 %v2468, %v2508
    %v2510 = vpop.f32.mrb[0].mxu0
    %v2511 = vpop.f32.mrb[0].mxu0
    %2512 = vdwg.mxu0
    %v2577 = vunpack.c.l.b16 %v1325
    %v2578 = vunpack.c.h.b16 %v1325
    %v2579 = vunpack.c.l.b16 %v1326
    %v2580 = vunpack.c.h.b16 %v1326
    %v2581 = vunpack.c.l.b16 %v1327
    %v2582 = vunpack.c.h.b16 %v1327
    %v2583 = vunpack.c.l.b16 %v1328
    %v2584 = vunpack.c.h.b16 %v1328
    %v2585 = vunpack.c.l.b16 %v1329
    %v2586 = vunpack.c.h.b16 %v1329
    %v2587 = vunpack.c.l.b16 %v1330
    %v2588 = vunpack.c.h.b16 %v1330
    %v2589 = vunpack.c.l.b16 %v1331
    %v2590 = vunpack.c.h.b16 %v1331
    %v2591 = vunpack.c.l.b16 %v1332
    %v2592 = vunpack.c.h.b16 %v1332
    %v2593 = vunpack.c.l.b16 %v1333
    %v2594 = vunpack.c.h.b16 %v1333
    %v2595 = vunpack.c.l.b16 %v1334
    %v2596 = vunpack.c.h.b16 %v1334
    %v2597 = vunpack.c.l.b16 %v1335
    %v2598 = vunpack.c.h.b16 %v1335
    %v2599 = vunpack.c.l.b16 %v1336
    %v2600 = vunpack.c.h.b16 %v1336
    %v2601 = vunpack.c.l.b16 %v1337
    %v2602 = vunpack.c.h.b16 %v1337
    %v2603 = vunpack.c.l.b16 %v1338
    %v2604 = vunpack.c.h.b16 %v1338
    %v2605 = vunpack.c.l.b16 %v1339
    %v2606 = vunpack.c.h.b16 %v1339
    %v2607 = vunpack.c.l.b16 %v1340
    %v2608 = vunpack.c.h.b16 %v1340
    %v2609 = vunpack.c.l.b16 %v1341
    %v2610 = vunpack.c.h.b16 %v1341
    %v2611 = vunpack.c.l.b16 %v1342
    %v2612 = vunpack.c.h.b16 %v1342
    %v2613 = vunpack.c.l.b16 %v1343
    %v2614 = vunpack.c.h.b16 %v1343
    %v2615 = vunpack.c.l.b16 %v1344
    %v2616 = vunpack.c.h.b16 %v1344
    %v2617 = vunpack.c.l.b16 %v1345
    %v2618 = vunpack.c.h.b16 %v1345
    %v2619 = vunpack.c.l.b16 %v1346
    %v2620 = vunpack.c.h.b16 %v1346
    %v2621 = vunpack.c.l.b16 %v1347
    %v2622 = vunpack.c.h.b16 %v1347
    %v2623 = vunpack.c.l.b16 %v1348
    %v2624 = vunpack.c.h.b16 %v1348
    %v2625 = vunpack.c.l.b16 %v1349
    %v2626 = vunpack.c.h.b16 %v1349
    %v2627 = vunpack.c.l.b16 %v1350
    %v2628 = vunpack.c.h.b16 %v1350
    %v2629 = vunpack.c.l.b16 %v1351
    %v2630 = vunpack.c.h.b16 %v1351
    %v2631 = vunpack.c.l.b16 %v1352
    %v2632 = vunpack.c.h.b16 %v1352
    %v2633 = vunpack.c.l.b16 %v1353
    %v2634 = vunpack.c.h.b16 %v1353
    %v2635 = vunpack.c.l.b16 %v1354
    %v2636 = vunpack.c.h.b16 %v1354
    %v2637 = vunpack.c.l.b16 %v1355
    %v2638 = vunpack.c.h.b16 %v1355
    %v2639 = vunpack.c.l.b16 %v1356
    %v2640 = vunpack.c.h.b16 %v1356
    %v2641 = vunpack.c.l.b16 %v1357
    %v2642 = vunpack.c.h.b16 %v1357
    %v2643 = vunpack.c.l.b16 %v1358
    %v2644 = vunpack.c.h.b16 %v1358
    %v2645 = vunpack.c.l.b16 %v1359
    %v2646 = vunpack.c.h.b16 %v1359
    %v2647 = vunpack.c.l.b16 %v1360
    %v2648 = vunpack.c.h.b16 %v1360
    %v2649 = vunpack.c.l.b16 %v1361
    %v2650 = vunpack.c.h.b16 %v1361
    %v2651 = vunpack.c.l.b16 %v1362
    %v2652 = vunpack.c.h.b16 %v1362
    %v2653 = vunpack.c.l.b16 %v1363
    %v2654 = vunpack.c.h.b16 %v1363
    %v2655 = vunpack.c.l.b16 %v1364
    %v2656 = vunpack.c.h.b16 %v1364
    %v2657 = vunpack.c.l.b16 %v1365
    %v2658 = vunpack.c.h.b16 %v1365
    %v2659 = vunpack.c.l.b16 %v1366
    %v2660 = vunpack.c.h.b16 %v1366
    %v2661 = vunpack.c.l.b16 %v1367
    %v2662 = vunpack.c.h.b16 %v1367
    %v2663 = vunpack.c.l.b16 %v1368
    %v2664 = vunpack.c.h.b16 %v1368
    %v2665 = vunpack.c.l.b16 %v1369
    %v2666 = vunpack.c.h.b16 %v1369
    %v2667 = vunpack.c.l.b16 %v1370
    %v2668 = vunpack.c.h.b16 %v1370
    %v2669 = vunpack.c.l.b16 %v1371
    %v2670 = vunpack.c.h.b16 %v1371
    %v2671 = vunpack.c.l.b16 %v1372
    %v2672 = vunpack.c.h.b16 %v1372
    %v2673 = vunpack.c.l.b16 %v1373
    %v2674 = vunpack.c.h.b16 %v1373
    %v2675 = vunpack.c.l.b16 %v1374
    %v2676 = vunpack.c.h.b16 %v1374
    %v2677 = vunpack.c.l.b16 %v1375
    %v2678 = vunpack.c.h.b16 %v1375
    %v2679 = vunpack.c.l.b16 %v1376
    %v2680 = vunpack.c.h.b16 %v1376
    %v2681 = vunpack.c.l.b16 %v1377
    %v2682 = vunpack.c.h.b16 %v1377
    %v2683 = vunpack.c.l.b16 %v1378
    %v2684 = vunpack.c.h.b16 %v1378
    %v2685 = vunpack.c.l.b16 %v1379
    %v2686 = vunpack.c.h.b16 %v1379
    %v2687 = vunpack.c.l.b16 %v1380
    %v2688 = vunpack.c.h.b16 %v1380
    %v2689 = vunpack.c.l.b16 %v1381
    %v2690 = vunpack.c.h.b16 %v1381
    %v2691 = vunpack.c.l.b16 %v1382
    %v2692 = vunpack.c.h.b16 %v1382
    %v2693 = vunpack.c.l.b16 %v1383
    %v2694 = vunpack.c.h.b16 %v1383
    %v2695 = vunpack.c.l.b16 %v1384
    %v2696 = vunpack.c.h.b16 %v1384
    %v2697 = vunpack.c.l.b16 %v1385
    %v2698 = vunpack.c.h.b16 %v1385
    %v2699 = vunpack.c.l.b16 %v1386
    %v2700 = vunpack.c.h.b16 %v1386
    %v2701 = vunpack.c.l.b16 %v1387
    %v2702 = vunpack.c.h.b16 %v1387
    %v2703 = vunpack.c.l.b16 %v1388
    %v2704 = vunpack.c.h.b16 %v1388
    %v2705 = vpack.c.b16 %v2579, %v2577
    %v2706 = vpack.c.b16 %v2580, %v2578
    %v2707 = vpack.c.b16 %v2583, %v2581
    %v2708 = vpack.c.b16 %v2584, %v2582
    %v2709 = vpack.c.b16 %v2587, %v2585
    %v2710 = vpack.c.b16 %v2588, %v2586
    %v2711 = vpack.c.b16 %v2591, %v2589
    %v2712 = vpack.c.b16 %v2592, %v2590
    %v2713 = vpack.c.b16 %v2595, %v2593
    %v2714 = vpack.c.b16 %v2596, %v2594
    %v2715 = vpack.c.b16 %v2599, %v2597
    %v2716 = vpack.c.b16 %v2600, %v2598
    %v2717 = vpack.c.b16 %v2603, %v2601
    %v2718 = vpack.c.b16 %v2604, %v2602
    %v2719 = vpack.c.b16 %v2607, %v2605
    %v2720 = vpack.c.b16 %v2608, %v2606
    %v2721 = vpack.c.b16 %v2611, %v2609
    %v2722 = vpack.c.b16 %v2612, %v2610
    %v2723 = vpack.c.b16 %v2615, %v2613
    %v2724 = vpack.c.b16 %v2616, %v2614
    %v2725 = vpack.c.b16 %v2619, %v2617
    %v2726 = vpack.c.b16 %v2620, %v2618
    %v2727 = vpack.c.b16 %v2623, %v2621
    %v2728 = vpack.c.b16 %v2624, %v2622
    %v2729 = vpack.c.b16 %v2627, %v2625
    %v2730 = vpack.c.b16 %v2628, %v2626
    %v2731 = vpack.c.b16 %v2631, %v2629
    %v2732 = vpack.c.b16 %v2632, %v2630
    %v2733 = vpack.c.b16 %v2635, %v2633
    %v2734 = vpack.c.b16 %v2636, %v2634
    %v2735 = vpack.c.b16 %v2639, %v2637
    %v2736 = vpack.c.b16 %v2640, %v2638
    %v2737 = vpack.c.b16 %v2643, %v2641
    %v2738 = vpack.c.b16 %v2644, %v2642
    %v2739 = vpack.c.b16 %v2647, %v2645
    %v2740 = vpack.c.b16 %v2648, %v2646
    %v2741 = vpack.c.b16 %v2651, %v2649
    %v2742 = vpack.c.b16 %v2652, %v2650
    %v2743 = vpack.c.b16 %v2655, %v2653
    %v2744 = vpack.c.b16 %v2656, %v2654
    %v2745 = vpack.c.b16 %v2659, %v2657
    %v2746 = vpack.c.b16 %v2660, %v2658
    %v2747 = vpack.c.b16 %v2663, %v2661
    %v2748 = vpack.c.b16 %v2664, %v2662
    %v2749 = vpack.c.b16 %v2667, %v2665
    %v2750 = vpack.c.b16 %v2668, %v2666
    %v2751 = vpack.c.b16 %v2671, %v2669
    %v2752 = vpack.c.b16 %v2672, %v2670
    %v2753 = vpack.c.b16 %v2675, %v2673
    %v2754 = vpack.c.b16 %v2676, %v2674
    %v2755 = vpack.c.b16 %v2679, %v2677
    %v2756 = vpack.c.b16 %v2680, %v2678
    %v2757 = vpack.c.b16 %v2683, %v2681
    %v2758 = vpack.c.b16 %v2684, %v2682
    %v2759 = vpack.c.b16 %v2687, %v2685
    %v2760 = vpack.c.b16 %v2688, %v2686
    %v2761 = vpack.c.b16 %v2691, %v2689
    %v2762 = vpack.c.b16 %v2692, %v2690
    %v2763 = vpack.c.b16 %v2695, %v2693
    %v2764 = vpack.c.b16 %v2696, %v2694
    %v2765 = vpack.c.b16 %v2699, %v2697
    %v2766 = vpack.c.b16 %v2700, %v2698
    %v2767 = vpack.c.b16 %v2703, %v2701
    %v2768 = vpack.c.b16 %v2704, %v2702
    %2833 = vmatprep.subr.bf16.mxu0 %v2706
    %2834 = vmatpush1.bf16.msra.mxu0 %v2705
    %2835 = vmatprep.subr.bf16.mxu0 %v2708
    %2836 = vmatpush1.bf16.msra.mxu0 %v2707
    %2837 = vmatprep.subr.bf16.mxu0 %v2710
    %2838 = vmatpush1.bf16.msra.mxu0 %v2709
    %2839 = vmatprep.subr.bf16.mxu0 %v2712
    %2840 = vmatpush1.bf16.msra.mxu0 %v2711
    %2841 = vmatprep.subr.bf16.mxu0 %v2714
    %2842 = vmatpush1.bf16.msra.mxu0 %v2713
    %2843 = vmatprep.subr.bf16.mxu0 %v2716
    %2844 = vmatpush1.bf16.msra.mxu0 %v2715
    %2845 = vmatprep.subr.bf16.mxu0 %v2718
    %2846 = vmatpush1.bf16.msra.mxu0 %v2717
    %2847 = vmatprep.subr.bf16.mxu0 %v2720
    %2848 = vmatpush1.bf16.msra.mxu0 %v2719
    %2849 = vmatprep.subr.bf16.mxu0 %v2722
    %2850 = vmatpush1.bf16.msra.mxu0 %v2721
    %2851 = vmatprep.subr.bf16.mxu0 %v2724
    %2852 = vmatpush1.bf16.msra.mxu0 %v2723
    %2853 = vmatprep.subr.bf16.mxu0 %v2726
    %2854 = vmatpush1.bf16.msra.mxu0 %v2725
    %2855 = vmatprep.subr.bf16.mxu0 %v2728
    %2856 = vmatpush1.bf16.msra.mxu0 %v2727
    %2857 = vmatprep.subr.bf16.mxu0 %v2730
    %2858 = vmatpush1.bf16.msra.mxu0 %v2729
    %2859 = vmatprep.subr.bf16.mxu0 %v2732
    %2860 = vmatpush1.bf16.msra.mxu0 %v2731
    %2861 = vmatprep.subr.bf16.mxu0 %v2734
    %2862 = vmatpush1.bf16.msra.mxu0 %v2733
    %2863 = vmatprep.subr.bf16.mxu0 %v2736
    %2864 = vmatpush1.bf16.msra.mxu0 %v2735
    %2865 = vmatprep.mubr.bf16.mxu0 %v1174
    %2866 = vmatmul.mubr.bf16.gmra.mrb[0].mxu0 %v1173
    %v2867 = vpop.f32.mrb[0].mxu0
    %v2868 = vadd.f32 0.0, %v2867
    %v2869 = vpop.f32.mrb[0].mxu0
    %v2870 = vadd.f32 0.0, %v2869
    %v2871 = vpop.f32.mrb[0].mxu0
    %v2872 = vpop.f32.mrb[0].mxu0
    %2873 = vdwg.mxu0
    %2874 = vmatprep.subr.bf16.mxu0 %v2738
    %2875 = vmatpush1.bf16.msra.mxu0 %v2737
    %2876 = vmatprep.subr.bf16.mxu0 %v2740
    %2877 = vmatpush1.bf16.msra.mxu0 %v2739
    %2878 = vmatprep.subr.bf16.mxu0 %v2742
    %2879 = vmatpush1.bf16.msra.mxu0 %v2741
    %2880 = vmatprep.subr.bf16.mxu0 %v2744
    %2881 = vmatpush1.bf16.msra.mxu0 %v2743
    %2882 = vmatprep.subr.bf16.mxu0 %v2746
    %2883 = vmatpush1.bf16.msra.mxu0 %v2745
    %2884 = vmatprep.subr.bf16.mxu0 %v2748
    %2885 = vmatpush1.bf16.msra.mxu0 %v2747
    %2886 = vmatprep.subr.bf16.mxu0 %v2750
    %2887 = vmatpush1.bf16.msra.mxu0 %v2749
    %2888 = vmatprep.subr.bf16.mxu0 %v2752
    %2889 = vmatpush1.bf16.msra.mxu0 %v2751
    %2890 = vmatprep.subr.bf16.mxu0 %v2754
    %2891 = vmatpush1.bf16.msra.mxu0 %v2753
    %2892 = vmatprep.subr.bf16.mxu0 %v2756
    %2893 = vmatpush1.bf16.msra.mxu0 %v2755
    %2894 = vmatprep.subr.bf16.mxu0 %v2758
    %2895 = vmatpush1.bf16.msra.mxu0 %v2757
    %2896 = vmatprep.subr.bf16.mxu0 %v2760
    %2897 = vmatpush1.bf16.msra.mxu0 %v2759
    %2898 = vmatprep.subr.bf16.mxu0 %v2762
    %2899 = vmatpush1.bf16.msra.mxu0 %v2761
    %2900 = vmatprep.subr.bf16.mxu0 %v2764
    %2901 = vmatpush1.bf16.msra.mxu0 %v2763
    %2902 = vmatprep.subr.bf16.mxu0 %v2766
    %2903 = vmatpush1.bf16.msra.mxu0 %v2765
    %2904 = vmatprep.subr.bf16.mxu0 %v2768
    %2905 = vmatpush1.bf16.msra.mxu0 %v2767
    %2906 = vmatprep.mubr.bf16.mxu0 %v1176
    %2907 = vmatmul.mubr.bf16.gmra.mrb[0].mxu0 %v1175
    %v2908 = vpop.f32.mrb[0].mxu0
    %v2909 = vadd.f32 %v2868, %v2908
    %v2910 = vpop.f32.mrb[0].mxu0
    %v2911 = vadd.f32 %v2870, %v2910
    %v2912 = vpop.f32.mrb[0].mxu0
    %v2913 = vpop.f32.mrb[0].mxu0
    %2914 = vdwg.mxu0
    %v2979 = vunpack.c.l.b16 %v1389
    %v2980 = vunpack.c.h.b16 %v1389
    %v2981 = vunpack.c.l.b16 %v1390
    %v2982 = vunpack.c.h.b16 %v1390
    %v2983 = vunpack.c.l.b16 %v1391
    %v2984 = vunpack.c.h.b16 %v1391
    %v2985 = vunpack.c.l.b16 %v1392
    %v2986 = vunpack.c.h.b16 %v1392
    %v2987 = vunpack.c.l.b16 %v1393
    %v2988 = vunpack.c.h.b16 %v1393
    %v2989 = vunpack.c.l.b16 %v1394
    %v2990 = vunpack.c.h.b16 %v1394
    %v2991 = vunpack.c.l.b16 %v1395
    %v2992 = vunpack.c.h.b16 %v1395
    %v2993 = vunpack.c.l.b16 %v1396
    %v2994 = vunpack.c.h.b16 %v1396
    %v2995 = vunpack.c.l.b16 %v1397
    %v2996 = vunpack.c.h.b16 %v1397
    %v2997 = vunpack.c.l.b16 %v1398
    %v2998 = vunpack.c.h.b16 %v1398
    %v2999 = vunpack.c.l.b16 %v1399
    %v3000 = vunpack.c.h.b16 %v1399
    %v3001 = vunpack.c.l.b16 %v1400
    %v3002 = vunpack.c.h.b16 %v1400
    %v3003 = vunpack.c.l.b16 %v1401
    %v3004 = vunpack.c.h.b16 %v1401
    %v3005 = vunpack.c.l.b16 %v1402
    %v3006 = vunpack.c.h.b16 %v1402
    %v3007 = vunpack.c.l.b16 %v1403
    %v3008 = vunpack.c.h.b16 %v1403
    %v3009 = vunpack.c.l.b16 %v1404
    %v3010 = vunpack.c.h.b16 %v1404
    %v3011 = vunpack.c.l.b16 %v1405
    %v3012 = vunpack.c.h.b16 %v1405
    %v3013 = vunpack.c.l.b16 %v1406
    %v3014 = vunpack.c.h.b16 %v1406
    %v3015 = vunpack.c.l.b16 %v1407
    %v3016 = vunpack.c.h.b16 %v1407
    %v3017 = vunpack.c.l.b16 %v1408
    %v3018 = vunpack.c.h.b16 %v1408
    %v3019 = vunpack.c.l.b16 %v1409
    %v3020 = vunpack.c.h.b16 %v1409
    %v3021 = vunpack.c.l.b16 %v1410
    %v3022 = vunpack.c.h.b16 %v1410
    %v3023 = vunpack.c.l.b16 %v1411
    %v3024 = vunpack.c.h.b16 %v1411
    %v3025 = vunpack.c.l.b16 %v1412
    %v3026 = vunpack.c.h.b16 %v1412
    %v3027 = vunpack.c.l.b16 %v1413
    %v3028 = vunpack.c.h.b16 %v1413
    %v3029 = vunpack.c.l.b16 %v1414
    %v3030 = vunpack.c.h.b16 %v1414
    %v3031 = vunpack.c.l.b16 %v1415
    %v3032 = vunpack.c.h.b16 %v1415
    %v3033 = vunpack.c.l.b16 %v1416
    %v3034 = vunpack.c.h.b16 %v1416
    %v3035 = vunpack.c.l.b16 %v1417
    %v3036 = vunpack.c.h.b16 %v1417
    %v3037 = vunpack.c.l.b16 %v1418
    %v3038 = vunpack.c.h.b16 %v1418
    %v3039 = vunpack.c.l.b16 %v1419
    %v3040 = vunpack.c.h.b16 %v1419
    %v3041 = vunpack.c.l.b16 %v1420
    %v3042 = vunpack.c.h.b16 %v1420
    %v3043 = vunpack.c.l.b16 %v1421
    %v3044 = vunpack.c.h.b16 %v1421
    %v3045 = vunpack.c.l.b16 %v1422
    %v3046 = vunpack.c.h.b16 %v1422
    %v3047 = vunpack.c.l.b16 %v1423
    %v3048 = vunpack.c.h.b16 %v1423
    %v3049 = vunpack.c.l.b16 %v1424
    %v3050 = vunpack.c.h.b16 %v1424
    %v3051 = vunpack.c.l.b16 %v1425
    %v3052 = vunpack.c.h.b16 %v1425
    %v3053 = vunpack.c.l.b16 %v1426
    %v3054 = vunpack.c.h.b16 %v1426
    %v3055 = vunpack.c.l.b16 %v1427
    %v3056 = vunpack.c.h.b16 %v1427
    %v3057 = vunpack.c.l.b16 %v1428
    %v3058 = vunpack.c.h.b16 %v1428
    %v3059 = vunpack.c.l.b16 %v1429
    %v3060 = vunpack.c.h.b16 %v1429
    %v3061 = vunpack.c.l.b16 %v1430
    %v3062 = vunpack.c.h.b16 %v1430
    %v3063 = vunpack.c.l.b16 %v1431
    %v3064 = vunpack.c.h.b16 %v1431
    %v3065 = vunpack.c.l.b16 %v1432
    %v3066 = vunpack.c.h.b16 %v1432
    %v3067 = vunpack.c.l.b16 %v1433
    %v3068 = vunpack.c.h.b16 %v1433
    %v3069 = vunpack.c.l.b16 %v1434
    %v3070 = vunpack.c.h.b16 %v1434
    %v3071 = vunpack.c.l.b16 %v1435
    %v3072 = vunpack.c.h.b16 %v1435
    %v3073 = vunpack.c.l.b16 %v1436
    %v3074 = vunpack.c.h.b16 %v1436
    %v3075 = vunpack.c.l.b16 %v1437
    %v3076 = vunpack.c.h.b16 %v1437
    %v3077 = vunpack.c.l.b16 %v1438
    %v3078 = vunpack.c.h.b16 %v1438
    %v3079 = vunpack.c.l.b16 %v1439
    %v3080 = vunpack.c.h.b16 %v1439
    %v3081 = vunpack.c.l.b16 %v1440
    %v3082 = vunpack.c.h.b16 %v1440
    %v3083 = vunpack.c.l.b16 %v1441
    %v3084 = vunpack.c.h.b16 %v1441
    %v3085 = vunpack.c.l.b16 %v1442
    %v3086 = vunpack.c.h.b16 %v1442
    %v3087 = vunpack.c.l.b16 %v1443
    %v3088 = vunpack.c.h.b16 %v1443
    %v3089 = vunpack.c.l.b16 %v1444
    %v3090 = vunpack.c.h.b16 %v1444
    %v3091 = vunpack.c.l.b16 %v1445
    %v3092 = vunpack.c.h.b16 %v1445
    %v3093 = vunpack.c.l.b16 %v1446
    %v3094 = vunpack.c.h.b16 %v1446
    %v3095 = vunpack.c.l.b16 %v1447
    %v3096 = vunpack.c.h.b16 %v1447
    %v3097 = vunpack.c.l.b16 %v1448
    %v3098 = vunpack.c.h.b16 %v1448
    %v3099 = vunpack.c.l.b16 %v1449
    %v3100 = vunpack.c.h.b16 %v1449
    %v3101 = vunpack.c.l.b16 %v1450
    %v3102 = vunpack.c.h.b16 %v1450
    %v3103 = vunpack.c.l.b16 %v1451
    %v3104 = vunpack.c.h.b16 %v1451
    %v3105 = vunpack.c.l.b16 %v1452
    %v3106 = vunpack.c.h.b16 %v1452
    %v3107 = vpack.c.b16 %v2981, %v2979
    %v3108 = vpack.c.b16 %v2982, %v2980
    %v3109 = vpack.c.b16 %v2985, %v2983
    %v3110 = vpack.c.b16 %v2986, %v2984
    %v3111 = vpack.c.b16 %v2989, %v2987
    %v3112 = vpack.c.b16 %v2990, %v2988
    %v3113 = vpack.c.b16 %v2993, %v2991
    %v3114 = vpack.c.b16 %v2994, %v2992
    %v3115 = vpack.c.b16 %v2997, %v2995
    %v3116 = vpack.c.b16 %v2998, %v2996
    %v3117 = vpack.c.b16 %v3001, %v2999
    %v3118 = vpack.c.b16 %v3002, %v3000
    %v3119 = vpack.c.b16 %v3005, %v3003
    %v3120 = vpack.c.b16 %v3006, %v3004
    %v3121 = vpack.c.b16 %v3009, %v3007
    %v3122 = vpack.c.b16 %v3010, %v3008
    %v3123 = vpack.c.b16 %v3013, %v3011
    %v3124 = vpack.c.b16 %v3014, %v3012
    %v3125 = vpack.c.b16 %v3017, %v3015
    %v3126 = vpack.c.b16 %v3018, %v3016
    %v3127 = vpack.c.b16 %v3021, %v3019
    %v3128 = vpack.c.b16 %v3022, %v3020
    %v3129 = vpack.c.b16 %v3025, %v3023
    %v3130 = vpack.c.b16 %v3026, %v3024
    %v3131 = vpack.c.b16 %v3029, %v3027
    %v3132 = vpack.c.b16 %v3030, %v3028
    %v3133 = vpack.c.b16 %v3033, %v3031
    %v3134 = vpack.c.b16 %v3034, %v3032
    %v3135 = vpack.c.b16 %v3037, %v3035
    %v3136 = vpack.c.b16 %v3038, %v3036
    %v3137 = vpack.c.b16 %v3041, %v3039
    %v3138 = vpack.c.b16 %v3042, %v3040
    %v3139 = vpack.c.b16 %v3045, %v3043
    %v3140 = vpack.c.b16 %v3046, %v3044
    %v3141 = vpack.c.b16 %v3049, %v3047
    %v3142 = vpack.c.b16 %v3050, %v3048
    %v3143 = vpack.c.b16 %v3053, %v3051
    %v3144 = vpack.c.b16 %v3054, %v3052
    %v3145 = vpack.c.b16 %v3057, %v3055
    %v3146 = vpack.c.b16 %v3058, %v3056
    %v3147 = vpack.c.b16 %v3061, %v3059
    %v3148 = vpack.c.b16 %v3062, %v3060
    %v3149 = vpack.c.b16 %v3065, %v3063
    %v3150 = vpack.c.b16 %v3066, %v3064
    %v3151 = vpack.c.b16 %v3069, %v3067
    %v3152 = vpack.c.b16 %v3070, %v3068
    %v3153 = vpack.c.b16 %v3073, %v3071
    %v3154 = vpack.c.b16 %v3074, %v3072
    %v3155 = vpack.c.b16 %v3077, %v3075
    %v3156 = vpack.c.b16 %v3078, %v3076
    %v3157 = vpack.c.b16 %v3081, %v3079
    %v3158 = vpack.c.b16 %v3082, %v3080
    %v3159 = vpack.c.b16 %v3085, %v3083
    %v3160 = vpack.c.b16 %v3086, %v3084
    %v3161 = vpack.c.b16 %v3089, %v3087
    %v3162 = vpack.c.b16 %v3090, %v3088
    %v3163 = vpack.c.b16 %v3093, %v3091
    %v3164 = vpack.c.b16 %v3094, %v3092
    %v3165 = vpack.c.b16 %v3097, %v3095
    %v3166 = vpack.c.b16 %v3098, %v3096
    %v3167 = vpack.c.b16 %v3101, %v3099
    %v3168 = vpack.c.b16 %v3102, %v3100
    %v3169 = vpack.c.b16 %v3105, %v3103
    %v3170 = vpack.c.b16 %v3106, %v3104
    %3235 = vmatprep.subr.bf16.mxu0 %v3108
    %3236 = vmatpush1.bf16.msra.mxu0 %v3107
    %3237 = vmatprep.subr.bf16.mxu0 %v3110
    %3238 = vmatpush1.bf16.msra.mxu0 %v3109
    %3239 = vmatprep.subr.bf16.mxu0 %v3112
    %3240 = vmatpush1.bf16.msra.mxu0 %v3111
    %3241 = vmatprep.subr.bf16.mxu0 %v3114
    %3242 = vmatpush1.bf16.msra.mxu0 %v3113
    %3243 = vmatprep.subr.bf16.mxu0 %v3116
    %3244 = vmatpush1.bf16.msra.mxu0 %v3115
    %3245 = vmatprep.subr.bf16.mxu0 %v3118
    %3246 = vmatpush1.bf16.msra.mxu0 %v3117
    %3247 = vmatprep.subr.bf16.mxu0 %v3120
    %3248 = vmatpush1.bf16.msra.mxu0 %v3119
    %3249 = vmatprep.subr.bf16.mxu0 %v3122
    %3250 = vmatpush1.bf16.msra.mxu0 %v3121
    %3251 = vmatprep.subr.bf16.mxu0 %v3124
    %3252 = vmatpush1.bf16.msra.mxu0 %v3123
    %3253 = vmatprep.subr.bf16.mxu0 %v3126
    %3254 = vmatpush1.bf16.msra.mxu0 %v3125
    %3255 = vmatprep.subr.bf16.mxu0 %v3128
    %3256 = vmatpush1.bf16.msra.mxu0 %v3127
    %3257 = vmatprep.subr.bf16.mxu0 %v3130
    %3258 = vmatpush1.bf16.msra.mxu0 %v3129
    %3259 = vmatprep.subr.bf16.mxu0 %v3132
    %3260 = vmatpush1.bf16.msra.mxu0 %v3131
    %3261 = vmatprep.subr.bf16.mxu0 %v3134
    %3262 = vmatpush1.bf16.msra.mxu0 %v3133
    %3263 = vmatprep.subr.bf16.mxu0 %v3136
    %3264 = vmatpush1.bf16.msra.mxu0 %v3135
    %3265 = vmatprep.subr.bf16.mxu0 %v3138
    %3266 = vmatpush1.bf16.msra.mxu0 %v3137
    %3267 = vmatprep.mubr.bf16.mxu0 %v1178
    %3268 = vmatmul.mubr.bf16.gmra.mrb[0].mxu0 %v1177
    %v3269 = vpop.f32.mrb[0].mxu0
    %v3270 = vadd.f32 0.0, %v3269
    %v3271 = vpop.f32.mrb[0].mxu0
    %v3272 = vadd.f32 0.0, %v3271
    %v3273 = vpop.f32.mrb[0].mxu0
    %v3274 = vpop.f32.mrb[0].mxu0
    %3275 = vdwg.mxu0
    %3276 = vmatprep.subr.bf16.mxu0 %v3140
    %3277 = vmatpush1.bf16.msra.mxu0 %v3139
    %3278 = vmatprep.subr.bf16.mxu0 %v3142
    %3279 = vmatpush1.bf16.msra.mxu0 %v3141
    %3280 = vmatprep.subr.bf16.mxu0 %v3144
    %3281 = vmatpush1.bf16.msra.mxu0 %v3143
    %3282 = vmatprep.subr.bf16.mxu0 %v3146
    %3283 = vmatpush1.bf16.msra.mxu0 %v3145
    %3284 = vmatprep.subr.bf16.mxu0 %v3148
    %3285 = vmatpush1.bf16.msra.mxu0 %v3147
    %3286 = vmatprep.subr.bf16.mxu0 %v3150
    %3287 = vmatpush1.bf16.msra.mxu0 %v3149
    %3288 = vmatprep.subr.bf16.mxu0 %v3152
    %3289 = vmatpush1.bf16.msra.mxu0 %v3151
    %3290 = vmatprep.subr.bf16.mxu0 %v3154
    %3291 = vmatpush1.bf16.msra.mxu0 %v3153
    %3292 = vmatprep.subr.bf16.mxu0 %v3156
    %3293 = vmatpush1.bf16.msra.mxu0 %v3155
    %3294 = vmatprep.subr.bf16.mxu0 %v3158
    %3295 = vmatpush1.bf16.msra.mxu0 %v3157
    %3296 = vmatprep.subr.bf16.mxu0 %v3160
    %3297 = vmatpush1.bf16.msra.mxu0 %v3159
    %3298 = vmatprep.subr.bf16.mxu0 %v3162
    %3299 = vmatpush1.bf16.msra.mxu0 %v3161
    %3300 = vmatprep.subr.bf16.mxu0 %v3164
    %3301 = vmatpush1.bf16.msra.mxu0 %v3163
    %3302 = vmatprep.subr.bf16.mxu0 %v3166
    %3303 = vmatpush1.bf16.msra.mxu0 %v3165
    %3304 = vmatprep.subr.bf16.mxu0 %v3168
    %3305 = vmatpush1.bf16.msra.mxu0 %v3167
    %3306 = vmatprep.subr.bf16.mxu0 %v3170
    %3307 = vmatpush1.bf16.msra.mxu0 %v3169
    %3308 = vmatprep.mubr.bf16.mxu0 %v1180
    %3309 = vmatmul.mubr.bf16.gmra.mrb[0].mxu0 %v1179
    %v3310 = vpop.f32.mrb[0].mxu0
    %v3311 = vadd.f32 %v3270, %v3310
    %v3312 = vpop.f32.mrb[0].mxu0
    %v3313 = vadd.f32 %v3272, %v3312
    %v3314 = vpop.f32.mrb[0].mxu0
    %v3315 = vpop.f32.mrb[0].mxu0
    %3316 = vdwg.mxu0
    %v3381 = vunpack.c.l.b16 %v1453
    %v3382 = vunpack.c.h.b16 %v1453
    %v3383 = vunpack.c.l.b16 %v1454
    %v3384 = vunpack.c.h.b16 %v1454
    %v3385 = vunpack.c.l.b16 %v1455
    %v3386 = vunpack.c.h.b16 %v1455
    %v3387 = vunpack.c.l.b16 %v1456
    %v3388 = vunpack.c.h.b16 %v1456
    %v3389 = vunpack.c.l.b16 %v1457
    %v3390 = vunpack.c.h.b16 %v1457
    %v3391 = vunpack.c.l.b16 %v1458
    %v3392 = vunpack.c.h.b16 %v1458
    %v3393 = vunpack.c.l.b16 %v1459
    %v3394 = vunpack.c.h.b16 %v1459
    %v3395 = vunpack.c.l.b16 %v1460
    %v3396 = vunpack.c.h.b16 %v1460
    %v3397 = vunpack.c.l.b16 %v1461
    %v3398 = vunpack.c.h.b16 %v1461
    %v3399 = vunpack.c.l.b16 %v1462
    %v3400 = vunpack.c.h.b16 %v1462
    %v3401 = vunpack.c.l.b16 %v1463
    %v3402 = vunpack.c.h.b16 %v1463
    %v3403 = vunpack.c.l.b16 %v1464
    %v3404 = vunpack.c.h.b16 %v1464
    %v3405 = vunpack.c.l.b16 %v1465
    %v3406 = vunpack.c.h.b16 %v1465
    %v3407 = vunpack.c.l.b16 %v1466
    %v3408 = vunpack.c.h.b16 %v1466
    %v3409 = vunpack.c.l.b16 %v1467
    %v3410 = vunpack.c.h.b16 %v1467
    %v3411 = vunpack.c.l.b16 %v1468
    %v3412 = vunpack.c.h.b16 %v1468
    %v3413 = vunpack.c.l.b16 %v1469
    %v3414 = vunpack.c.h.b16 %v1469
    %v3415 = vunpack.c.l.b16 %v1470
    %v3416 = vunpack.c.h.b16 %v1470
    %v3417 = vunpack.c.l.b16 %v1471
    %v3418 = vunpack.c.h.b16 %v1471
    %v3419 = vunpack.c.l.b16 %v1472
    %v3420 = vunpack.c.h.b16 %v1472
    %v3421 = vunpack.c.l.b16 %v1473
    %v3422 = vunpack.c.h.b16 %v1473
    %v3423 = vunpack.c.l.b16 %v1474
    %v3424 = vunpack.c.h.b16 %v1474
    %v3425 = vunpack.c.l.b16 %v1475
    %v3426 = vunpack.c.h.b16 %v1475
    %v3427 = vunpack.c.l.b16 %v1476
    %v3428 = vunpack.c.h.b16 %v1476
    %v3429 = vunpack.c.l.b16 %v1477
    %v3430 = vunpack.c.h.b16 %v1477
    %v3431 = vunpack.c.l.b16 %v1478
    %v3432 = vunpack.c.h.b16 %v1478
    %v3433 = vunpack.c.l.b16 %v1479
    %v3434 = vunpack.c.h.b16 %v1479
    %v3435 = vunpack.c.l.b16 %v1480
    %v3436 = vunpack.c.h.b16 %v1480
    %v3437 = vunpack.c.l.b16 %v1481
    %v3438 = vunpack.c.h.b16 %v1481
    %v3439 = vunpack.c.l.b16 %v1482
    %v3440 = vunpack.c.h.b16 %v1482
    %v3441 = vunpack.c.l.b16 %v1483
    %v3442 = vunpack.c.h.b16 %v1483
    %v3443 = vunpack.c.l.b16 %v1484
    %v3444 = vunpack.c.h.b16 %v1484
    %v3445 = vunpack.c.l.b16 %v1485
    %v3446 = vunpack.c.h.b16 %v1485
    %v3447 = vunpack.c.l.b16 %v1486
    %v3448 = vunpack.c.h.b16 %v1486
    %v3449 = vunpack.c.l.b16 %v1487
    %v3450 = vunpack.c.h.b16 %v1487
    %v3451 = vunpack.c.l.b16 %v1488
    %v3452 = vunpack.c.h.b16 %v1488
    %v3453 = vunpack.c.l.b16 %v1489
    %v3454 = vunpack.c.h.b16 %v1489
    %v3455 = vunpack.c.l.b16 %v1490
    %v3456 = vunpack.c.h.b16 %v1490
    %v3457 = vunpack.c.l.b16 %v1491
    %v3458 = vunpack.c.h.b16 %v1491
    %v3459 = vunpack.c.l.b16 %v1492
    %v3460 = vunpack.c.h.b16 %v1492
    %v3461 = vunpack.c.l.b16 %v1493
    %v3462 = vunpack.c.h.b16 %v1493
    %v3463 = vunpack.c.l.b16 %v1494
    %v3464 = vunpack.c.h.b16 %v1494
    %v3465 = vunpack.c.l.b16 %v1495
    %v3466 = vunpack.c.h.b16 %v1495
    %v3467 = vunpack.c.l.b16 %v1496
    %v3468 = vunpack.c.h.b16 %v1496
    %v3469 = vunpack.c.l.b16 %v1497
    %v3470 = vunpack.c.h.b16 %v1497
    %v3471 = vunpack.c.l.b16 %v1498
    %v3472 = vunpack.c.h.b16 %v1498
    %v3473 = vunpack.c.l.b16 %v1499
    %v3474 = vunpack.c.h.b16 %v1499
    %v3475 = vunpack.c.l.b16 %v1500
    %v3476 = vunpack.c.h.b16 %v1500
    %v3477 = vunpack.c.l.b16 %v1501
    %v3478 = vunpack.c.h.b16 %v1501
    %v3479 = vunpack.c.l.b16 %v1502
    %v3480 = vunpack.c.h.b16 %v1502
    %v3481 = vunpack.c.l.b16 %v1503
    %v3482 = vunpack.c.h.b16 %v1503
    %v3483 = vunpack.c.l.b16 %v1504
    %v3484 = vunpack.c.h.b16 %v1504
    %v3485 = vunpack.c.l.b16 %v1505
    %v3486 = vunpack.c.h.b16 %v1505
    %v3487 = vunpack.c.l.b16 %v1506
    %v3488 = vunpack.c.h.b16 %v1506
    %v3489 = vunpack.c.l.b16 %v1507
    %v3490 = vunpack.c.h.b16 %v1507
    %v3491 = vunpack.c.l.b16 %v1508
    %v3492 = vunpack.c.h.b16 %v1508
    %v3493 = vunpack.c.l.b16 %v1509
    %v3494 = vunpack.c.h.b16 %v1509
    %v3495 = vunpack.c.l.b16 %v1510
    %v3496 = vunpack.c.h.b16 %v1510
    %v3497 = vunpack.c.l.b16 %v1511
    %v3498 = vunpack.c.h.b16 %v1511
    %v3499 = vunpack.c.l.b16 %v1512
    %v3500 = vunpack.c.h.b16 %v1512
    %v3501 = vunpack.c.l.b16 %v1513
    %v3502 = vunpack.c.h.b16 %v1513
    %v3503 = vunpack.c.l.b16 %v1514
    %v3504 = vunpack.c.h.b16 %v1514
    %v3505 = vunpack.c.l.b16 %v1515
    %v3506 = vunpack.c.h.b16 %v1515
    %v3507 = vunpack.c.l.b16 %v1516
    %v3508 = vunpack.c.h.b16 %v1516
    %v3509 = vpack.c.b16 %v3383, %v3381
    %v3510 = vpack.c.b16 %v3384, %v3382
    %v3511 = vpack.c.b16 %v3387, %v3385
    %v3512 = vpack.c.b16 %v3388, %v3386
    %v3513 = vpack.c.b16 %v3391, %v3389
    %v3514 = vpack.c.b16 %v3392, %v3390
    %v3515 = vpack.c.b16 %v3395, %v3393
    %v3516 = vpack.c.b16 %v3396, %v3394
    %v3517 = vpack.c.b16 %v3399, %v3397
    %v3518 = vpack.c.b16 %v3400, %v3398
    %v3519 = vpack.c.b16 %v3403, %v3401
    %v3520 = vpack.c.b16 %v3404, %v3402
    %v3521 = vpack.c.b16 %v3407, %v3405
    %v3522 = vpack.c.b16 %v3408, %v3406
    %v3523 = vpack.c.b16 %v3411, %v3409
    %v3524 = vpack.c.b16 %v3412, %v3410
    %v3525 = vpack.c.b16 %v3415, %v3413
    %v3526 = vpack.c.b16 %v3416, %v3414
    %v3527 = vpack.c.b16 %v3419, %v3417
    %v3528 = vpack.c.b16 %v3420, %v3418
    %v3529 = vpack.c.b16 %v3423, %v3421
    %v3530 = vpack.c.b16 %v3424, %v3422
    %v3531 = vpack.c.b16 %v3427, %v3425
    %v3532 = vpack.c.b16 %v3428, %v3426
    %v3533 = vpack.c.b16 %v3431, %v3429
    %v3534 = vpack.c.b16 %v3432, %v3430
    %v3535 = vpack.c.b16 %v3435, %v3433
    %v3536 = vpack.c.b16 %v3436, %v3434
    %v3537 = vpack.c.b16 %v3439, %v3437
    %v3538 = vpack.c.b16 %v3440, %v3438
    %v3539 = vpack.c.b16 %v3443, %v3441
    %v3540 = vpack.c.b16 %v3444, %v3442
    %v3541 = vpack.c.b16 %v3447, %v3445
    %v3542 = vpack.c.b16 %v3448, %v3446
    %v3543 = vpack.c.b16 %v3451, %v3449
    %v3544 = vpack.c.b16 %v3452, %v3450
    %v3545 = vpack.c.b16 %v3455, %v3453
    %v3546 = vpack.c.b16 %v3456, %v3454
    %v3547 = vpack.c.b16 %v3459, %v3457
    %v3548 = vpack.c.b16 %v3460, %v3458
    %v3549 = vpack.c.b16 %v3463, %v3461
    %v3550 = vpack.c.b16 %v3464, %v3462
    %v3551 = vpack.c.b16 %v3467, %v3465
    %v3552 = vpack.c.b16 %v3468, %v3466
    %v3553 = vpack.c.b16 %v3471, %v3469
    %v3554 = vpack.c.b16 %v3472, %v3470
    %v3555 = vpack.c.b16 %v3475, %v3473
    %v3556 = vpack.c.b16 %v3476, %v3474
    %v3557 = vpack.c.b16 %v3479, %v3477
    %v3558 = vpack.c.b16 %v3480, %v3478
    %v3559 = vpack.c.b16 %v3483, %v3481
    %v3560 = vpack.c.b16 %v3484, %v3482
    %v3561 = vpack.c.b16 %v3487, %v3485
    %v3562 = vpack.c.b16 %v3488, %v3486
    %v3563 = vpack.c.b16 %v3491, %v3489
    %v3564 = vpack.c.b16 %v3492, %v3490
    %v3565 = vpack.c.b16 %v3495, %v3493
    %v3566 = vpack.c.b16 %v3496, %v3494
    %v3567 = vpack.c.b16 %v3499, %v3497
    %v3568 = vpack.c.b16 %v3500, %v3498
    %v3569 = vpack.c.b16 %v3503, %v3501
    %v3570 = vpack.c.b16 %v3504, %v3502
    %v3571 = vpack.c.b16 %v3507, %v3505
    %v3572 = vpack.c.b16 %v3508, %v3506
    %3637 = vmatprep.subr.bf16.mxu0 %v3510
    %3638 = vmatpush1.bf16.msra.mxu0 %v3509
    %3639 = vmatprep.subr.bf16.mxu0 %v3512
    %3640 = vmatpush1.bf16.msra.mxu0 %v3511
    %3641 = vmatprep.subr.bf16.mxu0 %v3514
    %3642 = vmatpush1.bf16.msra.mxu0 %v3513
    %3643 = vmatprep.subr.bf16.mxu0 %v3516
    %3644 = vmatpush1.bf16.msra.mxu0 %v3515
    %3645 = vmatprep.subr.bf16.mxu0 %v3518
    %3646 = vmatpush1.bf16.msra.mxu0 %v3517
    %3647 = vmatprep.subr.bf16.mxu0 %v3520
    %3648 = vmatpush1.bf16.msra.mxu0 %v3519
    %3649 = vmatprep.subr.bf16.mxu0 %v3522
    %3650 = vmatpush1.bf16.msra.mxu0 %v3521
    %3651 = vmatprep.subr.bf16.mxu0 %v3524
    %3652 = vmatpush1.bf16.msra.mxu0 %v3523
    %3653 = vmatprep.subr.bf16.mxu0 %v3526
    %3654 = vmatpush1.bf16.msra.mxu0 %v3525
    %3655 = vmatprep.subr.bf16.mxu0 %v3528
    %3656 = vmatpush1.bf16.msra.mxu0 %v3527
    %3657 = vmatprep.subr.bf16.mxu0 %v3530
    %3658 = vmatpush1.bf16.msra.mxu0 %v3529
    %3659 = vmatprep.subr.bf16.mxu0 %v3532
    %3660 = vmatpush1.bf16.msra.mxu0 %v3531
    %3661 = vmatprep.subr.bf16.mxu0 %v3534
    %3662 = vmatpush1.bf16.msra.mxu0 %v3533
    %3663 = vmatprep.subr.bf16.mxu0 %v3536
    %3664 = vmatpush1.bf16.msra.mxu0 %v3535
    %3665 = vmatprep.subr.bf16.mxu0 %v3538
    %3666 = vmatpush1.bf16.msra.mxu0 %v3537
    %3667 = vmatprep.subr.bf16.mxu0 %v3540
    %3668 = vmatpush1.bf16.msra.mxu0 %v3539
    %3669 = vmatprep.mubr.bf16.mxu0 %v1182
    %3670 = vmatmul.mubr.bf16.gmra.mrb[0].mxu0 %v1181
    %v3671 = vpop.f32.mrb[0].mxu0
    %v3672 = vadd.f32 0.0, %v3671
    %v3673 = vpop.f32.mrb[0].mxu0
    %v3674 = vadd.f32 0.0, %v3673
    %v3675 = vpop.f32.mrb[0].mxu0
    %v3676 = vpop.f32.mrb[0].mxu0
    %3677 = vdwg.mxu0
    %3678 = vmatprep.subr.bf16.mxu0 %v3542
    %3679 = vmatpush1.bf16.msra.mxu0 %v3541
    %3680 = vmatprep.subr.bf16.mxu0 %v3544
    %3681 = vmatpush1.bf16.msra.mxu0 %v3543
    %3682 = vmatprep.subr.bf16.mxu0 %v3546
    %3683 = vmatpush1.bf16.msra.mxu0 %v3545
    %3684 = vmatprep.subr.bf16.mxu0 %v3548
    %3685 = vmatpush1.bf16.msra.mxu0 %v3547
    %3686 = vmatprep.subr.bf16.mxu0 %v3550
    %3687 = vmatpush1.bf16.msra.mxu0 %v3549
    %3688 = vmatprep.subr.bf16.mxu0 %v3552
    %3689 = vmatpush1.bf16.msra.mxu0 %v3551
    %3690 = vmatprep.subr.bf16.mxu0 %v3554
    %3691 = vmatpush1.bf16.msra.mxu0 %v3553
    %3692 = vmatprep.subr.bf16.mxu0 %v3556
    %3693 = vmatpush1.bf16.msra.mxu0 %v3555
    %3694 = vmatprep.subr.bf16.mxu0 %v3558
    %3695 = vmatpush1.bf16.msra.mxu0 %v3557
    %3696 = vmatprep.subr.bf16.mxu0 %v3560
    %3697 = vmatpush1.bf16.msra.mxu0 %v3559
    %3698 = vmatprep.subr.bf16.mxu0 %v3562
    %3699 = vmatpush1.bf16.msra.mxu0 %v3561
    %3700 = vmatprep.subr.bf16.mxu0 %v3564
    %3701 = vmatpush1.bf16.msra.mxu0 %v3563
    %3702 = vmatprep.subr.bf16.mxu0 %v3566
    %3703 = vmatpush1.bf16.msra.mxu0 %v3565
    %3704 = vmatprep.subr.bf16.mxu0 %v3568
    %3705 = vmatpush1.bf16.msra.mxu0 %v3567
    %3706 = vmatprep.subr.bf16.mxu0 %v3570
    %3707 = vmatpush1.bf16.msra.mxu0 %v3569
    %3708 = vmatprep.subr.bf16.mxu0 %v3572
    %3709 = vmatpush1.bf16.msra.mxu0 %v3571
    %3710 = vmatprep.mubr.bf16.mxu0 %v1184
    %3711 = vmatmul.mubr.bf16.gmra.mrb[0].mxu0 %v1183
    %v3712 = vpop.f32.mrb[0].mxu0
    %v3713 = vadd.f32 %v3672, %v3712
    %v3714 = vpop.f32.mrb[0].mxu0
    %v3715 = vadd.f32 %v3674, %v3714
    %v3716 = vpop.f32.mrb[0].mxu0
    %v3717 = vpop.f32.mrb[0].mxu0
    %3718 = vdwg.mxu0
    %v3783 = vunpack.c.l.b16 %v1517
    %v3784 = vunpack.c.h.b16 %v1517
    %v3785 = vunpack.c.l.b16 %v1518
    %v3786 = vunpack.c.h.b16 %v1518
    %v3787 = vunpack.c.l.b16 %v1519
    %v3788 = vunpack.c.h.b16 %v1519
    %v3789 = vunpack.c.l.b16 %v1520
    %v3790 = vunpack.c.h.b16 %v1520
    %v3791 = vunpack.c.l.b16 %v1521
    %v3792 = vunpack.c.h.b16 %v1521
    %v3793 = vunpack.c.l.b16 %v1522
    %v3794 = vunpack.c.h.b16 %v1522
    %v3795 = vunpack.c.l.b16 %v1523
    %v3796 = vunpack.c.h.b16 %v1523
    %v3797 = vunpack.c.l.b16 %v1524
    %v3798 = vunpack.c.h.b16 %v1524
    %v3799 = vunpack.c.l.b16 %v1525
    %v3800 = vunpack.c.h.b16 %v1525
    %v3801 = vunpack.c.l.b16 %v1526
    %v3802 = vunpack.c.h.b16 %v1526
    %v3803 = vunpack.c.l.b16 %v1527
    %v3804 = vunpack.c.h.b16 %v1527
    %v3805 = vunpack.c.l.b16 %v1528
    %v3806 = vunpack.c.h.b16 %v1528
    %v3807 = vunpack.c.l.b16 %v1529
    %v3808 = vunpack.c.h.b16 %v1529
    %v3809 = vunpack.c.l.b16 %v1530
    %v3810 = vunpack.c.h.b16 %v1530
    %v3811 = vunpack.c.l.b16 %v1531
    %v3812 = vunpack.c.h.b16 %v1531
    %v3813 = vunpack.c.l.b16 %v1532
    %v3814 = vunpack.c.h.b16 %v1532
    %v3815 = vunpack.c.l.b16 %v1533
    %v3816 = vunpack.c.h.b16 %v1533
    %v3817 = vunpack.c.l.b16 %v1534
    %v3818 = vunpack.c.h.b16 %v1534
    %v3819 = vunpack.c.l.b16 %v1535
    %v3820 = vunpack.c.h.b16 %v1535
    %v3821 = vunpack.c.l.b16 %v1536
    %v3822 = vunpack.c.h.b16 %v1536
    %v3823 = vunpack.c.l.b16 %v1537
    %v3824 = vunpack.c.h.b16 %v1537
    %v3825 = vunpack.c.l.b16 %v1538
    %v3826 = vunpack.c.h.b16 %v1538
    %v3827 = vunpack.c.l.b16 %v1539
    %v3828 = vunpack.c.h.b16 %v1539
    %v3829 = vunpack.c.l.b16 %v1540
    %v3830 = vunpack.c.h.b16 %v1540
    %v3831 = vunpack.c.l.b16 %v1541
    %v3832 = vunpack.c.h.b16 %v1541
    %v3833 = vunpack.c.l.b16 %v1542
    %v3834 = vunpack.c.h.b16 %v1542
    %v3835 = vunpack.c.l.b16 %v1543
    %v3836 = vunpack.c.h.b16 %v1543
    %v3837 = vunpack.c.l.b16 %v1544
    %v3838 = vunpack.c.h.b16 %v1544
    %v3839 = vunpack.c.l.b16 %v1545
    %v3840 = vunpack.c.h.b16 %v1545
    %v3841 = vunpack.c.l.b16 %v1546
    %v3842 = vunpack.c.h.b16 %v1546
    %v3843 = vunpack.c.l.b16 %v1547
    %v3844 = vunpack.c.h.b16 %v1547
    %v3845 = vunpack.c.l.b16 %v1548
    %v3846 = vunpack.c.h.b16 %v1548
    %v3847 = vunpack.c.l.b16 %v1549
    %v3848 = vunpack.c.h.b16 %v1549
    %v3849 = vunpack.c.l.b16 %v1550
    %v3850 = vunpack.c.h.b16 %v1550
    %v3851 = vunpack.c.l.b16 %v1551
    %v3852 = vunpack.c.h.b16 %v1551
    %v3853 = vunpack.c.l.b16 %v1552
    %v3854 = vunpack.c.h.b16 %v1552
    %v3855 = vunpack.c.l.b16 %v1553
    %v3856 = vunpack.c.h.b16 %v1553
    %v3857 = vunpack.c.l.b16 %v1554
    %v3858 = vunpack.c.h.b16 %v1554
    %v3859 = vunpack.c.l.b16 %v1555
    %v3860 = vunpack.c.h.b16 %v1555
    %v3861 = vunpack.c.l.b16 %v1556
    %v3862 = vunpack.c.h.b16 %v1556
    %v3863 = vunpack.c.l.b16 %v1557
    %v3864 = vunpack.c.h.b16 %v1557
    %v3865 = vunpack.c.l.b16 %v1558
    %v3866 = vunpack.c.h.b16 %v1558
    %v3867 = vunpack.c.l.b16 %v1559
    %v3868 = vunpack.c.h.b16 %v1559
    %v3869 = vunpack.c.l.b16 %v1560
    %v3870 = vunpack.c.h.b16 %v1560
    %v3871 = vunpack.c.l.b16 %v1561
    %v3872 = vunpack.c.h.b16 %v1561
    %v3873 = vunpack.c.l.b16 %v1562
    %v3874 = vunpack.c.h.b16 %v1562
    %v3875 = vunpack.c.l.b16 %v1563
    %v3876 = vunpack.c.h.b16 %v1563
    %v3877 = vunpack.c.l.b16 %v1564
    %v3878 = vunpack.c.h.b16 %v1564
    %v3879 = vunpack.c.l.b16 %v1565
    %v3880 = vunpack.c.h.b16 %v1565
    %v3881 = vunpack.c.l.b16 %v1566
    %v3882 = vunpack.c.h.b16 %v1566
    %v3883 = vunpack.c.l.b16 %v1567
    %v3884 = vunpack.c.h.b16 %v1567
    %v3885 = vunpack.c.l.b16 %v1568
    %v3886 = vunpack.c.h.b16 %v1568
    %v3887 = vunpack.c.l.b16 %v1569
    %v3888 = vunpack.c.h.b16 %v1569
    %v3889 = vunpack.c.l.b16 %v1570
    %v3890 = vunpack.c.h.b16 %v1570
    %v3891 = vunpack.c.l.b16 %v1571
    %v3892 = vunpack.c.h.b16 %v1571
    %v3893 = vunpack.c.l.b16 %v1572
    %v3894 = vunpack.c.h.b16 %v1572
    %v3895 = vunpack.c.l.b16 %v1573
    %v3896 = vunpack.c.h.b16 %v1573
    %v3897 = vunpack.c.l.b16 %v1574
    %v3898 = vunpack.c.h.b16 %v1574
    %v3899 = vunpack.c.l.b16 %v1575
    %v3900 = vunpack.c.h.b16 %v1575
    %v3901 = vunpack.c.l.b16 %v1576
    %v3902 = vunpack.c.h.b16 %v1576
    %v3903 = vunpack.c.l.b16 %v1577
    %v3904 = vunpack.c.h.b16 %v1577
    %v3905 = vunpack.c.l.b16 %v1578
    %v3906 = vunpack.c.h.b16 %v1578
    %v3907 = vunpack.c.l.b16 %v1579
    %v3908 = vunpack.c.h.b16 %v1579
    %v3909 = vunpack.c.l.b16 %v1580
    %v3910 = vunpack.c.h.b16 %v1580
    %v3911 = vpack.c.b16 %v3785, %v3783
    %v3912 = vpack.c.b16 %v3786, %v3784
    %v3913 = vpack.c.b16 %v3789, %v3787
    %v3914 = vpack.c.b16 %v3790, %v3788
    %v3915 = vpack.c.b16 %v3793, %v3791
    %v3916 = vpack.c.b16 %v3794, %v3792
    %v3917 = vpack.c.b16 %v3797, %v3795
    %v3918 = vpack.c.b16 %v3798, %v3796
    %v3919 = vpack.c.b16 %v3801, %v3799
    %v3920 = vpack.c.b16 %v3802, %v3800
    %v3921 = vpack.c.b16 %v3805, %v3803
    %v3922 = vpack.c.b16 %v3806, %v3804
    %v3923 = vpack.c.b16 %v3809, %v3807
    %v3924 = vpack.c.b16 %v3810, %v3808
    %v3925 = vpack.c.b16 %v3813, %v3811
    %v3926 = vpack.c.b16 %v3814, %v3812
    %v3927 = vpack.c.b16 %v3817, %v3815
    %v3928 = vpack.c.b16 %v3818, %v3816
    %v3929 = vpack.c.b16 %v3821, %v3819
    %v3930 = vpack.c.b16 %v3822, %v3820
    %v3931 = vpack.c.b16 %v3825, %v3823
    %v3932 = vpack.c.b16 %v3826, %v3824
    %v3933 = vpack.c.b16 %v3829, %v3827
    %v3934 = vpack.c.b16 %v3830, %v3828
    %v3935 = vpack.c.b16 %v3833, %v3831
    %v3936 = vpack.c.b16 %v3834, %v3832
    %v3937 = vpack.c.b16 %v3837, %v3835
    %v3938 = vpack.c.b16 %v3838, %v3836
    %v3939 = vpack.c.b16 %v3841, %v3839
    %v3940 = vpack.c.b16 %v3842, %v3840
    %v3941 = vpack.c.b16 %v3845, %v3843
    %v3942 = vpack.c.b16 %v3846, %v3844
    %v3943 = vpack.c.b16 %v3849, %v3847
    %v3944 = vpack.c.b16 %v3850, %v3848
    %v3945 = vpack.c.b16 %v3853, %v3851
    %v3946 = vpack.c.b16 %v3854, %v3852
    %v3947 = vpack.c.b16 %v3857, %v3855
    %v3948 = vpack.c.b16 %v3858, %v3856
    %v3949 = vpack.c.b16 %v3861, %v3859
    %v3950 = vpack.c.b16 %v3862, %v3860
    %v3951 = vpack.c.b16 %v3865, %v3863
    %v3952 = vpack.c.b16 %v3866, %v3864
    %v3953 = vpack.c.b16 %v3869, %v3867
    %v3954 = vpack.c.b16 %v3870, %v3868
    %v3955 = vpack.c.b16 %v3873, %v3871
    %v3956 = vpack.c.b16 %v3874, %v3872
    %v3957 = vpack.c.b16 %v3877, %v3875
    %v3958 = vpack.c.b16 %v3878, %v3876
    %v3959 = vpack.c.b16 %v3881, %v3879
    %v3960 = vpack.c.b16 %v3882, %v3880
    %v3961 = vpack.c.b16 %v3885, %v3883
    %v3962 = vpack.c.b16 %v3886, %v3884
    %v3963 = vpack.c.b16 %v3889, %v3887
    %v3964 = vpack.c.b16 %v3890, %v3888
    %v3965 = vpack.c.b16 %v3893, %v3891
    %v3966 = vpack.c.b16 %v3894, %v3892
    %v3967 = vpack.c.b16 %v3897, %v3895
    %v3968 = vpack.c.b16 %v3898, %v3896
    %v3969 = vpack.c.b16 %v3901, %v3899
    %v3970 = vpack.c.b16 %v3902, %v3900
    %v3971 = vpack.c.b16 %v3905, %v3903
    %v3972 = vpack.c.b16 %v3906, %v3904
    %v3973 = vpack.c.b16 %v3909, %v3907
    %v3974 = vpack.c.b16 %v3910, %v3908
    %4039 = vmatprep.subr.bf16.mxu0 %v3912
    %4040 = vmatpush1.bf16.msra.mxu0 %v3911
    %4041 = vmatprep.subr.bf16.mxu0 %v3914
    %4042 = vmatpush1.bf16.msra.mxu0 %v3913
    %4043 = vmatprep.subr.bf16.mxu0 %v3916
    %4044 = vmatpush1.bf16.msra.mxu0 %v3915
    %4045 = vmatprep.subr.bf16.mxu0 %v3918
    %4046 = vmatpush1.bf16.msra.mxu0 %v3917
    %4047 = vmatprep.subr.bf16.mxu0 %v3920
    %4048 = vmatpush1.bf16.msra.mxu0 %v3919
    %4049 = vmatprep.subr.bf16.mxu0 %v3922
    %4050 = vmatpush1.bf16.msra.mxu0 %v3921
    %4051 = vmatprep.subr.bf16.mxu0 %v3924
    %4052 = vmatpush1.bf16.msra.mxu0 %v3923
    %4053 = vmatprep.subr.bf16.mxu0 %v3926
    %4054 = vmatpush1.bf16.msra.mxu0 %v3925
    %4055 = vmatprep.subr.bf16.mxu0 %v3928
    %4056 = vmatpush1.bf16.msra.mxu0 %v3927
    %4057 = vmatprep.subr.bf16.mxu0 %v3930
    %4058 = vmatpush1.bf16.msra.mxu0 %v3929
    %4059 = vmatprep.subr.bf16.mxu0 %v3932
    %4060 = vmatpush1.bf16.msra.mxu0 %v3931
    %4061 = vmatprep.subr.bf16.mxu0 %v3934
    %4062 = vmatpush1.bf16.msra.mxu0 %v3933
    %4063 = vmatprep.subr.bf16.mxu0 %v3936
    %4064 = vmatpush1.bf16.msra.mxu0 %v3935
    %4065 = vmatprep.subr.bf16.mxu0 %v3938
    %4066 = vmatpush1.bf16.msra.mxu0 %v3937
    %4067 = vmatprep.subr.bf16.mxu0 %v3940
    %4068 = vmatpush1.bf16.msra.mxu0 %v3939
    %4069 = vmatprep.subr.bf16.mxu0 %v3942
    %4070 = vmatpush1.bf16.msra.mxu0 %v3941
    %4071 = vmatprep.mubr.bf16.mxu0 %v1186
    %4072 = vmatmul.mubr.bf16.gmra.mrb[0].mxu0 %v1185
    %v4073 = vpop.f32.mrb[0].mxu0
    %v4074 = vadd.f32 0.0, %v4073
    %v4075 = vpop.f32.mrb[0].mxu0
    %v4076 = vadd.f32 0.0, %v4075
    %v4077 = vpop.f32.mrb[0].mxu0
    %v4078 = vpop.f32.mrb[0].mxu0
    %4079 = vdwg.mxu0
    %4080 = vmatprep.subr.bf16.mxu0 %v3944
    %4081 = vmatpush1.bf16.msra.mxu0 %v3943
    %4082 = vmatprep.subr.bf16.mxu0 %v3946
    %4083 = vmatpush1.bf16.msra.mxu0 %v3945
    %4084 = vmatprep.subr.bf16.mxu0 %v3948
    %4085 = vmatpush1.bf16.msra.mxu0 %v3947
    %4086 = vmatprep.subr.bf16.mxu0 %v3950
    %4087 = vmatpush1.bf16.msra.mxu0 %v3949
    %4088 = vmatprep.subr.bf16.mxu0 %v3952
    %4089 = vmatpush1.bf16.msra.mxu0 %v3951
    %4090 = vmatprep.subr.bf16.mxu0 %v3954
    %4091 = vmatpush1.bf16.msra.mxu0 %v3953
    %4092 = vmatprep.subr.bf16.mxu0 %v3956
    %4093 = vmatpush1.bf16.msra.mxu0 %v3955
    %4094 = vmatprep.subr.bf16.mxu0 %v3958
    %4095 = vmatpush1.bf16.msra.mxu0 %v3957
    %4096 = vmatprep.subr.bf16.mxu0 %v3960
    %4097 = vmatpush1.bf16.msra.mxu0 %v3959
    %4098 = vmatprep.subr.bf16.mxu0 %v3962
    %4099 = vmatpush1.bf16.msra.mxu0 %v3961
    %4100 = vmatprep.subr.bf16.mxu0 %v3964
    %4101 = vmatpush1.bf16.msra.mxu0 %v3963
    %4102 = vmatprep.subr.bf16.mxu0 %v3966
    %4103 = vmatpush1.bf16.msra.mxu0 %v3965
    %4104 = vmatprep.subr.bf16.mxu0 %v3968
    %4105 = vmatpush1.bf16.msra.mxu0 %v3967
    %4106 = vmatprep.subr.bf16.mxu0 %v3970
    %4107 = vmatpush1.bf16.msra.mxu0 %v3969
    %4108 = vmatprep.subr.bf16.mxu0 %v3972
    %4109 = vmatpush1.bf16.msra.mxu0 %v3971
    %4110 = vmatprep.subr.bf16.mxu0 %v3974
    %4111 = vmatpush1.bf16.msra.mxu0 %v3973
    %4112 = vmatprep.mubr.bf16.mxu0 %v1188
    %4113 = vmatmul.mubr.bf16.gmra.mrb[0].mxu0 %v1187
    %v4114 = vpop.f32.mrb[0].mxu0
    %v4115 = vadd.f32 %v4074, %v4114
    %v4116 = vpop.f32.mrb[0].mxu0
    %v4117 = vadd.f32 %v4076, %v4116
    %v4118 = vpop.f32.mrb[0].mxu0
    %v4119 = vpop.f32.mrb[0].mxu0
    %4120 = vdwg.mxu0
    %v4185 = vunpack.c.l.b16 %v1581
    %v4186 = vunpack.c.h.b16 %v1581
    %v4187 = vunpack.c.l.b16 %v1582
    %v4188 = vunpack.c.h.b16 %v1582
    %v4189 = vunpack.c.l.b16 %v1583
    %v4190 = vunpack.c.h.b16 %v1583
    %v4191 = vunpack.c.l.b16 %v1584
    %v4192 = vunpack.c.h.b16 %v1584
    %v4193 = vunpack.c.l.b16 %v1585
    %v4194 = vunpack.c.h.b16 %v1585
    %v4195 = vunpack.c.l.b16 %v1586
    %v4196 = vunpack.c.h.b16 %v1586
    %v4197 = vunpack.c.l.b16 %v1587
    %v4198 = vunpack.c.h.b16 %v1587
    %v4199 = vunpack.c.l.b16 %v1588
    %v4200 = vunpack.c.h.b16 %v1588
    %v4201 = vunpack.c.l.b16 %v1589
    %v4202 = vunpack.c.h.b16 %v1589
    %v4203 = vunpack.c.l.b16 %v1590
    %v4204 = vunpack.c.h.b16 %v1590
    %v4205 = vunpack.c.l.b16 %v1591
    %v4206 = vunpack.c.h.b16 %v1591
    %v4207 = vunpack.c.l.b16 %v1592
    %v4208 = vunpack.c.h.b16 %v1592
    %v4209 = vunpack.c.l.b16 %v1593
    %v4210 = vunpack.c.h.b16 %v1593
    %v4211 = vunpack.c.l.b16 %v1594
    %v4212 = vunpack.c.h.b16 %v1594
    %v4213 = vunpack.c.l.b16 %v1595
    %v4214 = vunpack.c.h.b16 %v1595
    %v4215 = vunpack.c.l.b16 %v1596
    %v4216 = vunpack.c.h.b16 %v1596
    %v4217 = vunpack.c.l.b16 %v1597
    %v4218 = vunpack.c.h.b16 %v1597
    %v4219 = vunpack.c.l.b16 %v1598
    %v4220 = vunpack.c.h.b16 %v1598
    %v4221 = vunpack.c.l.b16 %v1599
    %v4222 = vunpack.c.h.b16 %v1599
    %v4223 = vunpack.c.l.b16 %v1600
    %v4224 = vunpack.c.h.b16 %v1600
    %v4225 = vunpack.c.l.b16 %v1601
    %v4226 = vunpack.c.h.b16 %v1601
    %v4227 = vunpack.c.l.b16 %v1602
    %v4228 = vunpack.c.h.b16 %v1602
    %v4229 = vunpack.c.l.b16 %v1603
    %v4230 = vunpack.c.h.b16 %v1603
    %v4231 = vunpack.c.l.b16 %v1604
    %v4232 = vunpack.c.h.b16 %v1604
    %v4233 = vunpack.c.l.b16 %v1605
    %v4234 = vunpack.c.h.b16 %v1605
    %v4235 = vunpack.c.l.b16 %v1606
    %v4236 = vunpack.c.h.b16 %v1606
    %v4237 = vunpack.c.l.b16 %v1607
    %v4238 = vunpack.c.h.b16 %v1607
    %v4239 = vunpack.c.l.b16 %v1608
    %v4240 = vunpack.c.h.b16 %v1608
    %v4241 = vunpack.c.l.b16 %v1609
    %v4242 = vunpack.c.h.b16 %v1609
    %v4243 = vunpack.c.l.b16 %v1610
    %v4244 = vunpack.c.h.b16 %v1610
    %v4245 = vunpack.c.l.b16 %v1611
    %v4246 = vunpack.c.h.b16 %v1611
    %v4247 = vunpack.c.l.b16 %v1612
    %v4248 = vunpack.c.h.b16 %v1612
    %v4249 = vunpack.c.l.b16 %v1613
    %v4250 = vunpack.c.h.b16 %v1613
    %v4251 = vunpack.c.l.b16 %v1614
    %v4252 = vunpack.c.h.b16 %v1614
    %v4253 = vunpack.c.l.b16 %v1615
    %v4254 = vunpack.c.h.b16 %v1615
    %v4255 = vunpack.c.l.b16 %v1616
    %v4256 = vunpack.c.h.b16 %v1616
    %v4257 = vunpack.c.l.b16 %v1617
    %v4258 = vunpack.c.h.b16 %v1617
    %v4259 = vunpack.c.l.b16 %v1618
    %v4260 = vunpack.c.h.b16 %v1618
    %v4261 = vunpack.c.l.b16 %v1619
    %v4262 = vunpack.c.h.b16 %v1619
    %v4263 = vunpack.c.l.b16 %v1620
    %v4264 = vunpack.c.h.b16 %v1620
    %v4265 = vunpack.c.l.b16 %v1621
    %v4266 = vunpack.c.h.b16 %v1621
    %v4267 = vunpack.c.l.b16 %v1622
    %v4268 = vunpack.c.h.b16 %v1622
    %v4269 = vunpack.c.l.b16 %v1623
    %v4270 = vunpack.c.h.b16 %v1623
    %v4271 = vunpack.c.l.b16 %v1624
    %v4272 = vunpack.c.h.b16 %v1624
    %v4273 = vunpack.c.l.b16 %v1625
    %v4274 = vunpack.c.h.b16 %v1625
    %v4275 = vunpack.c.l.b16 %v1626
    %v4276 = vunpack.c.h.b16 %v1626
    %v4277 = vunpack.c.l.b16 %v1627
    %v4278 = vunpack.c.h.b16 %v1627
    %v4279 = vunpack.c.l.b16 %v1628
    %v4280 = vunpack.c.h.b16 %v1628
    %v4281 = vunpack.c.l.b16 %v1629
    %v4282 = vunpack.c.h.b16 %v1629
    %v4283 = vunpack.c.l.b16 %v1630
    %v4284 = vunpack.c.h.b16 %v1630
    %v4285 = vunpack.c.l.b16 %v1631
    %v4286 = vunpack.c.h.b16 %v1631
    %v4287 = vunpack.c.l.b16 %v1632
    %v4288 = vunpack.c.h.b16 %v1632
    %v4289 = vunpack.c.l.b16 %v1633
    %v4290 = vunpack.c.h.b16 %v1633
    %v4291 = vunpack.c.l.b16 %v1634
    %v4292 = vunpack.c.h.b16 %v1634
    %v4293 = vunpack.c.l.b16 %v1635
    %v4294 = vunpack.c.h.b16 %v1635
    %v4295 = vunpack.c.l.b16 %v1636
    %v4296 = vunpack.c.h.b16 %v1636
    %v4297 = vunpack.c.l.b16 %v1637
    %v4298 = vunpack.c.h.b16 %v1637
    %v4299 = vunpack.c.l.b16 %v1638
    %v4300 = vunpack.c.h.b16 %v1638
    %v4301 = vunpack.c.l.b16 %v1639
    %v4302 = vunpack.c.h.b16 %v1639
    %v4303 = vunpack.c.l.b16 %v1640
    %v4304 = vunpack.c.h.b16 %v1640
    %v4305 = vunpack.c.l.b16 %v1641
    %v4306 = vunpack.c.h.b16 %v1641
    %v4307 = vunpack.c.l.b16 %v1642
    %v4308 = vunpack.c.h.b16 %v1642
    %v4309 = vunpack.c.l.b16 %v1643
    %v4310 = vunpack.c.h.b16 %v1643
    %v4311 = vunpack.c.l.b16 %v1644
    %v4312 = vunpack.c.h.b16 %v1644
    %v4313 = vpack.c.b16 %v4187, %v4185
    %v4314 = vpack.c.b16 %v4188, %v4186
    %v4315 = vpack.c.b16 %v4191, %v4189
    %v4316 = vpack.c.b16 %v4192, %v4190
    %v4317 = vpack.c.b16 %v4195, %v4193
    %v4318 = vpack.c.b16 %v4196, %v4194
    %v4319 = vpack.c.b16 %v4199, %v4197
    %v4320 = vpack.c.b16 %v4200, %v4198
    %v4321 = vpack.c.b16 %v4203, %v4201
    %v4322 = vpack.c.b16 %v4204, %v4202
    %v4323 = vpack.c.b16 %v4207, %v4205
    %v4324 = vpack.c.b16 %v4208, %v4206
    %v4325 = vpack.c.b16 %v4211, %v4209
    %v4326 = vpack.c.b16 %v4212, %v4210
    %v4327 = vpack.c.b16 %v4215, %v4213
    %v4328 = vpack.c.b16 %v4216, %v4214
    %v4329 = vpack.c.b16 %v4219, %v4217
    %v4330 = vpack.c.b16 %v4220, %v4218
    %v4331 = vpack.c.b16 %v4223, %v4221
    %v4332 = vpack.c.b16 %v4224, %v4222
    %v4333 = vpack.c.b16 %v4227, %v4225
    %v4334 = vpack.c.b16 %v4228, %v4226
    %v4335 = vpack.c.b16 %v4231, %v4229
    %v4336 = vpack.c.b16 %v4232, %v4230
    %v4337 = vpack.c.b16 %v4235, %v4233
    %v4338 = vpack.c.b16 %v4236, %v4234
    %v4339 = vpack.c.b16 %v4239, %v4237
    %v4340 = vpack.c.b16 %v4240, %v4238
    %v4341 = vpack.c.b16 %v4243, %v4241
    %v4342 = vpack.c.b16 %v4244, %v4242
    %v4343 = vpack.c.b16 %v4247, %v4245
    %v4344 = vpack.c.b16 %v4248, %v4246
    %v4345 = vpack.c.b16 %v4251, %v4249
    %v4346 = vpack.c.b16 %v4252, %v4250
    %v4347 = vpack.c.b16 %v4255, %v4253
    %v4348 = vpack.c.b16 %v4256, %v4254
    %v4349 = vpack.c.b16 %v4259, %v4257
    %v4350 = vpack.c.b16 %v4260, %v4258
    %v4351 = vpack.c.b16 %v4263, %v4261
    %v4352 = vpack.c.b16 %v4264, %v4262
    %v4353 = vpack.c.b16 %v4267, %v4265
    %v4354 = vpack.c.b16 %v4268, %v4266
    %v4355 = vpack.c.b16 %v4271, %v4269
    %v4356 = vpack.c.b16 %v4272, %v4270
    %v4357 = vpack.c.b16 %v4275, %v4273
    %v4358 = vpack.c.b16 %v4276, %v4274
    %v4359 = vpack.c.b16 %v4279, %v4277
    %v4360 = vpack.c.b16 %v4280, %v4278
    %v4361 = vpack.c.b16 %v4283, %v4281
    %v4362 = vpack.c.b16 %v4284, %v4282
    %v4363 = vpack.c.b16 %v4287, %v4285
    %v4364 = vpack.c.b16 %v4288, %v4286
    %v4365 = vpack.c.b16 %v4291, %v4289
    %v4366 = vpack.c.b16 %v4292, %v4290
    %v4367 = vpack.c.b16 %v4295, %v4293
    %v4368 = vpack.c.b16 %v4296, %v4294
    %v4369 = vpack.c.b16 %v4299, %v4297
    %v4370 = vpack.c.b16 %v4300, %v4298
    %v4371 = vpack.c.b16 %v4303, %v4301
    %v4372 = vpack.c.b16 %v4304, %v4302
    %v4373 = vpack.c.b16 %v4307, %v4305
    %v4374 = vpack.c.b16 %v4308, %v4306
    %v4375 = vpack.c.b16 %v4311, %v4309
    %v4376 = vpack.c.b16 %v4312, %v4310
    %4441 = vmatprep.subr.bf16.mxu0 %v4314
    %4442 = vmatpush1.bf16.msra.mxu0 %v4313
    %4443 = vmatprep.subr.bf16.mxu0 %v4316
    %4444 = vmatpush1.bf16.msra.mxu0 %v4315
    %4445 = vmatprep.subr.bf16.mxu0 %v4318
    %4446 = vmatpush1.bf16.msra.mxu0 %v4317
    %4447 = vmatprep.subr.bf16.mxu0 %v4320
    %4448 = vmatpush1.bf16.msra.mxu0 %v4319
    %4449 = vmatprep.subr.bf16.mxu0 %v4322
    %4450 = vmatpush1.bf16.msra.mxu0 %v4321
    %4451 = vmatprep.subr.bf16.mxu0 %v4324
    %4452 = vmatpush1.bf16.msra.mxu0 %v4323
    %4453 = vmatprep.subr.bf16.mxu0 %v4326
    %4454 = vmatpush1.bf16.msra.mxu0 %v4325
    %4455 = vmatprep.subr.bf16.mxu0 %v4328
    %4456 = vmatpush1.bf16.msra.mxu0 %v4327
    %4457 = vmatprep.subr.bf16.mxu0 %v4330
    %4458 = vmatpush1.bf16.msra.mxu0 %v4329
    %4459 = vmatprep.subr.bf16.mxu0 %v4332
    %4460 = vmatpush1.bf16.msra.mxu0 %v4331
    %4461 = vmatprep.subr.bf16.mxu0 %v4334
    %4462 = vmatpush1.bf16.msra.mxu0 %v4333
    %4463 = vmatprep.subr.bf16.mxu0 %v4336
    %4464 = vmatpush1.bf16.msra.mxu0 %v4335
    %4465 = vmatprep.subr.bf16.mxu0 %v4338
    %4466 = vmatpush1.bf16.msra.mxu0 %v4337
    %4467 = vmatprep.subr.bf16.mxu0 %v4340
    %4468 = vmatpush1.bf16.msra.mxu0 %v4339
    %4469 = vmatprep.subr.bf16.mxu0 %v4342
    %4470 = vmatpush1.bf16.msra.mxu0 %v4341
    %4471 = vmatprep.subr.bf16.mxu0 %v4344
    %4472 = vmatpush1.bf16.msra.mxu0 %v4343
    %4473 = vmatprep.mubr.bf16.mxu0 %v1190
    %4474 = vmatmul.mubr.bf16.gmra.mrb[0].mxu0 %v1189
    %v4475 = vpop.f32.mrb[0].mxu0
    %v4476 = vadd.f32 0.0, %v4475
    %v4477 = vpop.f32.mrb[0].mxu0
    %v4478 = vadd.f32 0.0, %v4477
    %v4479 = vpop.f32.mrb[0].mxu0
    %v4480 = vpop.f32.mrb[0].mxu0
    %4481 = vdwg.mxu0
    %4482 = vmatprep.subr.bf16.mxu0 %v4346
    %4483 = vmatpush1.bf16.msra.mxu0 %v4345
    %4484 = vmatprep.subr.bf16.mxu0 %v4348
    %4485 = vmatpush1.bf16.msra.mxu0 %v4347
    %4486 = vmatprep.subr.bf16.mxu0 %v4350
    %4487 = vmatpush1.bf16.msra.mxu0 %v4349
    %4488 = vmatprep.subr.bf16.mxu0 %v4352
    %4489 = vmatpush1.bf16.msra.mxu0 %v4351
    %4490 = vmatprep.subr.bf16.mxu0 %v4354
    %4491 = vmatpush1.bf16.msra.mxu0 %v4353
    %4492 = vmatprep.subr.bf16.mxu0 %v4356
    %4493 = vmatpush1.bf16.msra.mxu0 %v4355
    %4494 = vmatprep.subr.bf16.mxu0 %v4358
    %4495 = vmatpush1.bf16.msra.mxu0 %v4357
    %4496 = vmatprep.subr.bf16.mxu0 %v4360
    %4497 = vmatpush1.bf16.msra.mxu0 %v4359
    %4498 = vmatprep.subr.bf16.mxu0 %v4362
    %4499 = vmatpush1.bf16.msra.mxu0 %v4361
    %4500 = vmatprep.subr.bf16.mxu0 %v4364
    %4501 = vmatpush1.bf16.msra.mxu0 %v4363
    %4502 = vmatprep.subr.bf16.mxu0 %v4366
    %4503 = vmatpush1.bf16.msra.mxu0 %v4365
    %4504 = vmatprep.subr.bf16.mxu0 %v4368
    %4505 = vmatpush1.bf16.msra.mxu0 %v4367
    %4506 = vmatprep.subr.bf16.mxu0 %v4370
    %4507 = vmatpush1.bf16.msra.mxu0 %v4369
    %4508 = vmatprep.subr.bf16.mxu0 %v4372
    %4509 = vmatpush1.bf16.msra.mxu0 %v4371
    %4510 = vmatprep.subr.bf16.mxu0 %v4374
    %4511 = vmatpush1.bf16.msra.mxu0 %v4373
    %4512 = vmatprep.subr.bf16.mxu0 %v4376
    %4513 = vmatpush1.bf16.msra.mxu0 %v4375
    %4514 = vmatprep.mubr.bf16.mxu0 %v1192
    %4515 = vmatmul.mubr.bf16.gmra.mrb[0].mxu0 %v1191
    %v4516 = vpop.f32.mrb[0].mxu0
    %v4517 = vadd.f32 %v4476, %v4516
    %v4518 = vpop.f32.mrb[0].mxu0
    %v4519 = vadd.f32 %v4478, %v4518
    %v4520 = vpop.f32.mrb[0].mxu0
    %v4521 = vpop.f32.mrb[0].mxu0
    %4522 = vdwg.mxu0
    %v4587 = vunpack.c.l.b16 %v1645
    %v4588 = vunpack.c.h.b16 %v1645
    %v4589 = vunpack.c.l.b16 %v1646
    %v4590 = vunpack.c.h.b16 %v1646
    %v4591 = vunpack.c.l.b16 %v1647
    %v4592 = vunpack.c.h.b16 %v1647
    %v4593 = vunpack.c.l.b16 %v1648
    %v4594 = vunpack.c.h.b16 %v1648
    %v4595 = vunpack.c.l.b16 %v1649
    %v4596 = vunpack.c.h.b16 %v1649
    %v4597 = vunpack.c.l.b16 %v1650
    %v4598 = vunpack.c.h.b16 %v1650
    %v4599 = vunpack.c.l.b16 %v1651
    %v4600 = vunpack.c.h.b16 %v1651
    %v4601 = vunpack.c.l.b16 %v1652
    %v4602 = vunpack.c.h.b16 %v1652
    %v4603 = vunpack.c.l.b16 %v1653
    %v4604 = vunpack.c.h.b16 %v1653
    %v4605 = vunpack.c.l.b16 %v1654
    %v4606 = vunpack.c.h.b16 %v1654
    %v4607 = vunpack.c.l.b16 %v1655
    %v4608 = vunpack.c.h.b16 %v1655
    %v4609 = vunpack.c.l.b16 %v1656
    %v4610 = vunpack.c.h.b16 %v1656
    %v4611 = vunpack.c.l.b16 %v1657
    %v4612 = vunpack.c.h.b16 %v1657
    %v4613 = vunpack.c.l.b16 %v1658
    %v4614 = vunpack.c.h.b16 %v1658
    %v4615 = vunpack.c.l.b16 %v1659
    %v4616 = vunpack.c.h.b16 %v1659
    %v4617 = vunpack.c.l.b16 %v1660
    %v4618 = vunpack.c.h.b16 %v1660
    %v4619 = vunpack.c.l.b16 %v1661
    %v4620 = vunpack.c.h.b16 %v1661
    %v4621 = vunpack.c.l.b16 %v1662
    %v4622 = vunpack.c.h.b16 %v1662
    %v4623 = vunpack.c.l.b16 %v1663
    %v4624 = vunpack.c.h.b16 %v1663
    %v4625 = vunpack.c.l.b16 %v1664
    %v4626 = vunpack.c.h.b16 %v1664
    %v4627 = vunpack.c.l.b16 %v1665
    %v4628 = vunpack.c.h.b16 %v1665
    %v4629 = vunpack.c.l.b16 %v1666
    %v4630 = vunpack.c.h.b16 %v1666
    %v4631 = vunpack.c.l.b16 %v1667
    %v4632 = vunpack.c.h.b16 %v1667
    %v4633 = vunpack.c.l.b16 %v1668
    %v4634 = vunpack.c.h.b16 %v1668
    %v4635 = vunpack.c.l.b16 %v1669
    %v4636 = vunpack.c.h.b16 %v1669
    %v4637 = vunpack.c.l.b16 %v1670
    %v4638 = vunpack.c.h.b16 %v1670
    %v4639 = vunpack.c.l.b16 %v1671
    %v4640 = vunpack.c.h.b16 %v1671
    %v4641 = vunpack.c.l.b16 %v1672
    %v4642 = vunpack.c.h.b16 %v1672
    %v4643 = vunpack.c.l.b16 %v1673
    %v4644 = vunpack.c.h.b16 %v1673
    %v4645 = vunpack.c.l.b16 %v1674
    %v4646 = vunpack.c.h.b16 %v1674
    %v4647 = vunpack.c.l.b16 %v1675
    %v4648 = vunpack.c.h.b16 %v1675
    %v4649 = vunpack.c.l.b16 %v1676
    %v4650 = vunpack.c.h.b16 %v1676
    %v4651 = vunpack.c.l.b16 %v1677
    %v4652 = vunpack.c.h.b16 %v1677
    %v4653 = vunpack.c.l.b16 %v1678
    %v4654 = vunpack.c.h.b16 %v1678
    %v4655 = vunpack.c.l.b16 %v1679
    %v4656 = vunpack.c.h.b16 %v1679
    %v4657 = vunpack.c.l.b16 %v1680
    %v4658 = vunpack.c.h.b16 %v1680
    %v4659 = vunpack.c.l.b16 %v1681
    %v4660 = vunpack.c.h.b16 %v1681
    %v4661 = vunpack.c.l.b16 %v1682
    %v4662 = vunpack.c.h.b16 %v1682
    %v4663 = vunpack.c.l.b16 %v1683
    %v4664 = vunpack.c.h.b16 %v1683
    %v4665 = vunpack.c.l.b16 %v1684
    %v4666 = vunpack.c.h.b16 %v1684
    %v4667 = vunpack.c.l.b16 %v1685
    %v4668 = vunpack.c.h.b16 %v1685
    %v4669 = vunpack.c.l.b16 %v1686
    %v4670 = vunpack.c.h.b16 %v1686
    %v4671 = vunpack.c.l.b16 %v1687
    %v4672 = vunpack.c.h.b16 %v1687
    %v4673 = vunpack.c.l.b16 %v1688
    %v4674 = vunpack.c.h.b16 %v1688
    %v4675 = vunpack.c.l.b16 %v1689
    %v4676 = vunpack.c.h.b16 %v1689
    %v4677 = vunpack.c.l.b16 %v1690
    %v4678 = vunpack.c.h.b16 %v1690
    %v4679 = vunpack.c.l.b16 %v1691
    %v4680 = vunpack.c.h.b16 %v1691
    %v4681 = vunpack.c.l.b16 %v1692
    %v4682 = vunpack.c.h.b16 %v1692
    %v4683 = vunpack.c.l.b16 %v1693
    %v4684 = vunpack.c.h.b16 %v1693
    %v4685 = vunpack.c.l.b16 %v1694
    %v4686 = vunpack.c.h.b16 %v1694
    %v4687 = vunpack.c.l.b16 %v1695
    %v4688 = vunpack.c.h.b16 %v1695
    %v4689 = vunpack.c.l.b16 %v1696
    %v4690 = vunpack.c.h.b16 %v1696
    %v4691 = vunpack.c.l.b16 %v1697
    %v4692 = vunpack.c.h.b16 %v1697
    %v4693 = vunpack.c.l.b16 %v1698
    %v4694 = vunpack.c.h.b16 %v1698
    %v4695 = vunpack.c.l.b16 %v1699
    %v4696 = vunpack.c.h.b16 %v1699
    %v4697 = vunpack.c.l.b16 %v1700
    %v4698 = vunpack.c.h.b16 %v1700
    %v4699 = vunpack.c.l.b16 %v1701
    %v4700 = vunpack.c.h.b16 %v1701
    %v4701 = vunpack.c.l.b16 %v1702
    %v4702 = vunpack.c.h.b16 %v1702
    %v4703 = vunpack.c.l.b16 %v1703
    %v4704 = vunpack.c.h.b16 %v1703
    %v4705 = vunpack.c.l.b16 %v1704
    %v4706 = vunpack.c.h.b16 %v1704
    %v4707 = vunpack.c.l.b16 %v1705
    %v4708 = vunpack.c.h.b16 %v1705
    %v4709 = vunpack.c.l.b16 %v1706
    %v4710 = vunpack.c.h.b16 %v1706
    %v4711 = vunpack.c.l.b16 %v1707
    %v4712 = vunpack.c.h.b16 %v1707
    %v4713 = vunpack.c.l.b16 %v1708
    %v4714 = vunpack.c.h.b16 %v1708
    %v4715 = vpack.c.b16 %v4589, %v4587
    %v4716 = vpack.c.b16 %v4590, %v4588
    %v4717 = vpack.c.b16 %v4593, %v4591
    %v4718 = vpack.c.b16 %v4594, %v4592
    %v4719 = vpack.c.b16 %v4597, %v4595
    %v4720 = vpack.c.b16 %v4598, %v4596
    %v4721 = vpack.c.b16 %v4601, %v4599
    %v4722 = vpack.c.b16 %v4602, %v4600
    %v4723 = vpack.c.b16 %v4605, %v4603
    %v4724 = vpack.c.b16 %v4606, %v4604
    %v4725 = vpack.c.b16 %v4609, %v4607
    %v4726 = vpack.c.b16 %v4610, %v4608
    %v4727 = vpack.c.b16 %v4613, %v4611
    %v4728 = vpack.c.b16 %v4614, %v4612
    %v4729 = vpack.c.b16 %v4617, %v4615
    %v4730 = vpack.c.b16 %v4618, %v4616
    %v4731 = vpack.c.b16 %v4621, %v4619
    %v4732 = vpack.c.b16 %v4622, %v4620
    %v4733 = vpack.c.b16 %v4625, %v4623
    %v4734 = vpack.c.b16 %v4626, %v4624
    %v4735 = vpack.c.b16 %v4629, %v4627
    %v4736 = vpack.c.b16 %v4630, %v4628
    %v4737 = vpack.c.b16 %v4633, %v4631
    %v4738 = vpack.c.b16 %v4634, %v4632
    %v4739 = vpack.c.b16 %v4637, %v4635
    %v4740 = vpack.c.b16 %v4638, %v4636
    %v4741 = vpack.c.b16 %v4641, %v4639
    %v4742 = vpack.c.b16 %v4642, %v4640
    %v4743 = vpack.c.b16 %v4645, %v4643
    %v4744 = vpack.c.b16 %v4646, %v4644
    %v4745 = vpack.c.b16 %v4649, %v4647
    %v4746 = vpack.c.b16 %v4650, %v4648
    %v4747 = vpack.c.b16 %v4653, %v4651
    %v4748 = vpack.c.b16 %v4654, %v4652
    %v4749 = vpack.c.b16 %v4657, %v4655
    %v4750 = vpack.c.b16 %v4658, %v4656
    %v4751 = vpack.c.b16 %v4661, %v4659
    %v4752 = vpack.c.b16 %v4662, %v4660
    %v4753 = vpack.c.b16 %v4665, %v4663
    %v4754 = vpack.c.b16 %v4666, %v4664
    %v4755 = vpack.c.b16 %v4669, %v4667
    %v4756 = vpack.c.b16 %v4670, %v4668
    %v4757 = vpack.c.b16 %v4673, %v4671
    %v4758 = vpack.c.b16 %v4674, %v4672
    %v4759 = vpack.c.b16 %v4677, %v4675
    %v4760 = vpack.c.b16 %v4678, %v4676
    %v4761 = vpack.c.b16 %v4681, %v4679
    %v4762 = vpack.c.b16 %v4682, %v4680
    %v4763 = vpack.c.b16 %v4685, %v4683
    %v4764 = vpack.c.b16 %v4686, %v4684
    %v4765 = vpack.c.b16 %v4689, %v4687
    %v4766 = vpack.c.b16 %v4690, %v4688
    %v4767 = vpack.c.b16 %v4693, %v4691
    %v4768 = vpack.c.b16 %v4694, %v4692
    %v4769 = vpack.c.b16 %v4697, %v4695
    %v4770 = vpack.c.b16 %v4698, %v4696
    %v4771 = vpack.c.b16 %v4701, %v4699
    %v4772 = vpack.c.b16 %v4702, %v4700
    %v4773 = vpack.c.b16 %v4705, %v4703
    %v4774 = vpack.c.b16 %v4706, %v4704
    %v4775 = vpack.c.b16 %v4709, %v4707
    %v4776 = vpack.c.b16 %v4710, %v4708
    %v4777 = vpack.c.b16 %v4713, %v4711
    %v4778 = vpack.c.b16 %v4714, %v4712
    %4843 = vmatprep.subr.bf16.mxu0 %v4716
    %4844 = vmatpush1.bf16.msra.mxu0 %v4715
    %4845 = vmatprep.subr.bf16.mxu0 %v4718
    %4846 = vmatpush1.bf16.msra.mxu0 %v4717
    %4847 = vmatprep.subr.bf16.mxu0 %v4720
    %4848 = vmatpush1.bf16.msra.mxu0 %v4719
    %4849 = vmatprep.subr.bf16.mxu0 %v4722
    %4850 = vmatpush1.bf16.msra.mxu0 %v4721
    %4851 = vmatprep.subr.bf16.mxu0 %v4724
    %4852 = vmatpush1.bf16.msra.mxu0 %v4723
    %4853 = vmatprep.subr.bf16.mxu0 %v4726
    %4854 = vmatpush1.bf16.msra.mxu0 %v4725
    %4855 = vmatprep.subr.bf16.mxu0 %v4728
    %4856 = vmatpush1.bf16.msra.mxu0 %v4727
    %4857 = vmatprep.subr.bf16.mxu0 %v4730
    %4858 = vmatpush1.bf16.msra.mxu0 %v4729
    %4859 = vmatprep.subr.bf16.mxu0 %v4732
    %4860 = vmatpush1.bf16.msra.mxu0 %v4731
    %4861 = vmatprep.subr.bf16.mxu0 %v4734
    %4862 = vmatpush1.bf16.msra.mxu0 %v4733
    %4863 = vmatprep.subr.bf16.mxu0 %v4736
    %4864 = vmatpush1.bf16.msra.mxu0 %v4735
    %4865 = vmatprep.subr.bf16.mxu0 %v4738
    %4866 = vmatpush1.bf16.msra.mxu0 %v4737
    %4867 = vmatprep.subr.bf16.mxu0 %v4740
    %4868 = vmatpush1.bf16.msra.mxu0 %v4739
    %4869 = vmatprep.subr.bf16.mxu0 %v4742
    %4870 = vmatpush1.bf16.msra.mxu0 %v4741
    %4871 = vmatprep.subr.bf16.mxu0 %v4744
    %4872 = vmatpush1.bf16.msra.mxu0 %v4743
    %4873 = vmatprep.subr.bf16.mxu0 %v4746
    %4874 = vmatpush1.bf16.msra.mxu0 %v4745
    %4875 = vmatprep.mubr.bf16.mxu0 %v1194
    %4876 = vmatmul.mubr.bf16.gmra.mrb[0].mxu0 %v1193
    %v4877 = vpop.f32.mrb[0].mxu0
    %v4878 = vadd.f32 0.0, %v4877
    %v4879 = vpop.f32.mrb[0].mxu0
    %v4880 = vadd.f32 0.0, %v4879
    %v4881 = vpop.f32.mrb[0].mxu0
    %v4882 = vpop.f32.mrb[0].mxu0
    %4883 = vdwg.mxu0
    %4884 = vmatprep.subr.bf16.mxu0 %v4748
    %4885 = vmatpush1.bf16.msra.mxu0 %v4747
    %4886 = vmatprep.subr.bf16.mxu0 %v4750
    %4887 = vmatpush1.bf16.msra.mxu0 %v4749
    %4888 = vmatprep.subr.bf16.mxu0 %v4752
    %4889 = vmatpush1.bf16.msra.mxu0 %v4751
    %4890 = vmatprep.subr.bf16.mxu0 %v4754
    %4891 = vmatpush1.bf16.msra.mxu0 %v4753
    %4892 = vmatprep.subr.bf16.mxu0 %v4756
    %4893 = vmatpush1.bf16.msra.mxu0 %v4755
    %4894 = vmatprep.subr.bf16.mxu0 %v4758
    %4895 = vmatpush1.bf16.msra.mxu0 %v4757
    %4896 = vmatprep.subr.bf16.mxu0 %v4760
    %4897 = vmatpush1.bf16.msra.mxu0 %v4759
    %4898 = vmatprep.subr.bf16.mxu0 %v4762
    %4899 = vmatpush1.bf16.msra.mxu0 %v4761
    %4900 = vmatprep.subr.bf16.mxu0 %v4764
    %4901 = vmatpush1.bf16.msra.mxu0 %v4763
    %4902 = vmatprep.subr.bf16.mxu0 %v4766
    %4903 = vmatpush1.bf16.msra.mxu0 %v4765
    %4904 = vmatprep.subr.bf16.mxu0 %v4768
    %4905 = vmatpush1.bf16.msra.mxu0 %v4767
    %4906 = vmatprep.subr.bf16.mxu0 %v4770
    %4907 = vmatpush1.bf16.msra.mxu0 %v4769
    %4908 = vmatprep.subr.bf16.mxu0 %v4772
    %4909 = vmatpush1.bf16.msra.mxu0 %v4771
    %4910 = vmatprep.subr.bf16.mxu0 %v4774
    %4911 = vmatpush1.bf16.msra.mxu0 %v4773
    %4912 = vmatprep.subr.bf16.mxu0 %v4776
    %4913 = vmatpush1.bf16.msra.mxu0 %v4775
    %4914 = vmatprep.subr.bf16.mxu0 %v4778
    %4915 = vmatpush1.bf16.msra.mxu0 %v4777
    %4916 = vmatprep.mubr.bf16.mxu0 %v1196
    %4917 = vmatmul.mubr.bf16.gmra.mrb[0].mxu0 %v1195
    %v4918 = vpop.f32.mrb[0].mxu0
    %v4919 = vadd.f32 %v4878, %v4918
    %v4920 = vpop.f32.mrb[0].mxu0
    %v4921 = vadd.f32 %v4880, %v4920
    %v4922 = vpop.f32.mrb[0].mxu0
    %v4923 = vpop.f32.mrb[0].mxu0
    %4924 = vdwg.mxu0
    %vm4925 = vcmask 1041408
    %v4926 = vsel %vm4925, %v2105, 0.0
    %v4927 = vsel %vm4925, %v2507, 0.0
    %v4928 = vadd.f32 %v4926, %v4927
    %v4929 = vsel %vm4925, %v2909, 0.0
    %v4930 = vadd.f32 %v4928, %v4929
    %v4931 = vsel %vm4925, %v3311, 0.0
    %v4932 = vadd.f32 %v4930, %v4931
    %v4933 = vsel %vm4925, %v3713, 0.0
    %v4934 = vadd.f32 %v4932, %v4933
    %v4935 = vsel %vm4925, %v4115, 0.0
    %v4936 = vadd.f32 %v4934, %v4935
    %v4937 = vsel %vm4925, %v4517, 0.0
    %v4938 = vadd.f32 %v4936, %v4937
    %v4939 = vsel %vm4925, %v4919, 0.0
    %v4940 = vadd.f32 %v4938, %v4939
    %v4941 = vsel %vm4925, %v2107, 0.0
    %v4942 = vsel %vm4925, %v2509, 0.0
    %v4943 = vadd.f32 %v4941, %v4942
    %v4944 = vsel %vm4925, %v2911, 0.0
    %v4945 = vadd.f32 %v4943, %v4944
    %v4946 = vsel %vm4925, %v3313, 0.0
    %v4947 = vadd.f32 %v4945, %v4946
    %v4948 = vsel %vm4925, %v3715, 0.0
    %v4949 = vadd.f32 %v4947, %v4948
    %v4950 = vsel %vm4925, %v4117, 0.0
    %v4951 = vadd.f32 %v4949, %v4950
    %v4952 = vsel %vm4925, %v4519, 0.0
    %v4953 = vadd.f32 %v4951, %v4952
    %v4954 = vsel %vm4925, %v4921, 0.0
    %v4955 = vadd.f32 %v4953, %v4954
    %v4956 = vlaneseq
    %v4957 = vshrl.u32 %v4956, 7
    %v4958 = vsub.s32 0, %v4957
    %v4959 = vrot.slane %v111, %v4958
    %v4960 = vlaneseq
    %v4961 = vshrl.u32 %v4960, 7
    %v4962 = vsub.s32 0, %v4961
    %v4963 = vrot.slane %v112, %v4962
    %v4964 = vadd.f32 %v4940, %v4959
    %v4965 = vadd.f32 %v4955, %v4963
    %v4966 = vmax.f32 %v4964, 0.0
    %v4967 = vmax.f32 %v4965, 0.0
    %v4968 = vld [vmem:[#allocation6] sm:$0xf]
    %v4969 = vld [vmem:[#allocation6 + $0x4] sm:$0xf]
    %v4970 = vld [vmem:[#allocation6 + $0x8] sm:$0xf]
    %v4971 = vld [vmem:[#allocation6 + $0xc] sm:$0xf]
    %v4972 = vld [vmem:[#allocation6 + $0x10] sm:$0xf]
    %v4973 = vld [vmem:[#allocation6 + $0x14] sm:$0xf]
    %v4974 = vld [vmem:[#allocation6 + $0x18] sm:$0xf]
    %v4975 = vld [vmem:[#allocation6 + $0x1c] sm:$0xf]
    %v4976 = vld [vmem:[#allocation6 + $0x20] sm:$0xf]
    %v4977 = vld [vmem:[#allocation6 + $0x24] sm:$0xf]
    %v4978 = vld [vmem:[#allocation6 + $0x28] sm:$0xf]
    %v4979 = vld [vmem:[#allocation6 + $0x2c] sm:$0xf]
    %v4980 = vld [vmem:[#allocation6 + $0x30] sm:$0xf]
    %v4981 = vld [vmem:[#allocation6 + $0x34] sm:$0xf]
    %v4982 = vld [vmem:[#allocation6 + $0x38] sm:$0xf]
    %v4983 = vld [vmem:[#allocation6 + $0x3c] sm:$0xf]
    %v4984 = vld [vmem:[#allocation6 + $0x40] sm:$0xf]
    %v4985 = vld [vmem:[#allocation6 + $0x44] sm:$0xf]
    %v4986 = vld [vmem:[#allocation6 + $0x48] sm:$0xf]
    %v4987 = vld [vmem:[#allocation6 + $0x4c] sm:$0xf]
    %v4988 = vld [vmem:[#allocation6 + $0x50] sm:$0xf]
    %v4989 = vld [vmem:[#allocation6 + $0x54] sm:$0xf]
    %v4990 = vld [vmem:[#allocation6 + $0x58] sm:$0xf]
    %v4991 = vld [vmem:[#allocation6 + $0x5c] sm:$0xf]
    %v4992 = vld [vmem:[#allocation6 + $0x60] sm:$0xf]
    %v4993 = vld [vmem:[#allocation6 + $0x64] sm:$0xf]
    %v4994 = vld [vmem:[#allocation6 + $0x68] sm:$0xf]
    %v4995 = vld [vmem:[#allocation6 + $0x6c] sm:$0xf]
    %v4996 = vld [vmem:[#allocation6 + $0x70] sm:$0xf]
    %v4997 = vld [vmem:[#allocation6 + $0x74] sm:$0xf]
    %v4998 = vld [vmem:[#allocation6 + $0x78] sm:$0xf]
    %v4999 = vld [vmem:[#allocation6 + $0x7c] sm:$0xf]
    %v5000 = vpack.c.bf16 %v4966, %v4966
    %v5001 = vpack.c.bf16 %v4967, %v4967
    %v5002 = vlaneseq
    %v5003 = vshrl.u32 %v5002, 7
    %v5004 = vsub.s32 1, %v5003
    %v5005 = vrot.slane %v111, %v5004
    %v5038 = vunpack.c.l.b16 %v4968
    %v5039 = vunpack.c.l.b16 %v4969
    %v5040 = vunpack.c.l.b16 %v4970
    %v5041 = vunpack.c.l.b16 %v4971
    %v5042 = vunpack.c.l.b16 %v4972
    %v5043 = vunpack.c.l.b16 %v4973
    %v5044 = vunpack.c.l.b16 %v4974
    %v5045 = vunpack.c.l.b16 %v4975
    %v5046 = vunpack.c.l.b16 %v4976
    %v5047 = vunpack.c.l.b16 %v4977
    %v5048 = vunpack.c.l.b16 %v4978
    %v5049 = vunpack.c.l.b16 %v4979
    %v5050 = vunpack.c.l.b16 %v4980
    %v5051 = vunpack.c.l.b16 %v4981
    %v5052 = vunpack.c.l.b16 %v4982
    %v5053 = vunpack.c.l.b16 %v4983
    %v5054 = vunpack.c.l.b16 %v4984
    %v5055 = vunpack.c.l.b16 %v4985
    %v5056 = vunpack.c.l.b16 %v4986
    %v5057 = vunpack.c.l.b16 %v4987
    %v5058 = vunpack.c.l.b16 %v4988
    %v5059 = vunpack.c.l.b16 %v4989
    %v5060 = vunpack.c.l.b16 %v4990
    %v5061 = vunpack.c.l.b16 %v4991
    %v5062 = vunpack.c.l.b16 %v4992
    %v5063 = vunpack.c.l.b16 %v4993
    %v5064 = vunpack.c.l.b16 %v4994
    %v5065 = vunpack.c.l.b16 %v4995
    %v5066 = vunpack.c.l.b16 %v4996
    %v5067 = vunpack.c.l.b16 %v4997
    %v5068 = vunpack.c.l.b16 %v4998
    %v5069 = vunpack.c.l.b16 %v4999
    %v5070 = vpack.c.b16 %v5039, %v5038
    %v5071 = vpack.c.b16 %v5041, %v5040
    %v5072 = vpack.c.b16 %v5043, %v5042
    %v5073 = vpack.c.b16 %v5045, %v5044
    %v5074 = vpack.c.b16 %v5047, %v5046
    %v5075 = vpack.c.b16 %v5049, %v5048
    %v5076 = vpack.c.b16 %v5051, %v5050
    %v5077 = vpack.c.b16 %v5053, %v5052
    %v5078 = vpack.c.b16 %v5055, %v5054
    %v5079 = vpack.c.b16 %v5057, %v5056
    %v5080 = vpack.c.b16 %v5059, %v5058
    %v5081 = vpack.c.b16 %v5061, %v5060
    %v5082 = vpack.c.b16 %v5063, %v5062
    %v5083 = vpack.c.b16 %v5065, %v5064
    %v5084 = vpack.c.b16 %v5067, %v5066
    %v5085 = vpack.c.b16 %v5069, %v5068
    %5102 = vmatprep.subr.bf16.mxu0 0
    %5103 = vmatpush1.bf16.msra.mxu0 %v5070
    %5104 = vmatprep.subr.bf16.mxu0 0
    %5105 = vmatpush1.bf16.msra.mxu0 %v5071
    %5106 = vmatprep.subr.bf16.mxu0 0
    %5107 = vmatpush1.bf16.msra.mxu0 %v5072
    %5108 = vmatprep.subr.bf16.mxu0 0
    %5109 = vmatpush1.bf16.msra.mxu0 %v5073
    %5110 = vmatprep.subr.bf16.mxu0 0
    %5111 = vmatpush1.bf16.msra.mxu0 %v5074
    %5112 = vmatprep.subr.bf16.mxu0 0
    %5113 = vmatpush1.bf16.msra.mxu0 %v5075
    %5114 = vmatprep.subr.bf16.mxu0 0
    %5115 = vmatpush1.bf16.msra.mxu0 %v5076
    %5116 = vmatprep.subr.bf16.mxu0 0
    %5117 = vmatpush1.bf16.msra.mxu0 %v5077
    %5118 = vmatprep.subr.bf16.mxu0 0
    %5119 = vmatpush1.bf16.msra.mxu0 %v5078
    %5120 = vmatprep.subr.bf16.mxu0 0
    %5121 = vmatpush1.bf16.msra.mxu0 %v5079
    %5122 = vmatprep.subr.bf16.mxu0 0
    %5123 = vmatpush1.bf16.msra.mxu0 %v5080
    %5124 = vmatprep.subr.bf16.mxu0 0
    %5125 = vmatpush1.bf16.msra.mxu0 %v5081
    %5126 = vmatprep.subr.bf16.mxu0 0
    %5127 = vmatpush1.bf16.msra.mxu0 %v5082
    %5128 = vmatprep.subr.bf16.mxu0 0
    %5129 = vmatpush1.bf16.msra.mxu0 %v5083
    %5130 = vmatprep.subr.bf16.mxu0 0
    %5131 = vmatpush1.bf16.msra.mxu0 %v5084
    %5132 = vmatprep.subr.bf16.mxu0 0
    %5133 = vmatpush1.bf16.msra.mxu0 %v5085
    %5134 = vmatprep.mubr.bf16.mxu0 %v5001
    %5135 = vmatmul.mubr.bf16.gmra.mrb[0].mxu0 %v5000
    %v5136 = vpop.f32.mrb[0].mxu0
    %v5137 = vadd.f32 %v5005, %v5136
    %v5138 = vpop.f32.mrb[0].mxu0
    %v5139 = vpop.f32.mrb[0].mxu0
    %v5140 = vpop.f32.mrb[0].mxu0
    %5141 = vdwg.mxu0
    %v5142 = vmax.f32 %v5137, 0.0
    %v5143 = vld [vmem:[%s4] sm:$0xf]
    %v5144 = vld [vmem:[%s4 + $0x4] sm:$0xf]
    %v5145 = vld [vmem:[%s4 + $0x8] sm:$0xf]
    %v5146 = vld [vmem:[%s4 + $0xc] sm:$0xf]
    %v5147 = vld [vmem:[%s4 + $0x10] sm:$0xf]
    %v5148 = vld [vmem:[%s4 + $0x14] sm:$0xf]
    %v5149 = vld [vmem:[%s4 + $0x18] sm:$0xf]
    %v5150 = vld [vmem:[%s4 + $0x1c] sm:$0xf]
    %v5151 = vld [vmem:[%s4 + $0x20] sm:$0xf]
    %v5152 = vld [vmem:[%s4 + $0x24] sm:$0xf]
    %v5153 = vld [vmem:[%s4 + $0x28] sm:$0xf]
    %v5154 = vld [vmem:[%s4 + $0x2c] sm:$0xf]
    %v5155 = vld [vmem:[%s4 + $0x30] sm:$0xf]
    %v5156 = vld [vmem:[%s4 + $0x34] sm:$0xf]
    %v5157 = vld [vmem:[%s4 + $0x38] sm:$0xf]
    %v5158 = vld [vmem:[%s4 + $0x3c] sm:$0xf]
    %v5159 = vpack.c.bf16 %v5142, %v5142
    %v5160 = vlaneseq
    %v5161 = vshrl.u32 %v5160, 7
    %v5162 = vsub.s32 2, %v5161
    %v5163 = vrot.slane %v111, %v5162
    %v5180 = vunpack.c.l.b16 %v5143
    %v5181 = vunpack.c.l.b16 %v5144
    %v5182 = vunpack.c.l.b16 %v5145
    %v5183 = vunpack.c.l.b16 %v5146
    %v5184 = vunpack.c.l.b16 %v5147
    %v5185 = vunpack.c.l.b16 %v5148
    %v5186 = vunpack.c.l.b16 %v5149
    %v5187 = vunpack.c.l.b16 %v5150
    %v5188 = vunpack.c.l.b16 %v5151
    %v5189 = vunpack.c.l.b16 %v5152
    %v5190 = vunpack.c.l.b16 %v5153
    %v5191 = vunpack.c.l.b16 %v5154
    %v5192 = vunpack.c.l.b16 %v5155
    %v5193 = vunpack.c.l.b16 %v5156
    %v5194 = vunpack.c.l.b16 %v5157
    %v5195 = vunpack.c.l.b16 %v5158
    %v5196 = vpack.c.b16 %v5181, %v5180
    %v5197 = vpack.c.b16 %v5183, %v5182
    %v5198 = vpack.c.b16 %v5185, %v5184
    %v5199 = vpack.c.b16 %v5187, %v5186
    %v5200 = vpack.c.b16 %v5189, %v5188
    %v5201 = vpack.c.b16 %v5191, %v5190
    %v5202 = vpack.c.b16 %v5193, %v5192
    %v5203 = vpack.c.b16 %v5195, %v5194
    %5212 = vmatprep.subr.bf16.mxu0 0
    %5213 = vmatpush1.bf16.msra.mxu0 %v5196
    %5214 = vmatprep.subr.bf16.mxu0 0
    %5215 = vmatpush1.bf16.msra.mxu0 %v5197
    %5216 = vmatprep.subr.bf16.mxu0 0
    %5217 = vmatpush1.bf16.msra.mxu0 %v5198
    %5218 = vmatprep.subr.bf16.mxu0 0
    %5219 = vmatpush1.bf16.msra.mxu0 %v5199
    %5220 = vmatprep.subr.bf16.mxu0 0
    %5221 = vmatpush1.bf16.msra.mxu0 %v5200
    %5222 = vmatprep.subr.bf16.mxu0 0
    %5223 = vmatpush1.bf16.msra.mxu0 %v5201
    %5224 = vmatprep.subr.bf16.mxu0 0
    %5225 = vmatpush1.bf16.msra.mxu0 %v5202
    %5226 = vmatprep.subr.bf16.mxu0 0
    %5227 = vmatpush1.bf16.msra.mxu0 %v5203
    %5228 = vmatprep.subr.bf16.mxu0 0
    %5229 = vmatpush1.bf16.msra.mxu0 0
    %5230 = vmatprep.subr.bf16.mxu0 0
    %5231 = vmatpush1.bf16.msra.mxu0 0
    %5232 = vmatprep.subr.bf16.mxu0 0
    %5233 = vmatpush1.bf16.msra.mxu0 0
    %5234 = vmatprep.subr.bf16.mxu0 0
    %5235 = vmatpush1.bf16.msra.mxu0 0
    %5236 = vmatprep.subr.bf16.mxu0 0
    %5237 = vmatpush1.bf16.msra.mxu0 0
    %5238 = vmatprep.subr.bf16.mxu0 0
    %5239 = vmatpush1.bf16.msra.mxu0 0
    %5240 = vmatprep.subr.bf16.mxu0 0
    %5241 = vmatpush1.bf16.msra.mxu0 0
    %5242 = vmatprep.subr.bf16.mxu0 0
    %5243 = vmatpush1.bf16.msra.mxu0 0
    %5244 = vmatprep.mubr.bf16.mxu0 0
    %5245 = vmatmul.mubr.bf16.gmra.mrb[0].mxu0 %v5159
    %v5246 = vpop.f32.mrb[0].mxu0
    %v5247 = vadd.f32 %v5163, %v5246
    %v5248 = vpop.f32.mrb[0].mxu0
    %v5249 = vpop.f32.mrb[0].mxu0
    %v5250 = vpop.f32.mrb[0].mxu0
    %5251 = vdwg.mxu0
    %v5252 = vld [vmem:[#allocation7] sm:$0xf]
    %v5253 = vld [vmem:[#allocation7 + $0x4] sm:$0xf]
    %v5254 = vld [vmem:[#allocation7 + $0x8] sm:$0xf]
    %v5255 = vld [vmem:[#allocation7 + $0xc] sm:$0xf]
    %v5256 = vld [vmem:[#allocation7 + $0x10] sm:$0xf]
    %v5257 = vld [vmem:[#allocation7 + $0x14] sm:$0xf]
    %v5258 = vld [vmem:[#allocation7 + $0x18] sm:$0xf]
    %v5259 = vld [vmem:[#allocation7 + $0x1c] sm:$0xf]
    %v5260 = vpack.c.bf16 %v5247, %v5247
    %v5261 = vlaneseq
    %v5262 = vshrl.u32 %v5261, 7
    %v5263 = vsub.s32 3, %v5262
    %v5264 = vrot.slane %v111, %v5263
    %v5273 = vunpack.c.l.b16 %v5252
    %v5274 = vunpack.c.l.b16 %v5253
    %v5275 = vunpack.c.l.b16 %v5254
    %v5276 = vunpack.c.l.b16 %v5255
    %v5277 = vunpack.c.l.b16 %v5256
    %v5278 = vunpack.c.l.b16 %v5257
    %v5279 = vunpack.c.l.b16 %v5258
    %v5280 = vunpack.c.l.b16 %v5259
    %v5281 = vpack.c.b16 %v5274, %v5273
    %v5282 = vpack.c.b16 %v5276, %v5275
    %v5283 = vpack.c.b16 %v5278, %v5277
    %v5284 = vpack.c.b16 %v5280, %v5279
    %vm5289 = vcmask 523264
    %v5291 = vsel %vm5289, %v5260, 0
    %5293 = vmatprep.subr.bf16.mxu0 0
    %5294 = vmatpush1.bf16.msra.mxu0 %v5281
    %5295 = vmatprep.subr.bf16.mxu0 0
    %5296 = vmatpush1.bf16.msra.mxu0 %v5282
    %5297 = vmatprep.subr.bf16.mxu0 0
    %5298 = vmatpush1.bf16.msra.mxu0 %v5283
    %5299 = vmatprep.subr.bf16.mxu0 0
    %5300 = vmatpush1.bf16.msra.mxu0 %v5284
    %5301 = vmatprep.subr.bf16.mxu0 0
    %5302 = vmatpush1.bf16.msra.mxu0 0
    %5303 = vmatprep.subr.bf16.mxu0 0
    %5304 = vmatpush1.bf16.msra.mxu0 0
    %5305 = vmatprep.subr.bf16.mxu0 0
    %5306 = vmatpush1.bf16.msra.mxu0 0
    %5307 = vmatprep.subr.bf16.mxu0 0
    %5308 = vmatpush1.bf16.msra.mxu0 0
    %5309 = vmatprep.subr.bf16.mxu0 0
    %5310 = vmatpush1.bf16.msra.mxu0 0
    %5311 = vmatprep.subr.bf16.mxu0 0
    %5312 = vmatpush1.bf16.msra.mxu0 0
    %5313 = vmatprep.subr.bf16.mxu0 0
    %5314 = vmatpush1.bf16.msra.mxu0 0
    %5315 = vmatprep.subr.bf16.mxu0 0
    %5316 = vmatpush1.bf16.msra.mxu0 0
    %5317 = vmatprep.subr.bf16.mxu0 0
    %5318 = vmatpush1.bf16.msra.mxu0 0
    %5319 = vmatprep.subr.bf16.mxu0 0
    %5320 = vmatpush1.bf16.msra.mxu0 0
    %5321 = vmatprep.subr.bf16.mxu0 0
    %5322 = vmatpush1.bf16.msra.mxu0 0
    %5323 = vmatprep.subr.bf16.mxu0 0
    %5324 = vmatpush1.bf16.msra.mxu0 0
    %5325 = vmatprep.mubr.bf16.mxu0 0
    %5326 = vmatmul.mubr.bf16.gmra.mrb[0].mxu0 %v5291
    %v5327 = vpop.f32.mrb[0].mxu0
    %v5328 = vadd.f32 %v5264, %v5327
    %v5329 = vpop.f32.mrb[0].mxu0
    %v5330 = vpop.f32.mrb[0].mxu0
    %v5331 = vpop.f32.mrb[0].mxu0
    %5332 = vdwg.mxu0
    %v5333 = vmax.f32 %v5328, 0.0
    %v5334 = vld [vmem:[%s6] sm:$0xf]
    %v5335 = vld [vmem:[%s6 + $0x4] sm:$0xf]
    %v5336 = vld [vmem:[%s6 + $0x8] sm:$0xf]
    %v5337 = vld [vmem:[%s6 + $0xc] sm:$0xf]
    %v5338 = vld [vmem:[%s6 + $0x10] sm:$0xf]
    %v5339 = vld [vmem:[%s6 + $0x14] sm:$0xf]
    %v5340 = vld [vmem:[%s6 + $0x18] sm:$0xf]
    %v5341 = vld [vmem:[%s6 + $0x1c] sm:$0xf]
    %v5342 = vpack.c.bf16 %v5333, %v5333
    %v5343 = vlaneseq
    %v5344 = vshrl.u32 %v5343, 7
    %v5345 = vsub.s32 4, %v5344
    %v5346 = vrot.slane %v111, %v5345
    %v5355 = vunpack.c.l.b16 %v5334
    %v5356 = vunpack.c.l.b16 %v5335
    %v5357 = vunpack.c.l.b16 %v5336
    %v5358 = vunpack.c.l.b16 %v5337
    %v5359 = vunpack.c.l.b16 %v5338
    %v5360 = vunpack.c.l.b16 %v5339
    %v5361 = vunpack.c.l.b16 %v5340
    %v5362 = vunpack.c.l.b16 %v5341
    %v5363 = vpack.c.b16 %v5356, %v5355
    %v5364 = vpack.c.b16 %v5358, %v5357
    %v5365 = vpack.c.b16 %v5360, %v5359
    %v5366 = vpack.c.b16 %v5362, %v5361
    %v5372 = vsel %vm5289, %v5342, 0
    %5374 = vmatprep.subr.bf16.mxu0 0
    %5375 = vmatpush1.bf16.msra.mxu0 %v5363
    %5376 = vmatprep.subr.bf16.mxu0 0
    %5377 = vmatpush1.bf16.msra.mxu0 %v5364
    %5378 = vmatprep.subr.bf16.mxu0 0
    %5379 = vmatpush1.bf16.msra.mxu0 %v5365
    %5380 = vmatprep.subr.bf16.mxu0 0
    %5381 = vmatpush1.bf16.msra.mxu0 %v5366
    %5382 = vmatprep.subr.bf16.mxu0 0
    %5383 = vmatpush1.bf16.msra.mxu0 0
    %5384 = vmatprep.subr.bf16.mxu0 0
    %5385 = vmatpush1.bf16.msra.mxu0 0
    %5386 = vmatprep.subr.bf16.mxu0 0
    %5387 = vmatpush1.bf16.msra.mxu0 0
    %5388 = vmatprep.subr.bf16.mxu0 0
    %5389 = vmatpush1.bf16.msra.mxu0 0
    %5390 = vmatprep.subr.bf16.mxu0 0
    %5391 = vmatpush1.bf16.msra.mxu0 0
    %5392 = vmatprep.subr.bf16.mxu0 0
    %5393 = vmatpush1.bf16.msra.mxu0 0
    %5394 = vmatprep.subr.bf16.mxu0 0
    %5395 = vmatpush1.bf16.msra.mxu0 0
    %5396 = vmatprep.subr.bf16.mxu0 0
    %5397 = vmatpush1.bf16.msra.mxu0 0
    %5398 = vmatprep.subr.bf16.mxu0 0
    %5399 = vmatpush1.bf16.msra.mxu0 0
    %5400 = vmatprep.subr.bf16.mxu0 0
    %5401 = vmatpush1.bf16.msra.mxu0 0
    %5402 = vmatprep.subr.bf16.mxu0 0
    %5403 = vmatpush1.bf16.msra.mxu0 0
    %5404 = vmatprep.subr.bf16.mxu0 0
    %5405 = vmatpush1.bf16.msra.mxu0 0
    %5406 = vmatprep.mubr.bf16.mxu0 0
    %5407 = vmatmul.mubr.bf16.gmra.mrb[0].mxu0 %v5372
    %v5408 = vpop.f32.mrb[0].mxu0
    %v5409 = vadd.f32 %v5346, %v5408
    %v5410 = vpop.f32.mrb[0].mxu0
    %v5411 = vpop.f32.mrb[0].mxu0
    %v5412 = vpop.f32.mrb[0].mxu0
    %5413 = vdwg.mxu0
    %v5414 = vmax.f32 %v5409, 0.0
    %v5415 = vld [vmem:[#allocation9] sm:$0xf]
    %v5416 = vld [vmem:[#allocation9 + $0x4] sm:$0xf]
    %v5417 = vld [vmem:[#allocation9 + $0x8] sm:$0xf]
    %v5418 = vld [vmem:[#allocation9 + $0xc] sm:$0xf]
    %v5419 = vpack.c.bf16 %v5414, %v5414
    %v5420 = vlaneseq
    %v5421 = vshrl.u32 %v5420, 7
    %v5422 = vsub.s32 5, %v5421
    %v5423 = vrot.slane %v111, %v5422
    %v5428 = vunpack.c.l.b16 %v5415
    %v5429 = vunpack.c.l.b16 %v5416
    %v5430 = vunpack.c.l.b16 %v5417
    %v5431 = vunpack.c.l.b16 %v5418
    %v5432 = vpack.c.b16 %v5429, %v5428
    %v5433 = vpack.c.b16 %v5431, %v5430
    %vm5436 = vcmask 261120
    %v5438 = vsel %vm5436, %v5419, 0
    %5440 = vmatprep.subr.bf16.mxu0 0
    %5441 = vmatpush1.bf16.msra.mxu0 %v5432
    %5442 = vmatprep.subr.bf16.mxu0 0
    %5443 = vmatpush1.bf16.msra.mxu0 %v5433
    %5444 = vmatprep.subr.bf16.mxu0 0
    %5445 = vmatpush1.bf16.msra.mxu0 0
    %5446 = vmatprep.subr.bf16.mxu0 0
    %5447 = vmatpush1.bf16.msra.mxu0 0
    %5448 = vmatprep.subr.bf16.mxu0 0
    %5449 = vmatpush1.bf16.msra.mxu0 0
    %5450 = vmatprep.subr.bf16.mxu0 0
    %5451 = vmatpush1.bf16.msra.mxu0 0
    %5452 = vmatprep.subr.bf16.mxu0 0
    %5453 = vmatpush1.bf16.msra.mxu0 0
    %5454 = vmatprep.subr.bf16.mxu0 0
    %5455 = vmatpush1.bf16.msra.mxu0 0
    %5456 = vmatprep.subr.bf16.mxu0 0
    %5457 = vmatpush1.bf16.msra.mxu0 0
    %5458 = vmatprep.subr.bf16.mxu0 0
    %5459 = vmatpush1.bf16.msra.mxu0 0
    %5460 = vmatprep.subr.bf16.mxu0 0
    %5461 = vmatpush1.bf16.msra.mxu0 0
    %5462 = vmatprep.subr.bf16.mxu0 0
    %5463 = vmatpush1.bf16.msra.mxu0 0
    %5464 = vmatprep.subr.bf16.mxu0 0
    %5465 = vmatpush1.bf16.msra.mxu0 0
    %5466 = vmatprep.subr.bf16.mxu0 0
    %5467 = vmatpush1.bf16.msra.mxu0 0
    %5468 = vmatprep.subr.bf16.mxu0 0
    %5469 = vmatpush1.bf16.msra.mxu0 0
    %5470 = vmatprep.subr.bf16.mxu0 0
    %5471 = vmatpush1.bf16.msra.mxu0 0
    %5472 = vmatprep.mubr.bf16.mxu0 0
    %5473 = vmatmul.mubr.bf16.gmra.mrb[0].mxu0 %v5438
    %v5474 = vpop.f32.mrb[0].mxu0
    %v5475 = vadd.f32 %v5423, %v5474
    %v5476 = vpop.f32.mrb[0].mxu0
    %v5477 = vpop.f32.mrb[0].mxu0
    %v5478 = vpop.f32.mrb[0].mxu0
    %5479 = vdwg.mxu0
    %v5480 = vxor.u32 %v5475, 2147483648
    %v5481 = vmul.f32 %v5480, 1.442695
    %v5482 = vpow.pop %v5481
    %v5483 = vadd.f32 %v5482, 1.0
    %v5484 = vrcp.pop %v5483
    %v5485 = vmul.f32 1.0, %v5484
    %5487 = vrot.lane.b32.xlu0 %v5485, 64
    %v5488 = vpop.permute.xlu0 %5487
    %v5490 = vsel %vm5289, %v5247, %v5488
    %5491 = vst [vmem:[%s9] sm:$0x3] %v5490
    // Predicated region
    $region62: #{end_to_end_forward.1} parent=1 // pred_check
      _
    $region63: #{end_to_end_forward.1} parent=1 // pred_check_branch
      %5493 = sbr.rel (0) target = $region65
    $region64: #{end_to_end_forward.1} parent=1 // pred_region
      _
    $region65: #{end_to_end_forward.1} parent=1 // pred_fallthru
      _
    // Predicated region
    $region66: #{end_to_end_forward.1} parent=1 // pred_check
      _
    $region67: #{end_to_end_forward.1} parent=1 // pred_check_branch
      %5495 = sbr.rel (0) target = $region69
    $region68: #{end_to_end_forward.1} parent=1 // pred_region
      _
    $region69: #{end_to_end_forward.1} parent=1 // pred_fallthru
      _
    %5496 = vsyncpa [#allocation3], 1
    %5497 = vsyncpa [#allocation5], 1
    %5498 = vsyncpa [#allocation8], 1
    %5499 = vsyncpa [#allocation11], 1

</llo_original>
